<compile_context>
chip_gen: v6e
topology: v6e:2x2x1
jax: 0.10.0
libtpu: 0.0.40
codegen_flags: <defaults>
</compile_context>

<pallas_src>
import functools
import numpy as np
import jax
import jax.numpy as jnp
from jax.experimental import pallas as pl
from jax.experimental.pallas import tpu as pltpu

INPUT_SIZE = 50        # features
HIDDEN_SIZE = 50
NUM_LAYERS = 2
PROJ_DIM = 50          # projection_head_dimension
SEQ_LEN = 8
BATCH = 2

HP = 128               # padded per-gate lane width == padded hidden width


# ------------------------------------------------------------------ fused kernel

def fused_rnn_kernel(num_layers, batch, seq_len, x_ref, *refs):
    """Fused multi-layer LSTM (wavefront) + mean-over-time + projection head.

    x_ref : (T*B, D_in) f32, TIME-major rows (row = t*B + b)
    refs  : [wih_0 (D_in,4*HP) bf16, whh_0 (HP,4*HP) bf16, b_0 (1,4*HP) f32,
             ... one triple per layer (upper layers: wih is (HP,4*HP)) ...,
             w_proj (HP,HP) f32, b_proj (1,HP) f32,      # inputs
             enc_out (B,HP), proj_out (B,HP)]            # outputs
    Gate blocks along the 4*HP axis follow torch order (i, f, g, o), each 128 lanes wide
    with columns HIDDEN_SIZE..HP-1 zero.
    """
    B, T = batch, seq_len
    wp_ref, bp_ref, enc_ref, proj_ref = refs[3 * num_layers:]

    # Hoisted layer-0 input matmul over the whole (time-major) sequence, bias folded in.
    # One (T*B, D_in) @ (D_in, 4*HP) MXU op, bf16 operands, f32 accumulation.
    x_b = x_ref[...].astype(jnp.bfloat16)
    gx0 = (jnp.dot(x_b, refs[0][...], preferred_element_type=jnp.float32)
           + refs[2][...])                                   # (T*B, 4*HP) f32

    # Per-layer weights (already bf16) and biases (f32), loaded once.
    whh = [refs[3 * l + 1][...] for l in range(num_layers)]              # (HP, 4*HP)
    wih_up = [refs[3 * l][...] for l in range(1, num_layers)]            # (HP, 4*HP)
    bias = [refs[3 * l + 2][...] for l in range(num_layers)]             # (1, 4*HP)

    def lstm_step(g, c_prev):
        # Gate slices are full 128-lane blocks -> pure vreg selects, no XLU.
        i_g = 0.5 * jnp.tanh(0.5 * g[:, 0 * HP:1 * HP]) + 0.5   # sigmoid via tanh (1 EUP)
        f_g = 0.5 * jnp.tanh(0.5 * g[:, 1 * HP:2 * HP]) + 0.5
        g_g = jnp.tanh(g[:, 2 * HP:3 * HP])
        o_g = 0.5 * jnp.tanh(0.5 * g[:, 3 * HP:4 * HP]) + 0.5
        c_new = f_g * c_prev + i_g * g_g
        h_new = o_g * jnp.tanh(c_new)
        return h_new, c_new

    h = [jnp.zeros((B, HP), jnp.float32) for _ in range(num_layers)]
    c = [jnp.zeros((B, HP), jnp.float32) for _ in range(num_layers)]
    acc = jnp.zeros((B, HP), jnp.float32)

    # Fully unrolled wavefront: at step t update layer 0, then each upper layer consumes
    # the just-produced lower-layer h of the SAME step.  Critical path ~ T + L - 1 steps.
    for t in range(T):
        # Layer 0: input term is precomputed; only h @ Whh is on the serial chain.
        g = gx0[t * B:(t + 1) * B, :] + jnp.dot(
            h[0].astype(jnp.bfloat16), whh[0], preferred_element_type=jnp.float32)
        h[0], c[0] = lstm_step(g, c[0])

        for l in range(1, num_layers):
            g = (jnp.dot(h[l - 1].astype(jnp.bfloat16), wih_up[l - 1],
                         preferred_element_type=jnp.float32)
                 + bias[l]
                 + jnp.dot(h[l].astype(jnp.bfloat16), whh[l],
                           preferred_element_type=jnp.float32))
            h[l], c[l] = lstm_step(g, c[l])

        # Mean-over-time accumulated in-loop (hides in VPU slack, no retained h_steps).
        acc = acc + h[num_layers - 1]

    enc = acc * (1.0 / T)                                    # (B, HP), padded cols are 0
    enc_ref[...] = enc

    # Projection head (single off-chain matmul; kept f32 for accuracy).
    proj_ref[...] = (jnp.dot(enc, wp_ref[...], preferred_element_type=jnp.float32)
                     + bp_ref[...])


# ------------------------------------------------------------------ wrapper

_VMEM_SPEC = pl.BlockSpec(memory_space=pltpu.MemorySpace.VMEM)


@jax.jit
def rnn_forward(x, params):
    """x: (B, T, input_size) f32 -> (encoding (B, H), projection (B, P))."""
    B, T, D = x.shape
    # Time-major reorder happens in the wrapper (tiny XLA transpose, outside the kernel).
    x2d = jnp.transpose(x, (1, 0, 2)).reshape(T * B, D)      # rows: t*B + b

    flat_inputs = [x2d]
    for layer in params["lstm"]:
        flat_inputs += [layer["wih_t"], layer["whh_t"], layer["b"]]
    flat_inputs += [params["w_proj_t"], params["b_proj"]]

    kernel = functools.partial(fused_rnn_kernel, NUM_LAYERS, B, T)
    enc_p, proj_p = pl.pallas_call(
        kernel,
        out_shape=(jax.ShapeDtypeStruct((B, HP), jnp.float32),
                   jax.ShapeDtypeStruct((B, HP), jnp.float32)),
        in_specs=[_VMEM_SPEC] * len(flat_inputs),
        out_specs=(_VMEM_SPEC, _VMEM_SPEC),
    )(*flat_inputs)
    # Outputs are lane-dense padded buffers; slice back to the logical widths.
    return enc_p[:, :HIDDEN_SIZE], proj_p[:, :PROJ_DIM]
    # TODO(synk): at real batch sizes add a "parallel" batch grid axis so both v7x
    # TensorCores are used; pointless at B=2.


# ------------------------------------------------------------------ params

def init_params(key):
    """Deterministic init mimicking PyTorch's U(-1/sqrt(H), 1/sqrt(H)).

    Kernel-side packing:
      * Each torch gate block (i,f,g,o) gets its own 128-lane column block (zero padded
        columns H..127), so wih/whh are (*, 4*HP) and bias is (1, 4*HP).
      * Upper-layer wih and every whh get 128 input rows (rows H..127 zero) because the
        recurrent/lower-layer hidden state lives at padded width HP.
      * wih/whh are stored bf16 (MXU operands); biases and projection stay f32.
    """
    H, GP = HIDDEN_SIZE, HP
    k = 1.0 / np.sqrt(H)
    params = {"lstm": []}
    torch_shaped = []   # f32 torch-shaped copies for the pure-JAX reference
    for layer in range(NUM_LAYERS):
        d_in = INPUT_SIZE if layer == 0 else H
        key, k1, k2, k3, k4 = jax.random.split(key, 5)
        wih = jax.random.uniform(k1, (4 * H, d_in), jnp.float32, -k, k)
        whh = jax.random.uniform(k2, (4 * H, H), jnp.float32, -k, k)
        bih = jax.random.uniform(k3, (4 * H,), jnp.float32, -k, k)
        bhh = jax.random.uniform(k4, (4 * H,), jnp.float32, -k, k)
        torch_shaped.append((wih, whh, bih, bhh))

        in_rows = d_in if layer == 0 else GP      # layer 0 eats raw x (50 feats); upper eat padded h
        wih_t = np.zeros((in_rows, 4 * GP), np.float32)
        whh_t = np.zeros((GP, 4 * GP), np.float32)
        b = np.zeros((1, 4 * GP), np.float32)
        wih_np, whh_np = np.asarray(wih), np.asarray(whh)
        b_np = np.asarray(bih + bhh)
        for g in range(4):
            wih_t[:d_in, g * GP:g * GP + H] = wih_np[g * H:(g + 1) * H, :].T
            whh_t[:H, g * GP:g * GP + H] = whh_np[g * H:(g + 1) * H, :].T
            b[0, g * GP:g * GP + H] = b_np[g * H:(g + 1) * H]
        params["lstm"].append({
            "wih_t": jnp.asarray(wih_t, jnp.bfloat16),
            "whh_t": jnp.asarray(whh_t, jnp.bfloat16),
            "b": jnp.asarray(b),
        })

    key, k5, k6 = jax.random.split(key, 3)
    kp = 1.0 / np.sqrt(H)
    w_proj = jax.random.uniform(k5, (PROJ_DIM, H), jnp.float32, -kp, kp)
    b_proj = jax.random.uniform(k6, (PROJ_DIM,), jnp.float32, -kp, kp)
    torch_shaped.append((w_proj, b_proj))

    wproj_t = np.zeros((GP, GP), np.float32)
    wproj_t[:H, :PROJ_DIM] = np.asarray(w_proj).T
    bproj_p = np.zeros((1, GP), np.float32)
    bproj_p[0, :PROJ_DIM] = np.asarray(b_proj)
    params["w_proj_t"] = jnp.asarray(wproj_t)
    params["b_proj"] = jnp.asarray(bproj_p)
    return params, torch_shaped


def reference_forward(x, torch_shaped):
    """Pure-JAX f32 reference with PyTorch LSTM semantics (gate order i,f,g,o)."""
    h_seq = x
    for (wih, whh, bih, bhh) in torch_shaped[:-1]:
        B, T, _ = h_seq.shape
        H = whh.shape[1]
        h = jnp.zeros((B, H), jnp.float32)
        c = jnp.zeros((B, H), jnp.float32)
        outs = []
        for t in range(T):
            g = h_seq[:, t, :] @ wih.T + h @ whh.T + bih + bhh
            i = jax.nn.sigmoid(g[:, :H])
            f = jax.nn.sigmoid(g[:, H:2 * H])
            gg = jnp.tanh(g[:, 2 * H:3 * H])
            o = jax.nn.sigmoid(g[:, 3 * H:])
            c = f * c + i * gg
            h = o * jnp.tanh(c)
            outs.append(h)
        h_seq = jnp.stack(outs, axis=1)
    w_proj, b_proj = torch_shaped[-1]
    enc = jnp.mean(h_seq, axis=1)
    proj = enc @ w_proj.T + b_proj
    return enc, proj


# ------------------------------------------------------------------ main

if __name__ == "__main__":
    key = jax.random.PRNGKey(0)
    key, kx = jax.random.split(key)
    x = jax.random.normal(kx, (BATCH, SEQ_LEN, INPUT_SIZE), jnp.float32)

    params, torch_shaped = init_params(key)

    enc, proj = rnn_forward(x, params)
    enc, proj = jax.block_until_ready((enc, proj))

    enc_ref, proj_ref = reference_forward(x, torch_shaped)

    assert enc.shape == (BATCH, HIDDEN_SIZE)
    assert proj.shape == (BATCH, PROJ_DIM)
    # Tolerance relaxed vs. pure-f32 because MXU operands are bf16 (f32 accumulation);
    # observed error is ~1e-3, 2e-2 gives ample margin.
    np.testing.assert_allclose(np.asarray(enc), np.asarray(enc_ref), atol=2e-2, rtol=2e-2)
    np.testing.assert_allclose(np.asarray(proj), np.asarray(proj_ref), atol=2e-2, rtol=2e-2)

    print("KERNEL_OK")
</pallas_src>

<mosaic_0001>
module attributes {stable_mosaic.version = 11 : i64} {
  func.func @fused_rnn_kernel(%arg0: memref<16x50xf32, #tpu.memory_space<vmem>>, %arg1: memref<50x512xbf16, #tpu.memory_space<vmem>>, %arg2: memref<128x512xbf16, #tpu.memory_space<vmem>>, %arg3: memref<1x512xf32, #tpu.memory_space<vmem>>, %arg4: memref<128x512xbf16, #tpu.memory_space<vmem>>, %arg5: memref<128x512xbf16, #tpu.memory_space<vmem>>, %arg6: memref<1x512xf32, #tpu.memory_space<vmem>>, %arg7: memref<128x128xf32, #tpu.memory_space<vmem>>, %arg8: memref<1x128xf32, #tpu.memory_space<vmem>>, %arg9: memref<2x128xf32, #tpu.memory_space<vmem>>, %arg10: memref<2x128xf32, #tpu.memory_space<vmem>>) attributes {dimension_semantics = [], scalar_prefetch = 0 : i64, scratch_operands = 0 : i64, tpu.core_type = #tpu.core_type<tc>} {
    %c0 = arith.constant 0 : index
    %c0_0 = arith.constant 0 : index
    %0 = vector.load %arg0[%c0, %c0_0] : memref<16x50xf32, #tpu.memory_space<vmem>>, vector<16x50xf32>
    %1 = arith.truncf %0 : vector<16x50xf32> to vector<16x50xbf16>
    %c0_1 = arith.constant 0 : index
    %c0_2 = arith.constant 0 : index
    %2 = vector.load %arg1[%c0_1, %c0_2] : memref<50x512xbf16, #tpu.memory_space<vmem>>, vector<50x512xbf16>
    %cst = arith.constant dense<0.000000e+00> : vector<16x512xf32>
    %3 = tpu.matmul %1, %2, %cst {dimension_numbers = #tpu.dot_dimension_numbers<[1], [0], [0], [1], [0, 0, 1, 1], [], []>} : vector<16x50xbf16>, vector<50x512xbf16>, vector<16x512xf32> -> vector<16x512xf32>
    %c0_3 = arith.constant 0 : index
    %c0_4 = arith.constant 0 : index
    %4 = vector.load %arg3[%c0_3, %c0_4] : memref<1x512xf32, #tpu.memory_space<vmem>>, vector<1x512xf32>
    %5 = vector.broadcast %4 : vector<1x512xf32> to vector<16x512xf32>
    %6 = arith.addf %3, %5 : vector<16x512xf32>
    %c0_5 = arith.constant 0 : index
    %c0_6 = arith.constant 0 : index
    %7 = vector.load %arg2[%c0_5, %c0_6] : memref<128x512xbf16, #tpu.memory_space<vmem>>, vector<128x512xbf16>
    %c0_7 = arith.constant 0 : index
    %c0_8 = arith.constant 0 : index
    %8 = vector.load %arg5[%c0_7, %c0_8] : memref<128x512xbf16, #tpu.memory_space<vmem>>, vector<128x512xbf16>
    %c0_9 = arith.constant 0 : index
    %c0_10 = arith.constant 0 : index
    %9 = vector.load %arg4[%c0_9, %c0_10] : memref<128x512xbf16, #tpu.memory_space<vmem>>, vector<128x512xbf16>
    %c0_11 = arith.constant 0 : index
    %c0_12 = arith.constant 0 : index
    %10 = vector.load %arg6[%c0_11, %c0_12] : memref<1x512xf32, #tpu.memory_space<vmem>>, vector<1x512xf32>
    %cst_13 = arith.constant 0.000000e+00 : f32
    %11 = vector.broadcast %cst_13 : f32 to vector<2x128xf32>
    %cst_14 = arith.constant 0.000000e+00 : f32
    %12 = vector.broadcast %cst_14 : f32 to vector<2x128xf32>
    %cst_15 = arith.constant 0.000000e+00 : f32
    %13 = vector.broadcast %cst_15 : f32 to vector<2x128xf32>
    %cst_16 = arith.constant 0.000000e+00 : f32
    %14 = vector.broadcast %cst_16 : f32 to vector<2x128xf32>
    %cst_17 = arith.constant 0.000000e+00 : f32
    %15 = vector.broadcast %cst_17 : f32 to vector<2x128xf32>
    %16 = vector.extract_strided_slice %6 {offsets = [0, 0], sizes = [2, 512], strides = [1, 1]} : vector<16x512xf32> to vector<2x512xf32>
    %17 = arith.truncf %11 : vector<2x128xf32> to vector<2x128xbf16>
    %cst_18 = arith.constant dense<0.000000e+00> : vector<2x512xf32>
    %18 = tpu.matmul %17, %7, %cst_18 {dimension_numbers = #tpu.dot_dimension_numbers<[1], [0], [0], [1], [0, 0, 1, 1], [], []>} : vector<2x128xbf16>, vector<128x512xbf16>, vector<2x512xf32> -> vector<2x512xf32>
    %19 = arith.addf %16, %18 : vector<2x512xf32>
    %20 = vector.extract_strided_slice %19 {offsets = [0, 0], sizes = [2, 128], strides = [1, 1]} : vector<2x512xf32> to vector<2x128xf32>
    %cst_19 = arith.constant 5.000000e-01 : f32
    %21 = vector.broadcast %cst_19 : f32 to vector<2x128xf32>
    %22 = arith.mulf %21, %20 : vector<2x128xf32>
    %23 = math.tanh %22 : vector<2x128xf32>
    %cst_20 = arith.constant 5.000000e-01 : f32
    %24 = vector.broadcast %cst_20 : f32 to vector<2x128xf32>
    %25 = arith.mulf %24, %23 : vector<2x128xf32>
    %cst_21 = arith.constant 5.000000e-01 : f32
    %26 = vector.broadcast %cst_21 : f32 to vector<2x128xf32>
    %27 = arith.addf %25, %26 : vector<2x128xf32>
    %28 = vector.extract_strided_slice %19 {offsets = [0, 128], sizes = [2, 128], strides = [1, 1]} : vector<2x512xf32> to vector<2x128xf32>
    %cst_22 = arith.constant 5.000000e-01 : f32
    %29 = vector.broadcast %cst_22 : f32 to vector<2x128xf32>
    %30 = arith.mulf %29, %28 : vector<2x128xf32>
    %31 = math.tanh %30 : vector<2x128xf32>
    %cst_23 = arith.constant 5.000000e-01 : f32
    %32 = vector.broadcast %cst_23 : f32 to vector<2x128xf32>
    %33 = arith.mulf %32, %31 : vector<2x128xf32>
    %cst_24 = arith.constant 5.000000e-01 : f32
    %34 = vector.broadcast %cst_24 : f32 to vector<2x128xf32>
    %35 = arith.addf %33, %34 : vector<2x128xf32>
    %36 = vector.extract_strided_slice %19 {offsets = [0, 256], sizes = [2, 128], strides = [1, 1]} : vector<2x512xf32> to vector<2x128xf32>
    %37 = math.tanh %36 : vector<2x128xf32>
    %38 = vector.extract_strided_slice %19 {offsets = [0, 384], sizes = [2, 128], strides = [1, 1]} : vector<2x512xf32> to vector<2x128xf32>
    %cst_25 = arith.constant 5.000000e-01 : f32
    %39 = vector.broadcast %cst_25 : f32 to vector<2x128xf32>
    %40 = arith.mulf %39, %38 : vector<2x128xf32>
    %41 = math.tanh %40 : vector<2x128xf32>
    %cst_26 = arith.constant 5.000000e-01 : f32
    %42 = vector.broadcast %cst_26 : f32 to vector<2x128xf32>
    %43 = arith.mulf %42, %41 : vector<2x128xf32>
    %cst_27 = arith.constant 5.000000e-01 : f32
    %44 = vector.broadcast %cst_27 : f32 to vector<2x128xf32>
    %45 = arith.addf %43, %44 : vector<2x128xf32>
    %46 = arith.mulf %35, %13 : vector<2x128xf32>
    %47 = arith.mulf %27, %37 : vector<2x128xf32>
    %48 = arith.addf %46, %47 : vector<2x128xf32>
    %49 = math.tanh %48 : vector<2x128xf32>
    %50 = arith.mulf %45, %49 : vector<2x128xf32>
    %51 = arith.truncf %50 : vector<2x128xf32> to vector<2x128xbf16>
    %cst_28 = arith.constant dense<0.000000e+00> : vector<2x512xf32>
    %52 = tpu.matmul %51, %9, %cst_28 {dimension_numbers = #tpu.dot_dimension_numbers<[1], [0], [0], [1], [0, 0, 1, 1], [], []>} : vector<2x128xbf16>, vector<128x512xbf16>, vector<2x512xf32> -> vector<2x512xf32>
    %53 = vector.broadcast %10 : vector<1x512xf32> to vector<2x512xf32>
    %54 = arith.addf %52, %53 : vector<2x512xf32>
    %55 = arith.truncf %12 : vector<2x128xf32> to vector<2x128xbf16>
    %cst_29 = arith.constant dense<0.000000e+00> : vector<2x512xf32>
    %56 = tpu.matmul %55, %8, %cst_29 {dimension_numbers = #tpu.dot_dimension_numbers<[1], [0], [0], [1], [0, 0, 1, 1], [], []>} : vector<2x128xbf16>, vector<128x512xbf16>, vector<2x512xf32> -> vector<2x512xf32>
    %57 = arith.addf %54, %56 : vector<2x512xf32>
    %58 = vector.extract_strided_slice %57 {offsets = [0, 0], sizes = [2, 128], strides = [1, 1]} : vector<2x512xf32> to vector<2x128xf32>
    %cst_30 = arith.constant 5.000000e-01 : f32
    %59 = vector.broadcast %cst_30 : f32 to vector<2x128xf32>
    %60 = arith.mulf %59, %58 : vector<2x128xf32>
    %61 = math.tanh %60 : vector<2x128xf32>
    %cst_31 = arith.constant 5.000000e-01 : f32
    %62 = vector.broadcast %cst_31 : f32 to vector<2x128xf32>
    %63 = arith.mulf %62, %61 : vector<2x128xf32>
    %cst_32 = arith.constant 5.000000e-01 : f32
    %64 = vector.broadcast %cst_32 : f32 to vector<2x128xf32>
    %65 = arith.addf %63, %64 : vector<2x128xf32>
    %66 = vector.extract_strided_slice %57 {offsets = [0, 128], sizes = [2, 128], strides = [1, 1]} : vector<2x512xf32> to vector<2x128xf32>
    %cst_33 = arith.constant 5.000000e-01 : f32
    %67 = vector.broadcast %cst_33 : f32 to vector<2x128xf32>
    %68 = arith.mulf %67, %66 : vector<2x128xf32>
    %69 = math.tanh %68 : vector<2x128xf32>
    %cst_34 = arith.constant 5.000000e-01 : f32
    %70 = vector.broadcast %cst_34 : f32 to vector<2x128xf32>
    %71 = arith.mulf %70, %69 : vector<2x128xf32>
    %cst_35 = arith.constant 5.000000e-01 : f32
    %72 = vector.broadcast %cst_35 : f32 to vector<2x128xf32>
    %73 = arith.addf %71, %72 : vector<2x128xf32>
    %74 = vector.extract_strided_slice %57 {offsets = [0, 256], sizes = [2, 128], strides = [1, 1]} : vector<2x512xf32> to vector<2x128xf32>
    %75 = math.tanh %74 : vector<2x128xf32>
    %76 = vector.extract_strided_slice %57 {offsets = [0, 384], sizes = [2, 128], strides = [1, 1]} : vector<2x512xf32> to vector<2x128xf32>
    %cst_36 = arith.constant 5.000000e-01 : f32
    %77 = vector.broadcast %cst_36 : f32 to vector<2x128xf32>
    %78 = arith.mulf %77, %76 : vector<2x128xf32>
    %79 = math.tanh %78 : vector<2x128xf32>
    %cst_37 = arith.constant 5.000000e-01 : f32
    %80 = vector.broadcast %cst_37 : f32 to vector<2x128xf32>
    %81 = arith.mulf %80, %79 : vector<2x128xf32>
    %cst_38 = arith.constant 5.000000e-01 : f32
    %82 = vector.broadcast %cst_38 : f32 to vector<2x128xf32>
    %83 = arith.addf %81, %82 : vector<2x128xf32>
    %84 = arith.mulf %73, %14 : vector<2x128xf32>
    %85 = arith.mulf %65, %75 : vector<2x128xf32>
    %86 = arith.addf %84, %85 : vector<2x128xf32>
    %87 = math.tanh %86 : vector<2x128xf32>
    %88 = arith.mulf %83, %87 : vector<2x128xf32>
    %89 = arith.addf %15, %88 : vector<2x128xf32>
    %90 = vector.extract_strided_slice %6 {offsets = [2, 0], sizes = [2, 512], strides = [1, 1]} : vector<16x512xf32> to vector<2x512xf32>
    %91 = arith.truncf %50 : vector<2x128xf32> to vector<2x128xbf16>
    %cst_39 = arith.constant dense<0.000000e+00> : vector<2x512xf32>
    %92 = tpu.matmul %91, %7, %cst_39 {dimension_numbers = #tpu.dot_dimension_numbers<[1], [0], [0], [1], [0, 0, 1, 1], [], []>} : vector<2x128xbf16>, vector<128x512xbf16>, vector<2x512xf32> -> vector<2x512xf32>
    %93 = arith.addf %90, %92 : vector<2x512xf32>
    %94 = vector.extract_strided_slice %93 {offsets = [0, 0], sizes = [2, 128], strides = [1, 1]} : vector<2x512xf32> to vector<2x128xf32>
    %cst_40 = arith.constant 5.000000e-01 : f32
    %95 = vector.broadcast %cst_40 : f32 to vector<2x128xf32>
    %96 = arith.mulf %95, %94 : vector<2x128xf32>
    %97 = math.tanh %96 : vector<2x128xf32>
    %cst_41 = arith.constant 5.000000e-01 : f32
    %98 = vector.broadcast %cst_41 : f32 to vector<2x128xf32>
    %99 = arith.mulf %98, %97 : vector<2x128xf32>
    %cst_42 = arith.constant 5.000000e-01 : f32
    %100 = vector.broadcast %cst_42 : f32 to vector<2x128xf32>
    %101 = arith.addf %99, %100 : vector<2x128xf32>
    %102 = vector.extract_strided_slice %93 {offsets = [0, 128], sizes = [2, 128], strides = [1, 1]} : vector<2x512xf32> to vector<2x128xf32>
    %cst_43 = arith.constant 5.000000e-01 : f32
    %103 = vector.broadcast %cst_43 : f32 to vector<2x128xf32>
    %104 = arith.mulf %103, %102 : vector<2x128xf32>
    %105 = math.tanh %104 : vector<2x128xf32>
    %cst_44 = arith.constant 5.000000e-01 : f32
    %106 = vector.broadcast %cst_44 : f32 to vector<2x128xf32>
    %107 = arith.mulf %106, %105 : vector<2x128xf32>
    %cst_45 = arith.constant 5.000000e-01 : f32
    %108 = vector.broadcast %cst_45 : f32 to vector<2x128xf32>
    %109 = arith.addf %107, %108 : vector<2x128xf32>
    %110 = vector.extract_strided_slice %93 {offsets = [0, 256], sizes = [2, 128], strides = [1, 1]} : vector<2x512xf32> to vector<2x128xf32>
    %111 = math.tanh %110 : vector<2x128xf32>
    %112 = vector.extract_strided_slice %93 {offsets = [0, 384], sizes = [2, 128], strides = [1, 1]} : vector<2x512xf32> to vector<2x128xf32>
    %cst_46 = arith.constant 5.000000e-01 : f32
    %113 = vector.broadcast %cst_46 : f32 to vector<2x128xf32>
    %114 = arith.mulf %113, %112 : vector<2x128xf32>
    %115 = math.tanh %114 : vector<2x128xf32>
    %cst_47 = arith.constant 5.000000e-01 : f32
    %116 = vector.broadcast %cst_47 : f32 to vector<2x128xf32>
    %117 = arith.mulf %116, %115 : vector<2x128xf32>
    %cst_48 = arith.constant 5.000000e-01 : f32
    %118 = vector.broadcast %cst_48 : f32 to vector<2x128xf32>
    %119 = arith.addf %117, %118 : vector<2x128xf32>
    %120 = arith.mulf %109, %48 : vector<2x128xf32>
    %121 = arith.mulf %101, %111 : vector<2x128xf32>
    %122 = arith.addf %120, %121 : vector<2x128xf32>
    %123 = math.tanh %122 : vector<2x128xf32>
    %124 = arith.mulf %119, %123 : vector<2x128xf32>
    %125 = arith.truncf %124 : vector<2x128xf32> to vector<2x128xbf16>
    %cst_49 = arith.constant dense<0.000000e+00> : vector<2x512xf32>
    %126 = tpu.matmul %125, %9, %cst_49 {dimension_numbers = #tpu.dot_dimension_numbers<[1], [0], [0], [1], [0, 0, 1, 1], [], []>} : vector<2x128xbf16>, vector<128x512xbf16>, vector<2x512xf32> -> vector<2x512xf32>
    %127 = vector.broadcast %10 : vector<1x512xf32> to vector<2x512xf32>
    %128 = arith.addf %126, %127 : vector<2x512xf32>
    %129 = arith.truncf %88 : vector<2x128xf32> to vector<2x128xbf16>
    %cst_50 = arith.constant dense<0.000000e+00> : vector<2x512xf32>
    %130 = tpu.matmul %129, %8, %cst_50 {dimension_numbers = #tpu.dot_dimension_numbers<[1], [0], [0], [1], [0, 0, 1, 1], [], []>} : vector<2x128xbf16>, vector<128x512xbf16>, vector<2x512xf32> -> vector<2x512xf32>
    %131 = arith.addf %128, %130 : vector<2x512xf32>
    %132 = vector.extract_strided_slice %131 {offsets = [0, 0], sizes = [2, 128], strides = [1, 1]} : vector<2x512xf32> to vector<2x128xf32>
    %cst_51 = arith.constant 5.000000e-01 : f32
    %133 = vector.broadcast %cst_51 : f32 to vector<2x128xf32>
    %134 = arith.mulf %133, %132 : vector<2x128xf32>
    %135 = math.tanh %134 : vector<2x128xf32>
    %cst_52 = arith.constant 5.000000e-01 : f32
    %136 = vector.broadcast %cst_52 : f32 to vector<2x128xf32>
    %137 = arith.mulf %136, %135 : vector<2x128xf32>
    %cst_53 = arith.constant 5.000000e-01 : f32
    %138 = vector.broadcast %cst_53 : f32 to vector<2x128xf32>
    %139 = arith.addf %137, %138 : vector<2x128xf32>
    %140 = vector.extract_strided_slice %131 {offsets = [0, 128], sizes = [2, 128], strides = [1, 1]} : vector<2x512xf32> to vector<2x128xf32>
    %cst_54 = arith.constant 5.000000e-01 : f32
    %141 = vector.broadcast %cst_54 : f32 to vector<2x128xf32>
    %142 = arith.mulf %141, %140 : vector<2x128xf32>
    %143 = math.tanh %142 : vector<2x128xf32>
    %cst_55 = arith.constant 5.000000e-01 : f32
    %144 = vector.broadcast %cst_55 : f32 to vector<2x128xf32>
    %145 = arith.mulf %144, %143 : vector<2x128xf32>
    %cst_56 = arith.constant 5.000000e-01 : f32
    %146 = vector.broadcast %cst_56 : f32 to vector<2x128xf32>
    %147 = arith.addf %145, %146 : vector<2x128xf32>
    %148 = vector.extract_strided_slice %131 {offsets = [0, 256], sizes = [2, 128], strides = [1, 1]} : vector<2x512xf32> to vector<2x128xf32>
    %149 = math.tanh %148 : vector<2x128xf32>
    %150 = vector.extract_strided_slice %131 {offsets = [0, 384], sizes = [2, 128], strides = [1, 1]} : vector<2x512xf32> to vector<2x128xf32>
    %cst_57 = arith.constant 5.000000e-01 : f32
    %151 = vector.broadcast %cst_57 : f32 to vector<2x128xf32>
    %152 = arith.mulf %151, %150 : vector<2x128xf32>
    %153 = math.tanh %152 : vector<2x128xf32>
    %cst_58 = arith.constant 5.000000e-01 : f32
    %154 = vector.broadcast %cst_58 : f32 to vector<2x128xf32>
    %155 = arith.mulf %154, %153 : vector<2x128xf32>
    %cst_59 = arith.constant 5.000000e-01 : f32
    %156 = vector.broadcast %cst_59 : f32 to vector<2x128xf32>
    %157 = arith.addf %155, %156 : vector<2x128xf32>
    %158 = arith.mulf %147, %86 : vector<2x128xf32>
    %159 = arith.mulf %139, %149 : vector<2x128xf32>
    %160 = arith.addf %158, %159 : vector<2x128xf32>
    %161 = math.tanh %160 : vector<2x128xf32>
    %162 = arith.mulf %157, %161 : vector<2x128xf32>
    %163 = arith.addf %89, %162 : vector<2x128xf32>
    %164 = vector.extract_strided_slice %6 {offsets = [4, 0], sizes = [2, 512], strides = [1, 1]} : vector<16x512xf32> to vector<2x512xf32>
    %165 = arith.truncf %124 : vector<2x128xf32> to vector<2x128xbf16>
    %cst_60 = arith.constant dense<0.000000e+00> : vector<2x512xf32>
    %166 = tpu.matmul %165, %7, %cst_60 {dimension_numbers = #tpu.dot_dimension_numbers<[1], [0], [0], [1], [0, 0, 1, 1], [], []>} : vector<2x128xbf16>, vector<128x512xbf16>, vector<2x512xf32> -> vector<2x512xf32>
    %167 = arith.addf %164, %166 : vector<2x512xf32>
    %168 = vector.extract_strided_slice %167 {offsets = [0, 0], sizes = [2, 128], strides = [1, 1]} : vector<2x512xf32> to vector<2x128xf32>
    %cst_61 = arith.constant 5.000000e-01 : f32
    %169 = vector.broadcast %cst_61 : f32 to vector<2x128xf32>
    %170 = arith.mulf %169, %168 : vector<2x128xf32>
    %171 = math.tanh %170 : vector<2x128xf32>
    %cst_62 = arith.constant 5.000000e-01 : f32
    %172 = vector.broadcast %cst_62 : f32 to vector<2x128xf32>
    %173 = arith.mulf %172, %171 : vector<2x128xf32>
    %cst_63 = arith.constant 5.000000e-01 : f32
    %174 = vector.broadcast %cst_63 : f32 to vector<2x128xf32>
    %175 = arith.addf %173, %174 : vector<2x128xf32>
    %176 = vector.extract_strided_slice %167 {offsets = [0, 128], sizes = [2, 128], strides = [1, 1]} : vector<2x512xf32> to vector<2x128xf32>
    %cst_64 = arith.constant 5.000000e-01 : f32
    %177 = vector.broadcast %cst_64 : f32 to vector<2x128xf32>
    %178 = arith.mulf %177, %176 : vector<2x128xf32>
    %179 = math.tanh %178 : vector<2x128xf32>
    %cst_65 = arith.constant 5.000000e-01 : f32
    %180 = vector.broadcast %cst_65 : f32 to vector<2x128xf32>
    %181 = arith.mulf %180, %179 : vector<2x128xf32>
    %cst_66 = arith.constant 5.000000e-01 : f32
    %182 = vector.broadcast %cst_66 : f32 to vector<2x128xf32>
    %183 = arith.addf %181, %182 : vector<2x128xf32>
    %184 = vector.extract_strided_slice %167 {offsets = [0, 256], sizes = [2, 128], strides = [1, 1]} : vector<2x512xf32> to vector<2x128xf32>
    %185 = math.tanh %184 : vector<2x128xf32>
    %186 = vector.extract_strided_slice %167 {offsets = [0, 384], sizes = [2, 128], strides = [1, 1]} : vector<2x512xf32> to vector<2x128xf32>
    %cst_67 = arith.constant 5.000000e-01 : f32
    %187 = vector.broadcast %cst_67 : f32 to vector<2x128xf32>
    %188 = arith.mulf %187, %186 : vector<2x128xf32>
    %189 = math.tanh %188 : vector<2x128xf32>
    %cst_68 = arith.constant 5.000000e-01 : f32
    %190 = vector.broadcast %cst_68 : f32 to vector<2x128xf32>
    %191 = arith.mulf %190, %189 : vector<2x128xf32>
    %cst_69 = arith.constant 5.000000e-01 : f32
    %192 = vector.broadcast %cst_69 : f32 to vector<2x128xf32>
    %193 = arith.addf %191, %192 : vector<2x128xf32>
    %194 = arith.mulf %183, %122 : vector<2x128xf32>
    %195 = arith.mulf %175, %185 : vector<2x128xf32>
    %196 = arith.addf %194, %195 : vector<2x128xf32>
    %197 = math.tanh %196 : vector<2x128xf32>
    %198 = arith.mulf %193, %197 : vector<2x128xf32>
    %199 = arith.truncf %198 : vector<2x128xf32> to vector<2x128xbf16>
    %cst_70 = arith.constant dense<0.000000e+00> : vector<2x512xf32>
    %200 = tpu.matmul %199, %9, %cst_70 {dimension_numbers = #tpu.dot_dimension_numbers<[1], [0], [0], [1], [0, 0, 1, 1], [], []>} : vector<2x128xbf16>, vector<128x512xbf16>, vector<2x512xf32> -> vector<2x512xf32>
    %201 = vector.broadcast %10 : vector<1x512xf32> to vector<2x512xf32>
    %202 = arith.addf %200, %201 : vector<2x512xf32>
    %203 = arith.truncf %162 : vector<2x128xf32> to vector<2x128xbf16>
    %cst_71 = arith.constant dense<0.000000e+00> : vector<2x512xf32>
    %204 = tpu.matmul %203, %8, %cst_71 {dimension_numbers = #tpu.dot_dimension_numbers<[1], [0], [0], [1], [0, 0, 1, 1], [], []>} : vector<2x128xbf16>, vector<128x512xbf16>, vector<2x512xf32> -> vector<2x512xf32>
    %205 = arith.addf %202, %204 : vector<2x512xf32>
    %206 = vector.extract_strided_slice %205 {offsets = [0, 0], sizes = [2, 128], strides = [1, 1]} : vector<2x512xf32> to vector<2x128xf32>
    %cst_72 = arith.constant 5.000000e-01 : f32
    %207 = vector.broadcast %cst_72 : f32 to vector<2x128xf32>
    %208 = arith.mulf %207, %206 : vector<2x128xf32>
    %209 = math.tanh %208 : vector<2x128xf32>
    %cst_73 = arith.constant 5.000000e-01 : f32
    %210 = vector.broadcast %cst_73 : f32 to vector<2x128xf32>
    %211 = arith.mulf %210, %209 : vector<2x128xf32>
    %cst_74 = arith.constant 5.000000e-01 : f32
    %212 = vector.broadcast %cst_74 : f32 to vector<2x128xf32>
    %213 = arith.addf %211, %212 : vector<2x128xf32>
    %214 = vector.extract_strided_slice %205 {offsets = [0, 128], sizes = [2, 128], strides = [1, 1]} : vector<2x512xf32> to vector<2x128xf32>
    %cst_75 = arith.constant 5.000000e-01 : f32
    %215 = vector.broadcast %cst_75 : f32 to vector<2x128xf32>
    %216 = arith.mulf %215, %214 : vector<2x128xf32>
    %217 = math.tanh %216 : vector<2x128xf32>
    %cst_76 = arith.constant 5.000000e-01 : f32
    %218 = vector.broadcast %cst_76 : f32 to vector<2x128xf32>
    %219 = arith.mulf %218, %217 : vector<2x128xf32>
    %cst_77 = arith.constant 5.000000e-01 : f32
    %220 = vector.broadcast %cst_77 : f32 to vector<2x128xf32>
    %221 = arith.addf %219, %220 : vector<2x128xf32>
    %222 = vector.extract_strided_slice %205 {offsets = [0, 256], sizes = [2, 128], strides = [1, 1]} : vector<2x512xf32> to vector<2x128xf32>
    %223 = math.tanh %222 : vector<2x128xf32>
    %224 = vector.extract_strided_slice %205 {offsets = [0, 384], sizes = [2, 128], strides = [1, 1]} : vector<2x512xf32> to vector<2x128xf32>
    %cst_78 = arith.constant 5.000000e-01 : f32
    %225 = vector.broadcast %cst_78 : f32 to vector<2x128xf32>
    %226 = arith.mulf %225, %224 : vector<2x128xf32>
    %227 = math.tanh %226 : vector<2x128xf32>
    %cst_79 = arith.constant 5.000000e-01 : f32
    %228 = vector.broadcast %cst_79 : f32 to vector<2x128xf32>
    %229 = arith.mulf %228, %227 : vector<2x128xf32>
    %cst_80 = arith.constant 5.000000e-01 : f32
    %230 = vector.broadcast %cst_80 : f32 to vector<2x128xf32>
    %231 = arith.addf %229, %230 : vector<2x128xf32>
    %232 = arith.mulf %221, %160 : vector<2x128xf32>
    %233 = arith.mulf %213, %223 : vector<2x128xf32>
    %234 = arith.addf %232, %233 : vector<2x128xf32>
    %235 = math.tanh %234 : vector<2x128xf32>
    %236 = arith.mulf %231, %235 : vector<2x128xf32>
    %237 = arith.addf %163, %236 : vector<2x128xf32>
    %238 = vector.extract_strided_slice %6 {offsets = [6, 0], sizes = [2, 512], strides = [1, 1]} : vector<16x512xf32> to vector<2x512xf32>
    %239 = arith.truncf %198 : vector<2x128xf32> to vector<2x128xbf16>
    %cst_81 = arith.constant dense<0.000000e+00> : vector<2x512xf32>
    %240 = tpu.matmul %239, %7, %cst_81 {dimension_numbers = #tpu.dot_dimension_numbers<[1], [0], [0], [1], [0, 0, 1, 1], [], []>} : vector<2x128xbf16>, vector<128x512xbf16>, vector<2x512xf32> -> vector<2x512xf32>
    %241 = arith.addf %238, %240 : vector<2x512xf32>
    %242 = vector.extract_strided_slice %241 {offsets = [0, 0], sizes = [2, 128], strides = [1, 1]} : vector<2x512xf32> to vector<2x128xf32>
    %cst_82 = arith.constant 5.000000e-01 : f32
    %243 = vector.broadcast %cst_82 : f32 to vector<2x128xf32>
    %244 = arith.mulf %243, %242 : vector<2x128xf32>
    %245 = math.tanh %244 : vector<2x128xf32>
    %cst_83 = arith.constant 5.000000e-01 : f32
    %246 = vector.broadcast %cst_83 : f32 to vector<2x128xf32>
    %247 = arith.mulf %246, %245 : vector<2x128xf32>
    %cst_84 = arith.constant 5.000000e-01 : f32
    %248 = vector.broadcast %cst_84 : f32 to vector<2x128xf32>
    %249 = arith.addf %247, %248 : vector<2x128xf32>
    %250 = vector.extract_strided_slice %241 {offsets = [0, 128], sizes = [2, 128], strides = [1, 1]} : vector<2x512xf32> to vector<2x128xf32>
    %cst_85 = arith.constant 5.000000e-01 : f32
    %251 = vector.broadcast %cst_85 : f32 to vector<2x128xf32>
    %252 = arith.mulf %251, %250 : vector<2x128xf32>
    %253 = math.tanh %252 : vector<2x128xf32>
    %cst_86 = arith.constant 5.000000e-01 : f32
    %254 = vector.broadcast %cst_86 : f32 to vector<2x128xf32>
    %255 = arith.mulf %254, %253 : vector<2x128xf32>
    %cst_87 = arith.constant 5.000000e-01 : f32
    %256 = vector.broadcast %cst_87 : f32 to vector<2x128xf32>
    %257 = arith.addf %255, %256 : vector<2x128xf32>
    %258 = vector.extract_strided_slice %241 {offsets = [0, 256], sizes = [2, 128], strides = [1, 1]} : vector<2x512xf32> to vector<2x128xf32>
    %259 = math.tanh %258 : vector<2x128xf32>
    %260 = vector.extract_strided_slice %241 {offsets = [0, 384], sizes = [2, 128], strides = [1, 1]} : vector<2x512xf32> to vector<2x128xf32>
    %cst_88 = arith.constant 5.000000e-01 : f32
    %261 = vector.broadcast %cst_88 : f32 to vector<2x128xf32>
    %262 = arith.mulf %261, %260 : vector<2x128xf32>
    %263 = math.tanh %262 : vector<2x128xf32>
    %cst_89 = arith.constant 5.000000e-01 : f32
    %264 = vector.broadcast %cst_89 : f32 to vector<2x128xf32>
    %265 = arith.mulf %264, %263 : vector<2x128xf32>
    %cst_90 = arith.constant 5.000000e-01 : f32
    %266 = vector.broadcast %cst_90 : f32 to vector<2x128xf32>
    %267 = arith.addf %265, %266 : vector<2x128xf32>
    %268 = arith.mulf %257, %196 : vector<2x128xf32>
    %269 = arith.mulf %249, %259 : vector<2x128xf32>
    %270 = arith.addf %268, %269 : vector<2x128xf32>
    %271 = math.tanh %270 : vector<2x128xf32>
    %272 = arith.mulf %267, %271 : vector<2x128xf32>
    %273 = arith.truncf %272 : vector<2x128xf32> to vector<2x128xbf16>
    %cst_91 = arith.constant dense<0.000000e+00> : vector<2x512xf32>
    %274 = tpu.matmul %273, %9, %cst_91 {dimension_numbers = #tpu.dot_dimension_numbers<[1], [0], [0], [1], [0, 0, 1, 1], [], []>} : vector<2x128xbf16>, vector<128x512xbf16>, vector<2x512xf32> -> vector<2x512xf32>
    %275 = vector.broadcast %10 : vector<1x512xf32> to vector<2x512xf32>
    %276 = arith.addf %274, %275 : vector<2x512xf32>
    %277 = arith.truncf %236 : vector<2x128xf32> to vector<2x128xbf16>
    %cst_92 = arith.constant dense<0.000000e+00> : vector<2x512xf32>
    %278 = tpu.matmul %277, %8, %cst_92 {dimension_numbers = #tpu.dot_dimension_numbers<[1], [0], [0], [1], [0, 0, 1, 1], [], []>} : vector<2x128xbf16>, vector<128x512xbf16>, vector<2x512xf32> -> vector<2x512xf32>
    %279 = arith.addf %276, %278 : vector<2x512xf32>
    %280 = vector.extract_strided_slice %279 {offsets = [0, 0], sizes = [2, 128], strides = [1, 1]} : vector<2x512xf32> to vector<2x128xf32>
    %cst_93 = arith.constant 5.000000e-01 : f32
    %281 = vector.broadcast %cst_93 : f32 to vector<2x128xf32>
    %282 = arith.mulf %281, %280 : vector<2x128xf32>
    %283 = math.tanh %282 : vector<2x128xf32>
    %cst_94 = arith.constant 5.000000e-01 : f32
    %284 = vector.broadcast %cst_94 : f32 to vector<2x128xf32>
    %285 = arith.mulf %284, %283 : vector<2x128xf32>
    %cst_95 = arith.constant 5.000000e-01 : f32
    %286 = vector.broadcast %cst_95 : f32 to vector<2x128xf32>
    %287 = arith.addf %285, %286 : vector<2x128xf32>
    %288 = vector.extract_strided_slice %279 {offsets = [0, 128], sizes = [2, 128], strides = [1, 1]} : vector<2x512xf32> to vector<2x128xf32>
    %cst_96 = arith.constant 5.000000e-01 : f32
    %289 = vector.broadcast %cst_96 : f32 to vector<2x128xf32>
    %290 = arith.mulf %289, %288 : vector<2x128xf32>
    %291 = math.tanh %290 : vector<2x128xf32>
    %cst_97 = arith.constant 5.000000e-01 : f32
    %292 = vector.broadcast %cst_97 : f32 to vector<2x128xf32>
    %293 = arith.mulf %292, %291 : vector<2x128xf32>
    %cst_98 = arith.constant 5.000000e-01 : f32
    %294 = vector.broadcast %cst_98 : f32 to vector<2x128xf32>
    %295 = arith.addf %293, %294 : vector<2x128xf32>
    %296 = vector.extract_strided_slice %279 {offsets = [0, 256], sizes = [2, 128], strides = [1, 1]} : vector<2x512xf32> to vector<2x128xf32>
    %297 = math.tanh %296 : vector<2x128xf32>
    %298 = vector.extract_strided_slice %279 {offsets = [0, 384], sizes = [2, 128], strides = [1, 1]} : vector<2x512xf32> to vector<2x128xf32>
    %cst_99 = arith.constant 5.000000e-01 : f32
    %299 = vector.broadcast %cst_99 : f32 to vector<2x128xf32>
    %300 = arith.mulf %299, %298 : vector<2x128xf32>
    %301 = math.tanh %300 : vector<2x128xf32>
    %cst_100 = arith.constant 5.000000e-01 : f32
    %302 = vector.broadcast %cst_100 : f32 to vector<2x128xf32>
    %303 = arith.mulf %302, %301 : vector<2x128xf32>
    %cst_101 = arith.constant 5.000000e-01 : f32
    %304 = vector.broadcast %cst_101 : f32 to vector<2x128xf32>
    %305 = arith.addf %303, %304 : vector<2x128xf32>
    %306 = arith.mulf %295, %234 : vector<2x128xf32>
    %307 = arith.mulf %287, %297 : vector<2x128xf32>
    %308 = arith.addf %306, %307 : vector<2x128xf32>
    %309 = math.tanh %308 : vector<2x128xf32>
    %310 = arith.mulf %305, %309 : vector<2x128xf32>
    %311 = arith.addf %237, %310 : vector<2x128xf32>
    %312 = vector.extract_strided_slice %6 {offsets = [8, 0], sizes = [2, 512], strides = [1, 1]} : vector<16x512xf32> to vector<2x512xf32>
    %313 = arith.truncf %272 : vector<2x128xf32> to vector<2x128xbf16>
    %cst_102 = arith.constant dense<0.000000e+00> : vector<2x512xf32>
    %314 = tpu.matmul %313, %7, %cst_102 {dimension_numbers = #tpu.dot_dimension_numbers<[1], [0], [0], [1], [0, 0, 1, 1], [], []>} : vector<2x128xbf16>, vector<128x512xbf16>, vector<2x512xf32> -> vector<2x512xf32>
    %315 = arith.addf %312, %314 : vector<2x512xf32>
    %316 = vector.extract_strided_slice %315 {offsets = [0, 0], sizes = [2, 128], strides = [1, 1]} : vector<2x512xf32> to vector<2x128xf32>
    %cst_103 = arith.constant 5.000000e-01 : f32
    %317 = vector.broadcast %cst_103 : f32 to vector<2x128xf32>
    %318 = arith.mulf %317, %316 : vector<2x128xf32>
    %319 = math.tanh %318 : vector<2x128xf32>
    %cst_104 = arith.constant 5.000000e-01 : f32
    %320 = vector.broadcast %cst_104 : f32 to vector<2x128xf32>
    %321 = arith.mulf %320, %319 : vector<2x128xf32>
    %cst_105 = arith.constant 5.000000e-01 : f32
    %322 = vector.broadcast %cst_105 : f32 to vector<2x128xf32>
    %323 = arith.addf %321, %322 : vector<2x128xf32>
    %324 = vector.extract_strided_slice %315 {offsets = [0, 128], sizes = [2, 128], strides = [1, 1]} : vector<2x512xf32> to vector<2x128xf32>
    %cst_106 = arith.constant 5.000000e-01 : f32
    %325 = vector.broadcast %cst_106 : f32 to vector<2x128xf32>
    %326 = arith.mulf %325, %324 : vector<2x128xf32>
    %327 = math.tanh %326 : vector<2x128xf32>
    %cst_107 = arith.constant 5.000000e-01 : f32
    %328 = vector.broadcast %cst_107 : f32 to vector<2x128xf32>
    %329 = arith.mulf %328, %327 : vector<2x128xf32>
    %cst_108 = arith.constant 5.000000e-01 : f32
    %330 = vector.broadcast %cst_108 : f32 to vector<2x128xf32>
    %331 = arith.addf %329, %330 : vector<2x128xf32>
    %332 = vector.extract_strided_slice %315 {offsets = [0, 256], sizes = [2, 128], strides = [1, 1]} : vector<2x512xf32> to vector<2x128xf32>
    %333 = math.tanh %332 : vector<2x128xf32>
    %334 = vector.extract_strided_slice %315 {offsets = [0, 384], sizes = [2, 128], strides = [1, 1]} : vector<2x512xf32> to vector<2x128xf32>
    %cst_109 = arith.constant 5.000000e-01 : f32
    %335 = vector.broadcast %cst_109 : f32 to vector<2x128xf32>
    %336 = arith.mulf %335, %334 : vector<2x128xf32>
    %337 = math.tanh %336 : vector<2x128xf32>
    %cst_110 = arith.constant 5.000000e-01 : f32
    %338 = vector.broadcast %cst_110 : f32 to vector<2x128xf32>
    %339 = arith.mulf %338, %337 : vector<2x128xf32>
    %cst_111 = arith.constant 5.000000e-01 : f32
    %340 = vector.broadcast %cst_111 : f32 to vector<2x128xf32>
    %341 = arith.addf %339, %340 : vector<2x128xf32>
    %342 = arith.mulf %331, %270 : vector<2x128xf32>
    %343 = arith.mulf %323, %333 : vector<2x128xf32>
    %344 = arith.addf %342, %343 : vector<2x128xf32>
    %345 = math.tanh %344 : vector<2x128xf32>
    %346 = arith.mulf %341, %345 : vector<2x128xf32>
    %347 = arith.truncf %346 : vector<2x128xf32> to vector<2x128xbf16>
    %cst_112 = arith.constant dense<0.000000e+00> : vector<2x512xf32>
    %348 = tpu.matmul %347, %9, %cst_112 {dimension_numbers = #tpu.dot_dimension_numbers<[1], [0], [0], [1], [0, 0, 1, 1], [], []>} : vector<2x128xbf16>, vector<128x512xbf16>, vector<2x512xf32> -> vector<2x512xf32>
    %349 = vector.broadcast %10 : vector<1x512xf32> to vector<2x512xf32>
    %350 = arith.addf %348, %349 : vector<2x512xf32>
    %351 = arith.truncf %310 : vector<2x128xf32> to vector<2x128xbf16>
    %cst_113 = arith.constant dense<0.000000e+00> : vector<2x512xf32>
    %352 = tpu.matmul %351, %8, %cst_113 {dimension_numbers = #tpu.dot_dimension_numbers<[1], [0], [0], [1], [0, 0, 1, 1], [], []>} : vector<2x128xbf16>, vector<128x512xbf16>, vector<2x512xf32> -> vector<2x512xf32>
    %353 = arith.addf %350, %352 : vector<2x512xf32>
    %354 = vector.extract_strided_slice %353 {offsets = [0, 0], sizes = [2, 128], strides = [1, 1]} : vector<2x512xf32> to vector<2x128xf32>
    %cst_114 = arith.constant 5.000000e-01 : f32
    %355 = vector.broadcast %cst_114 : f32 to vector<2x128xf32>
    %356 = arith.mulf %355, %354 : vector<2x128xf32>
    %357 = math.tanh %356 : vector<2x128xf32>
    %cst_115 = arith.constant 5.000000e-01 : f32
    %358 = vector.broadcast %cst_115 : f32 to vector<2x128xf32>
    %359 = arith.mulf %358, %357 : vector<2x128xf32>
    %cst_116 = arith.constant 5.000000e-01 : f32
    %360 = vector.broadcast %cst_116 : f32 to vector<2x128xf32>
    %361 = arith.addf %359, %360 : vector<2x128xf32>
    %362 = vector.extract_strided_slice %353 {offsets = [0, 128], sizes = [2, 128], strides = [1, 1]} : vector<2x512xf32> to vector<2x128xf32>
    %cst_117 = arith.constant 5.000000e-01 : f32
    %363 = vector.broadcast %cst_117 : f32 to vector<2x128xf32>
    %364 = arith.mulf %363, %362 : vector<2x128xf32>
    %365 = math.tanh %364 : vector<2x128xf32>
    %cst_118 = arith.constant 5.000000e-01 : f32
    %366 = vector.broadcast %cst_118 : f32 to vector<2x128xf32>
    %367 = arith.mulf %366, %365 : vector<2x128xf32>
    %cst_119 = arith.constant 5.000000e-01 : f32
    %368 = vector.broadcast %cst_119 : f32 to vector<2x128xf32>
    %369 = arith.addf %367, %368 : vector<2x128xf32>
    %370 = vector.extract_strided_slice %353 {offsets = [0, 256], sizes = [2, 128], strides = [1, 1]} : vector<2x512xf32> to vector<2x128xf32>
    %371 = math.tanh %370 : vector<2x128xf32>
    %372 = vector.extract_strided_slice %353 {offsets = [0, 384], sizes = [2, 128], strides = [1, 1]} : vector<2x512xf32> to vector<2x128xf32>
    %cst_120 = arith.constant 5.000000e-01 : f32
    %373 = vector.broadcast %cst_120 : f32 to vector<2x128xf32>
    %374 = arith.mulf %373, %372 : vector<2x128xf32>
    %375 = math.tanh %374 : vector<2x128xf32>
    %cst_121 = arith.constant 5.000000e-01 : f32
    %376 = vector.broadcast %cst_121 : f32 to vector<2x128xf32>
    %377 = arith.mulf %376, %375 : vector<2x128xf32>
    %cst_122 = arith.constant 5.000000e-01 : f32
    %378 = vector.broadcast %cst_122 : f32 to vector<2x128xf32>
    %379 = arith.addf %377, %378 : vector<2x128xf32>
    %380 = arith.mulf %369, %308 : vector<2x128xf32>
    %381 = arith.mulf %361, %371 : vector<2x128xf32>
    %382 = arith.addf %380, %381 : vector<2x128xf32>
    %383 = math.tanh %382 : vector<2x128xf32>
    %384 = arith.mulf %379, %383 : vector<2x128xf32>
    %385 = arith.addf %311, %384 : vector<2x128xf32>
    %386 = vector.extract_strided_slice %6 {offsets = [10, 0], sizes = [2, 512], strides = [1, 1]} : vector<16x512xf32> to vector<2x512xf32>
    %387 = arith.truncf %346 : vector<2x128xf32> to vector<2x128xbf16>
    %cst_123 = arith.constant dense<0.000000e+00> : vector<2x512xf32>
    %388 = tpu.matmul %387, %7, %cst_123 {dimension_numbers = #tpu.dot_dimension_numbers<[1], [0], [0], [1], [0, 0, 1, 1], [], []>} : vector<2x128xbf16>, vector<128x512xbf16>, vector<2x512xf32> -> vector<2x512xf32>
    %389 = arith.addf %386, %388 : vector<2x512xf32>
    %390 = vector.extract_strided_slice %389 {offsets = [0, 0], sizes = [2, 128], strides = [1, 1]} : vector<2x512xf32> to vector<2x128xf32>
    %cst_124 = arith.constant 5.000000e-01 : f32
    %391 = vector.broadcast %cst_124 : f32 to vector<2x128xf32>
    %392 = arith.mulf %391, %390 : vector<2x128xf32>
    %393 = math.tanh %392 : vector<2x128xf32>
    %cst_125 = arith.constant 5.000000e-01 : f32
    %394 = vector.broadcast %cst_125 : f32 to vector<2x128xf32>
    %395 = arith.mulf %394, %393 : vector<2x128xf32>
    %cst_126 = arith.constant 5.000000e-01 : f32
    %396 = vector.broadcast %cst_126 : f32 to vector<2x128xf32>
    %397 = arith.addf %395, %396 : vector<2x128xf32>
    %398 = vector.extract_strided_slice %389 {offsets = [0, 128], sizes = [2, 128], strides = [1, 1]} : vector<2x512xf32> to vector<2x128xf32>
    %cst_127 = arith.constant 5.000000e-01 : f32
    %399 = vector.broadcast %cst_127 : f32 to vector<2x128xf32>
    %400 = arith.mulf %399, %398 : vector<2x128xf32>
    %401 = math.tanh %400 : vector<2x128xf32>
    %cst_128 = arith.constant 5.000000e-01 : f32
    %402 = vector.broadcast %cst_128 : f32 to vector<2x128xf32>
    %403 = arith.mulf %402, %401 : vector<2x128xf32>
    %cst_129 = arith.constant 5.000000e-01 : f32
    %404 = vector.broadcast %cst_129 : f32 to vector<2x128xf32>
    %405 = arith.addf %403, %404 : vector<2x128xf32>
    %406 = vector.extract_strided_slice %389 {offsets = [0, 256], sizes = [2, 128], strides = [1, 1]} : vector<2x512xf32> to vector<2x128xf32>
    %407 = math.tanh %406 : vector<2x128xf32>
    %408 = vector.extract_strided_slice %389 {offsets = [0, 384], sizes = [2, 128], strides = [1, 1]} : vector<2x512xf32> to vector<2x128xf32>
    %cst_130 = arith.constant 5.000000e-01 : f32
    %409 = vector.broadcast %cst_130 : f32 to vector<2x128xf32>
    %410 = arith.mulf %409, %408 : vector<2x128xf32>
    %411 = math.tanh %410 : vector<2x128xf32>
    %cst_131 = arith.constant 5.000000e-01 : f32
    %412 = vector.broadcast %cst_131 : f32 to vector<2x128xf32>
    %413 = arith.mulf %412, %411 : vector<2x128xf32>
    %cst_132 = arith.constant 5.000000e-01 : f32
    %414 = vector.broadcast %cst_132 : f32 to vector<2x128xf32>
    %415 = arith.addf %413, %414 : vector<2x128xf32>
    %416 = arith.mulf %405, %344 : vector<2x128xf32>
    %417 = arith.mulf %397, %407 : vector<2x128xf32>
    %418 = arith.addf %416, %417 : vector<2x128xf32>
    %419 = math.tanh %418 : vector<2x128xf32>
    %420 = arith.mulf %415, %419 : vector<2x128xf32>
    %421 = arith.truncf %420 : vector<2x128xf32> to vector<2x128xbf16>
    %cst_133 = arith.constant dense<0.000000e+00> : vector<2x512xf32>
    %422 = tpu.matmul %421, %9, %cst_133 {dimension_numbers = #tpu.dot_dimension_numbers<[1], [0], [0], [1], [0, 0, 1, 1], [], []>} : vector<2x128xbf16>, vector<128x512xbf16>, vector<2x512xf32> -> vector<2x512xf32>
    %423 = vector.broadcast %10 : vector<1x512xf32> to vector<2x512xf32>
    %424 = arith.addf %422, %423 : vector<2x512xf32>
    %425 = arith.truncf %384 : vector<2x128xf32> to vector<2x128xbf16>
    %cst_134 = arith.constant dense<0.000000e+00> : vector<2x512xf32>
    %426 = tpu.matmul %425, %8, %cst_134 {dimension_numbers = #tpu.dot_dimension_numbers<[1], [0], [0], [1], [0, 0, 1, 1], [], []>} : vector<2x128xbf16>, vector<128x512xbf16>, vector<2x512xf32> -> vector<2x512xf32>
    %427 = arith.addf %424, %426 : vector<2x512xf32>
    %428 = vector.extract_strided_slice %427 {offsets = [0, 0], sizes = [2, 128], strides = [1, 1]} : vector<2x512xf32> to vector<2x128xf32>
    %cst_135 = arith.constant 5.000000e-01 : f32
    %429 = vector.broadcast %cst_135 : f32 to vector<2x128xf32>
    %430 = arith.mulf %429, %428 : vector<2x128xf32>
    %431 = math.tanh %430 : vector<2x128xf32>
    %cst_136 = arith.constant 5.000000e-01 : f32
    %432 = vector.broadcast %cst_136 : f32 to vector<2x128xf32>
    %433 = arith.mulf %432, %431 : vector<2x128xf32>
    %cst_137 = arith.constant 5.000000e-01 : f32
    %434 = vector.broadcast %cst_137 : f32 to vector<2x128xf32>
    %435 = arith.addf %433, %434 : vector<2x128xf32>
    %436 = vector.extract_strided_slice %427 {offsets = [0, 128], sizes = [2, 128], strides = [1, 1]} : vector<2x512xf32> to vector<2x128xf32>
    %cst_138 = arith.constant 5.000000e-01 : f32
    %437 = vector.broadcast %cst_138 : f32 to vector<2x128xf32>
    %438 = arith.mulf %437, %436 : vector<2x128xf32>
    %439 = math.tanh %438 : vector<2x128xf32>
    %cst_139 = arith.constant 5.000000e-01 : f32
    %440 = vector.broadcast %cst_139 : f32 to vector<2x128xf32>
    %441 = arith.mulf %440, %439 : vector<2x128xf32>
    %cst_140 = arith.constant 5.000000e-01 : f32
    %442 = vector.broadcast %cst_140 : f32 to vector<2x128xf32>
    %443 = arith.addf %441, %442 : vector<2x128xf32>
    %444 = vector.extract_strided_slice %427 {offsets = [0, 256], sizes = [2, 128], strides = [1, 1]} : vector<2x512xf32> to vector<2x128xf32>
    %445 = math.tanh %444 : vector<2x128xf32>
    %446 = vector.extract_strided_slice %427 {offsets = [0, 384], sizes = [2, 128], strides = [1, 1]} : vector<2x512xf32> to vector<2x128xf32>
    %cst_141 = arith.constant 5.000000e-01 : f32
    %447 = vector.broadcast %cst_141 : f32 to vector<2x128xf32>
    %448 = arith.mulf %447, %446 : vector<2x128xf32>
    %449 = math.tanh %448 : vector<2x128xf32>
    %cst_142 = arith.constant 5.000000e-01 : f32
    %450 = vector.broadcast %cst_142 : f32 to vector<2x128xf32>
    %451 = arith.mulf %450, %449 : vector<2x128xf32>
    %cst_143 = arith.constant 5.000000e-01 : f32
    %452 = vector.broadcast %cst_143 : f32 to vector<2x128xf32>
    %453 = arith.addf %451, %452 : vector<2x128xf32>
    %454 = arith.mulf %443, %382 : vector<2x128xf32>
    %455 = arith.mulf %435, %445 : vector<2x128xf32>
    %456 = arith.addf %454, %455 : vector<2x128xf32>
    %457 = math.tanh %456 : vector<2x128xf32>
    %458 = arith.mulf %453, %457 : vector<2x128xf32>
    %459 = arith.addf %385, %458 : vector<2x128xf32>
    %460 = vector.extract_strided_slice %6 {offsets = [12, 0], sizes = [2, 512], strides = [1, 1]} : vector<16x512xf32> to vector<2x512xf32>
    %461 = arith.truncf %420 : vector<2x128xf32> to vector<2x128xbf16>
    %cst_144 = arith.constant dense<0.000000e+00> : vector<2x512xf32>
    %462 = tpu.matmul %461, %7, %cst_144 {dimension_numbers = #tpu.dot_dimension_numbers<[1], [0], [0], [1], [0, 0, 1, 1], [], []>} : vector<2x128xbf16>, vector<128x512xbf16>, vector<2x512xf32> -> vector<2x512xf32>
    %463 = arith.addf %460, %462 : vector<2x512xf32>
    %464 = vector.extract_strided_slice %463 {offsets = [0, 0], sizes = [2, 128], strides = [1, 1]} : vector<2x512xf32> to vector<2x128xf32>
    %cst_145 = arith.constant 5.000000e-01 : f32
    %465 = vector.broadcast %cst_145 : f32 to vector<2x128xf32>
    %466 = arith.mulf %465, %464 : vector<2x128xf32>
    %467 = math.tanh %466 : vector<2x128xf32>
    %cst_146 = arith.constant 5.000000e-01 : f32
    %468 = vector.broadcast %cst_146 : f32 to vector<2x128xf32>
    %469 = arith.mulf %468, %467 : vector<2x128xf32>
    %cst_147 = arith.constant 5.000000e-01 : f32
    %470 = vector.broadcast %cst_147 : f32 to vector<2x128xf32>
    %471 = arith.addf %469, %470 : vector<2x128xf32>
    %472 = vector.extract_strided_slice %463 {offsets = [0, 128], sizes = [2, 128], strides = [1, 1]} : vector<2x512xf32> to vector<2x128xf32>
    %cst_148 = arith.constant 5.000000e-01 : f32
    %473 = vector.broadcast %cst_148 : f32 to vector<2x128xf32>
    %474 = arith.mulf %473, %472 : vector<2x128xf32>
    %475 = math.tanh %474 : vector<2x128xf32>
    %cst_149 = arith.constant 5.000000e-01 : f32
    %476 = vector.broadcast %cst_149 : f32 to vector<2x128xf32>
    %477 = arith.mulf %476, %475 : vector<2x128xf32>
    %cst_150 = arith.constant 5.000000e-01 : f32
    %478 = vector.broadcast %cst_150 : f32 to vector<2x128xf32>
    %479 = arith.addf %477, %478 : vector<2x128xf32>
    %480 = vector.extract_strided_slice %463 {offsets = [0, 256], sizes = [2, 128], strides = [1, 1]} : vector<2x512xf32> to vector<2x128xf32>
    %481 = math.tanh %480 : vector<2x128xf32>
    %482 = vector.extract_strided_slice %463 {offsets = [0, 384], sizes = [2, 128], strides = [1, 1]} : vector<2x512xf32> to vector<2x128xf32>
    %cst_151 = arith.constant 5.000000e-01 : f32
    %483 = vector.broadcast %cst_151 : f32 to vector<2x128xf32>
    %484 = arith.mulf %483, %482 : vector<2x128xf32>
    %485 = math.tanh %484 : vector<2x128xf32>
    %cst_152 = arith.constant 5.000000e-01 : f32
    %486 = vector.broadcast %cst_152 : f32 to vector<2x128xf32>
    %487 = arith.mulf %486, %485 : vector<2x128xf32>
    %cst_153 = arith.constant 5.000000e-01 : f32
    %488 = vector.broadcast %cst_153 : f32 to vector<2x128xf32>
    %489 = arith.addf %487, %488 : vector<2x128xf32>
    %490 = arith.mulf %479, %418 : vector<2x128xf32>
    %491 = arith.mulf %471, %481 : vector<2x128xf32>
    %492 = arith.addf %490, %491 : vector<2x128xf32>
    %493 = math.tanh %492 : vector<2x128xf32>
    %494 = arith.mulf %489, %493 : vector<2x128xf32>
    %495 = arith.truncf %494 : vector<2x128xf32> to vector<2x128xbf16>
    %cst_154 = arith.constant dense<0.000000e+00> : vector<2x512xf32>
    %496 = tpu.matmul %495, %9, %cst_154 {dimension_numbers = #tpu.dot_dimension_numbers<[1], [0], [0], [1], [0, 0, 1, 1], [], []>} : vector<2x128xbf16>, vector<128x512xbf16>, vector<2x512xf32> -> vector<2x512xf32>
    %497 = vector.broadcast %10 : vector<1x512xf32> to vector<2x512xf32>
    %498 = arith.addf %496, %497 : vector<2x512xf32>
    %499 = arith.truncf %458 : vector<2x128xf32> to vector<2x128xbf16>
    %cst_155 = arith.constant dense<0.000000e+00> : vector<2x512xf32>
    %500 = tpu.matmul %499, %8, %cst_155 {dimension_numbers = #tpu.dot_dimension_numbers<[1], [0], [0], [1], [0, 0, 1, 1], [], []>} : vector<2x128xbf16>, vector<128x512xbf16>, vector<2x512xf32> -> vector<2x512xf32>
    %501 = arith.addf %498, %500 : vector<2x512xf32>
    %502 = vector.extract_strided_slice %501 {offsets = [0, 0], sizes = [2, 128], strides = [1, 1]} : vector<2x512xf32> to vector<2x128xf32>
    %cst_156 = arith.constant 5.000000e-01 : f32
    %503 = vector.broadcast %cst_156 : f32 to vector<2x128xf32>
    %504 = arith.mulf %503, %502 : vector<2x128xf32>
    %505 = math.tanh %504 : vector<2x128xf32>
    %cst_157 = arith.constant 5.000000e-01 : f32
    %506 = vector.broadcast %cst_157 : f32 to vector<2x128xf32>
    %507 = arith.mulf %506, %505 : vector<2x128xf32>
    %cst_158 = arith.constant 5.000000e-01 : f32
    %508 = vector.broadcast %cst_158 : f32 to vector<2x128xf32>
    %509 = arith.addf %507, %508 : vector<2x128xf32>
    %510 = vector.extract_strided_slice %501 {offsets = [0, 128], sizes = [2, 128], strides = [1, 1]} : vector<2x512xf32> to vector<2x128xf32>
    %cst_159 = arith.constant 5.000000e-01 : f32
    %511 = vector.broadcast %cst_159 : f32 to vector<2x128xf32>
    %512 = arith.mulf %511, %510 : vector<2x128xf32>
    %513 = math.tanh %512 : vector<2x128xf32>
    %cst_160 = arith.constant 5.000000e-01 : f32
    %514 = vector.broadcast %cst_160 : f32 to vector<2x128xf32>
    %515 = arith.mulf %514, %513 : vector<2x128xf32>
    %cst_161 = arith.constant 5.000000e-01 : f32
    %516 = vector.broadcast %cst_161 : f32 to vector<2x128xf32>
    %517 = arith.addf %515, %516 : vector<2x128xf32>
    %518 = vector.extract_strided_slice %501 {offsets = [0, 256], sizes = [2, 128], strides = [1, 1]} : vector<2x512xf32> to vector<2x128xf32>
    %519 = math.tanh %518 : vector<2x128xf32>
    %520 = vector.extract_strided_slice %501 {offsets = [0, 384], sizes = [2, 128], strides = [1, 1]} : vector<2x512xf32> to vector<2x128xf32>
    %cst_162 = arith.constant 5.000000e-01 : f32
    %521 = vector.broadcast %cst_162 : f32 to vector<2x128xf32>
    %522 = arith.mulf %521, %520 : vector<2x128xf32>
    %523 = math.tanh %522 : vector<2x128xf32>
    %cst_163 = arith.constant 5.000000e-01 : f32
    %524 = vector.broadcast %cst_163 : f32 to vector<2x128xf32>
    %525 = arith.mulf %524, %523 : vector<2x128xf32>
    %cst_164 = arith.constant 5.000000e-01 : f32
    %526 = vector.broadcast %cst_164 : f32 to vector<2x128xf32>
    %527 = arith.addf %525, %526 : vector<2x128xf32>
    %528 = arith.mulf %517, %456 : vector<2x128xf32>
    %529 = arith.mulf %509, %519 : vector<2x128xf32>
    %530 = arith.addf %528, %529 : vector<2x128xf32>
    %531 = math.tanh %530 : vector<2x128xf32>
    %532 = arith.mulf %527, %531 : vector<2x128xf32>
    %533 = arith.addf %459, %532 : vector<2x128xf32>
    %534 = vector.extract_strided_slice %6 {offsets = [14, 0], sizes = [2, 512], strides = [1, 1]} : vector<16x512xf32> to vector<2x512xf32>
    %535 = arith.truncf %494 : vector<2x128xf32> to vector<2x128xbf16>
    %cst_165 = arith.constant dense<0.000000e+00> : vector<2x512xf32>
    %536 = tpu.matmul %535, %7, %cst_165 {dimension_numbers = #tpu.dot_dimension_numbers<[1], [0], [0], [1], [0, 0, 1, 1], [], []>} : vector<2x128xbf16>, vector<128x512xbf16>, vector<2x512xf32> -> vector<2x512xf32>
    %537 = arith.addf %534, %536 : vector<2x512xf32>
    %538 = vector.extract_strided_slice %537 {offsets = [0, 0], sizes = [2, 128], strides = [1, 1]} : vector<2x512xf32> to vector<2x128xf32>
    %cst_166 = arith.constant 5.000000e-01 : f32
    %539 = vector.broadcast %cst_166 : f32 to vector<2x128xf32>
    %540 = arith.mulf %539, %538 : vector<2x128xf32>
    %541 = math.tanh %540 : vector<2x128xf32>
    %cst_167 = arith.constant 5.000000e-01 : f32
    %542 = vector.broadcast %cst_167 : f32 to vector<2x128xf32>
    %543 = arith.mulf %542, %541 : vector<2x128xf32>
    %cst_168 = arith.constant 5.000000e-01 : f32
    %544 = vector.broadcast %cst_168 : f32 to vector<2x128xf32>
    %545 = arith.addf %543, %544 : vector<2x128xf32>
    %546 = vector.extract_strided_slice %537 {offsets = [0, 128], sizes = [2, 128], strides = [1, 1]} : vector<2x512xf32> to vector<2x128xf32>
    %cst_169 = arith.constant 5.000000e-01 : f32
    %547 = vector.broadcast %cst_169 : f32 to vector<2x128xf32>
    %548 = arith.mulf %547, %546 : vector<2x128xf32>
    %549 = math.tanh %548 : vector<2x128xf32>
    %cst_170 = arith.constant 5.000000e-01 : f32
    %550 = vector.broadcast %cst_170 : f32 to vector<2x128xf32>
    %551 = arith.mulf %550, %549 : vector<2x128xf32>
    %cst_171 = arith.constant 5.000000e-01 : f32
    %552 = vector.broadcast %cst_171 : f32 to vector<2x128xf32>
    %553 = arith.addf %551, %552 : vector<2x128xf32>
    %554 = vector.extract_strided_slice %537 {offsets = [0, 256], sizes = [2, 128], strides = [1, 1]} : vector<2x512xf32> to vector<2x128xf32>
    %555 = math.tanh %554 : vector<2x128xf32>
    %556 = vector.extract_strided_slice %537 {offsets = [0, 384], sizes = [2, 128], strides = [1, 1]} : vector<2x512xf32> to vector<2x128xf32>
    %cst_172 = arith.constant 5.000000e-01 : f32
    %557 = vector.broadcast %cst_172 : f32 to vector<2x128xf32>
    %558 = arith.mulf %557, %556 : vector<2x128xf32>
    %559 = math.tanh %558 : vector<2x128xf32>
    %cst_173 = arith.constant 5.000000e-01 : f32
    %560 = vector.broadcast %cst_173 : f32 to vector<2x128xf32>
    %561 = arith.mulf %560, %559 : vector<2x128xf32>
    %cst_174 = arith.constant 5.000000e-01 : f32
    %562 = vector.broadcast %cst_174 : f32 to vector<2x128xf32>
    %563 = arith.addf %561, %562 : vector<2x128xf32>
    %564 = arith.mulf %553, %492 : vector<2x128xf32>
    %565 = arith.mulf %545, %555 : vector<2x128xf32>
    %566 = arith.addf %564, %565 : vector<2x128xf32>
    %567 = math.tanh %566 : vector<2x128xf32>
    %568 = arith.mulf %563, %567 : vector<2x128xf32>
    %569 = arith.truncf %568 : vector<2x128xf32> to vector<2x128xbf16>
    %cst_175 = arith.constant dense<0.000000e+00> : vector<2x512xf32>
    %570 = tpu.matmul %569, %9, %cst_175 {dimension_numbers = #tpu.dot_dimension_numbers<[1], [0], [0], [1], [0, 0, 1, 1], [], []>} : vector<2x128xbf16>, vector<128x512xbf16>, vector<2x512xf32> -> vector<2x512xf32>
    %571 = vector.broadcast %10 : vector<1x512xf32> to vector<2x512xf32>
    %572 = arith.addf %570, %571 : vector<2x512xf32>
    %573 = arith.truncf %532 : vector<2x128xf32> to vector<2x128xbf16>
    %cst_176 = arith.constant dense<0.000000e+00> : vector<2x512xf32>
    %574 = tpu.matmul %573, %8, %cst_176 {dimension_numbers = #tpu.dot_dimension_numbers<[1], [0], [0], [1], [0, 0, 1, 1], [], []>} : vector<2x128xbf16>, vector<128x512xbf16>, vector<2x512xf32> -> vector<2x512xf32>
    %575 = arith.addf %572, %574 : vector<2x512xf32>
    %576 = vector.extract_strided_slice %575 {offsets = [0, 0], sizes = [2, 128], strides = [1, 1]} : vector<2x512xf32> to vector<2x128xf32>
    %cst_177 = arith.constant 5.000000e-01 : f32
    %577 = vector.broadcast %cst_177 : f32 to vector<2x128xf32>
    %578 = arith.mulf %577, %576 : vector<2x128xf32>
    %579 = math.tanh %578 : vector<2x128xf32>
    %cst_178 = arith.constant 5.000000e-01 : f32
    %580 = vector.broadcast %cst_178 : f32 to vector<2x128xf32>
    %581 = arith.mulf %580, %579 : vector<2x128xf32>
    %cst_179 = arith.constant 5.000000e-01 : f32
    %582 = vector.broadcast %cst_179 : f32 to vector<2x128xf32>
    %583 = arith.addf %581, %582 : vector<2x128xf32>
    %584 = vector.extract_strided_slice %575 {offsets = [0, 128], sizes = [2, 128], strides = [1, 1]} : vector<2x512xf32> to vector<2x128xf32>
    %cst_180 = arith.constant 5.000000e-01 : f32
    %585 = vector.broadcast %cst_180 : f32 to vector<2x128xf32>
    %586 = arith.mulf %585, %584 : vector<2x128xf32>
    %587 = math.tanh %586 : vector<2x128xf32>
    %cst_181 = arith.constant 5.000000e-01 : f32
    %588 = vector.broadcast %cst_181 : f32 to vector<2x128xf32>
    %589 = arith.mulf %588, %587 : vector<2x128xf32>
    %cst_182 = arith.constant 5.000000e-01 : f32
    %590 = vector.broadcast %cst_182 : f32 to vector<2x128xf32>
    %591 = arith.addf %589, %590 : vector<2x128xf32>
    %592 = vector.extract_strided_slice %575 {offsets = [0, 256], sizes = [2, 128], strides = [1, 1]} : vector<2x512xf32> to vector<2x128xf32>
    %593 = math.tanh %592 : vector<2x128xf32>
    %594 = vector.extract_strided_slice %575 {offsets = [0, 384], sizes = [2, 128], strides = [1, 1]} : vector<2x512xf32> to vector<2x128xf32>
    %cst_183 = arith.constant 5.000000e-01 : f32
    %595 = vector.broadcast %cst_183 : f32 to vector<2x128xf32>
    %596 = arith.mulf %595, %594 : vector<2x128xf32>
    %597 = math.tanh %596 : vector<2x128xf32>
    %cst_184 = arith.constant 5.000000e-01 : f32
    %598 = vector.broadcast %cst_184 : f32 to vector<2x128xf32>
    %599 = arith.mulf %598, %597 : vector<2x128xf32>
    %cst_185 = arith.constant 5.000000e-01 : f32
    %600 = vector.broadcast %cst_185 : f32 to vector<2x128xf32>
    %601 = arith.addf %599, %600 : vector<2x128xf32>
    %602 = arith.mulf %591, %530 : vector<2x128xf32>
    %603 = arith.mulf %583, %593 : vector<2x128xf32>
    %604 = arith.addf %602, %603 : vector<2x128xf32>
    %605 = math.tanh %604 : vector<2x128xf32>
    %606 = arith.mulf %601, %605 : vector<2x128xf32>
    %607 = arith.addf %533, %606 : vector<2x128xf32>
    %cst_186 = arith.constant 1.250000e-01 : f32
    %608 = vector.broadcast %cst_186 : f32 to vector<2x128xf32>
    %609 = arith.mulf %607, %608 : vector<2x128xf32>
    %c0_187 = arith.constant 0 : index
    %c0_188 = arith.constant 0 : index
    %610 = vector.load %arg9[%c0_187, %c0_188] : memref<2x128xf32, #tpu.memory_space<vmem>>, vector<2x128xf32>
    tpu.vector_store %arg9[%c0_187, %c0_188], %609 {strides = array<i32>} : memref<2x128xf32, #tpu.memory_space<vmem>>, vector<2x128xf32>,
    %c0_189 = arith.constant 0 : index
    %c0_190 = arith.constant 0 : index
    %611 = vector.load %arg7[%c0_189, %c0_190] : memref<128x128xf32, #tpu.memory_space<vmem>>, vector<128x128xf32>
    %cst_191 = arith.constant dense<0.000000e+00> : vector<2x128xf32>
    %612 = tpu.matmul %609, %611, %cst_191 {dimension_numbers = #tpu.dot_dimension_numbers<[1], [0], [0], [1], [0, 0, 1, 1], [], []>} : vector<2x128xf32>, vector<128x128xf32>, vector<2x128xf32> -> vector<2x128xf32>
    %c0_192 = arith.constant 0 : index
    %c0_193 = arith.constant 0 : index
    %613 = vector.load %arg8[%c0_192, %c0_193] : memref<1x128xf32, #tpu.memory_space<vmem>>, vector<1x128xf32>
    %614 = vector.broadcast %613 : vector<1x128xf32> to vector<2x128xf32>
    %615 = arith.addf %612, %614 : vector<2x128xf32>
    %c0_194 = arith.constant 0 : index
    %c0_195 = arith.constant 0 : index
    %616 = vector.load %arg10[%c0_194, %c0_195] : memref<2x128xf32, #tpu.memory_space<vmem>>, vector<2x128xf32>
    tpu.vector_store %arg10[%c0_194, %c0_195], %615 {strides = array<i32>} : memref<2x128xf32, #tpu.memory_space<vmem>>, vector<2x128xf32>,
    return
  }
}

</mosaic_0001>

<llo_original>
// kernel: rnn_forward.1
$region0: #{rnn_forward.1}
  #allocation0 [shape = 'u32[]', space=smem, size = 0x4, offset = 0x4, fixed_abs, tag = 'smem constant byte address 0x4 - core index']
  #allocation1 [shape = 'u32[144,128]{1,0:T(1,128)}', space=vmem, size = 0x12000, scoped, tag = 'internal scratch']
  %s0 = inlined_call_operand.vmem [shape: f32[16,50], index: 0, kind: input, shape index: {}]
  %s1 = inlined_call_operand.hbm [shape: bf16[50,512], index: 1, kind: input, shape index: {}]
  %s2 = inlined_call_operand.hbm [shape: bf16[128,512], index: 2, kind: input, shape index: {}]
  %s3 = inlined_call_operand.vmem [shape: f32[1,512], index: 3, kind: input, shape index: {}]
  %s4 = inlined_call_operand.hbm [shape: bf16[128,512], index: 4, kind: input, shape index: {}]
  %s5 = inlined_call_operand.hbm [shape: bf16[128,512], index: 5, kind: input, shape index: {}]
  %s6 = inlined_call_operand.vmem [shape: f32[1,512], index: 6, kind: input, shape index: {}]
  %s7 = inlined_call_operand.hbm [shape: f32[128,128], index: 7, kind: input, shape index: {}]
  %s8 = inlined_call_operand.vmem [shape: f32[1,128], index: 8, kind: input, shape index: {}]
  %s9 = inlined_call_operand.hbm [shape: f32[2,128], index: 9, kind: output, shape index: {0}]
  %s10 = inlined_call_operand.hbm [shape: f32[2,128], index: 10, kind: output, shape index: {1}]
  %11 = xla_tuple %s9, %s10
  %s12 = sld [smem:[#allocation0]]
  $region74: #{rnn_forward.1} parent=0
    _
  %s14 = ssub.s32 1, %s12
  %s15 = scalar_select 0, %s14, %s12
  $region1: #{rnn_forward.1} parent=0
    #allocation2 [shape = 'u8[57344]{0}', space=vmem, size = 0xe000, scoped, tag = 'input window, operand 1, single buffered']
    #allocation3 [shape = 's32[1]{0}', space=sflag, size = 0x4, scoped, tag = 'scoped memory for rnn_forward.1']
    #allocation4 [shape = 's32[1]{0}', space=sflag, size = 0x4, scoped, tag = 'scoped memory for rnn_forward.1']
    #allocation5 [shape = 'u8[131072]{0}', space=vmem, size = 0x20000, scoped, tag = 'input window, operand 2, single buffered']
    #allocation6 [shape = 's32[1]{0}', space=sflag, size = 0x4, scoped, tag = 'scoped memory for rnn_forward.1']
    #allocation7 [shape = 'u8[131072]{0}', space=vmem, size = 0x20000, scoped, tag = 'input window, operand 4, single buffered']
    #allocation8 [shape = 'u8[131072]{0}', space=vmem, size = 0x20000, scoped, tag = 'input window, operand 5, single buffered']
    #allocation9 [shape = 's32[1]{0}', space=sflag, size = 0x4, scoped, tag = 'scoped memory for rnn_forward.1']
    #allocation10 [shape = 'u8[65536]{0}', space=vmem, size = 0x10000, scoped, tag = 'input window, operand 7, single buffered']
    #allocation11 [shape = 'u8[1024]{0}', space=vmem, size = 0x400, scoped, tag = 'output window, operand 0, single buffered']
    #allocation12 [shape = 'u8[1024]{0}', space=vmem, size = 0x400, scoped, tag = 'output window, operand 1, single buffered']
    #allocation13 [shape = 's32[1]{0}', space=sflag, size = 0x4, scoped, tag = 'scoped memory for rnn_forward.1']
    %16 = vsyncpa [#allocation3], 0
    %17 = vsyncpa [#allocation6], 0
    %18 = vsyncpa [#allocation9], 0
    %19 = vsyncpa [#allocation4], 0
    %20 = vsyncpa [#allocation13], 0
    // Predicated region
    $region2: #{rnn_forward.1} parent=1 // pred_check
      _
    $region3: #{rnn_forward.1} parent=1 // pred_check_branch
      %22 = sbr.rel (0) target = $region5
    $region4: #{rnn_forward.1} parent=1 // pred_region
      _
    $region5: #{rnn_forward.1} parent=1 // pred_fallthru
      _
    // Predicated region
    $region6: #{rnn_forward.1} parent=1 // pred_check
      _
    $region7: #{rnn_forward.1} parent=1 // pred_check_branch
      %24 = sbr.rel (0) target = $region9
    $region8: #{rnn_forward.1} parent=1 // pred_region
      %s26 = ssub.s32 1792, 1792
      %27 = vsyncadd [#allocation3], %s26
      %s28 = sshll.u32 [#allocation2], 4
      %s29 = int_to_ptr.vmem [resolvable:$true] %s28
      %34 = dma.hbm_to_vmem [thread:$0]  %s1, 1792, %s29, [#allocation3], 256, 256, 16
    $region9: #{rnn_forward.1} parent=1 // pred_fallthru
      _
    // Predicated region
    $region10: #{rnn_forward.1} parent=1 // pred_check
      _
    $region11: #{rnn_forward.1} parent=1 // pred_check_branch
      %36 = sbr.rel (0) target = $region13
    $region12: #{rnn_forward.1} parent=1 // pred_region
      %s38 = ssub.s32 4096, 4096
      %39 = vsyncadd [#allocation6], %s38
      %s40 = sshll.u32 [#allocation5], 4
      %s41 = int_to_ptr.vmem [resolvable:$true] %s40
      %46 = dma.hbm_to_vmem [thread:$0]  %s2, 4096, %s41, [#allocation6], 256, 256, 16
    $region13: #{rnn_forward.1} parent=1 // pred_fallthru
      _
    // Predicated region
    $region14: #{rnn_forward.1} parent=1 // pred_check
      _
    $region15: #{rnn_forward.1} parent=1 // pred_check_branch
      %48 = sbr.rel (0) target = $region17
    $region16: #{rnn_forward.1} parent=1 // pred_region
      _
    $region17: #{rnn_forward.1} parent=1 // pred_fallthru
      _
    // Predicated region
    $region18: #{rnn_forward.1} parent=1 // pred_check
      _
    $region19: #{rnn_forward.1} parent=1 // pred_check_branch
      %50 = sbr.rel (0) target = $region21
    $region20: #{rnn_forward.1} parent=1 // pred_region
      %s52 = ssub.s32 4096, 4096
      %53 = vsyncadd [#allocation6], %s52
      %s54 = sshll.u32 [#allocation7], 4
      %s55 = int_to_ptr.vmem [resolvable:$true] %s54
      %60 = dma.hbm_to_vmem [thread:$0]  %s4, 4096, %s55, [#allocation6], 256, 256, 16
    $region21: #{rnn_forward.1} parent=1 // pred_fallthru
      _
    // Predicated region
    $region22: #{rnn_forward.1} parent=1 // pred_check
      _
    $region23: #{rnn_forward.1} parent=1 // pred_check_branch
      %62 = sbr.rel (0) target = $region25
    $region24: #{rnn_forward.1} parent=1 // pred_region
      %s64 = ssub.s32 4096, 4096
      %65 = vsyncadd [#allocation9], %s64
      %s66 = sshll.u32 [#allocation8], 4
      %s67 = int_to_ptr.vmem [resolvable:$true] %s66
      %72 = dma.hbm_to_vmem [thread:$0]  %s5, 4096, %s67, [#allocation9], 256, 256, 16
    $region25: #{rnn_forward.1} parent=1 // pred_fallthru
      _
    // Predicated region
    $region26: #{rnn_forward.1} parent=1 // pred_check
      _
    $region27: #{rnn_forward.1} parent=1 // pred_check_branch
      %74 = sbr.rel (0) target = $region29
    $region28: #{rnn_forward.1} parent=1 // pred_region
      _
    $region29: #{rnn_forward.1} parent=1 // pred_fallthru
      _
    // Predicated region
    $region30: #{rnn_forward.1} parent=1 // pred_check
      _
    $region31: #{rnn_forward.1} parent=1 // pred_check_branch
      %76 = sbr.rel (0) target = $region33
    $region32: #{rnn_forward.1} parent=1 // pred_region
      %s78 = ssub.s32 2048, 2048
      %79 = vsyncadd [#allocation9], %s78
      %s80 = sshll.u32 [#allocation10], 4
      %s81 = int_to_ptr.vmem [resolvable:$true] %s80
      %86 = dma.hbm_to_vmem [thread:$0]  %s7, 2048, %s81, [#allocation9], 128, 128, 8
    $region33: #{rnn_forward.1} parent=1 // pred_fallthru
      _
    // Predicated region
    $region34: #{rnn_forward.1} parent=1 // pred_check
      _
    $region35: #{rnn_forward.1} parent=1 // pred_check_branch
      %88 = sbr.rel (0) target = $region37
    $region36: #{rnn_forward.1} parent=1 // pred_region
      _
    $region37: #{rnn_forward.1} parent=1 // pred_fallthru
      _
    // Predicated region
    $region38: #{rnn_forward.1} parent=1 // pred_check
      _
    $region39: #{rnn_forward.1} parent=1 // pred_check_branch
      %90 = sbr.rel (0) target = $region41
    $region40: #{rnn_forward.1} parent=1 // pred_region
      %91 = dma.done [#allocation3], 1792
    $region41: #{rnn_forward.1} parent=1 // pred_fallthru
      _
    // Predicated region
    $region42: #{rnn_forward.1} parent=1 // pred_check
      _
    $region43: #{rnn_forward.1} parent=1 // pred_check_branch
      %93 = sbr.rel (0) target = $region45
    $region44: #{rnn_forward.1} parent=1 // pred_region
      %94 = dma.done [#allocation6], 4096
    $region45: #{rnn_forward.1} parent=1 // pred_fallthru
      _
    // Predicated region
    $region46: #{rnn_forward.1} parent=1 // pred_check
      _
    $region47: #{rnn_forward.1} parent=1 // pred_check_branch
      %96 = sbr.rel (0) target = $region49
    $region48: #{rnn_forward.1} parent=1 // pred_region
      %97 = dma.done [#allocation6], 4096
    $region49: #{rnn_forward.1} parent=1 // pred_fallthru
      _
    // Predicated region
    $region50: #{rnn_forward.1} parent=1 // pred_check
      _
    $region51: #{rnn_forward.1} parent=1 // pred_check_branch
      %99 = sbr.rel (0) target = $region53
    $region52: #{rnn_forward.1} parent=1 // pred_region
      %100 = dma.done [#allocation9], 4096
    $region53: #{rnn_forward.1} parent=1 // pred_fallthru
      _
    // Predicated region
    $region54: #{rnn_forward.1} parent=1 // pred_check
      _
    $region55: #{rnn_forward.1} parent=1 // pred_check_branch
      %102 = sbr.rel (0) target = $region57
    $region56: #{rnn_forward.1} parent=1 // pred_region
      %103 = dma.done [#allocation9], 2048
    $region57: #{rnn_forward.1} parent=1 // pred_fallthru
      _
    %v105 = vld [vmem:[%s0] sm:$0xff]
    %v106 = vld [vmem:[%s0 + $0x8] sm:$0xff]
    %v107 = vpack.c.bf16 %v106, %v105
    %v108 = vld [vmem:[#allocation2] sm:$0xff]
    %v109 = vld [vmem:[#allocation2 + $0x8] sm:$0xff]
    %v110 = vld [vmem:[#allocation2 + $0x10] sm:$0xff]
    %v111 = vld [vmem:[#allocation2 + $0x18] sm:$0xff]
    %v112 = vld [vmem:[#allocation2 + $0x20] sm:$0xff]
    %v113 = vld [vmem:[#allocation2 + $0x28] sm:$0xff]
    %v114 = vld [vmem:[#allocation2 + $0x30] sm:$0xff]
    %v115 = vld [vmem:[#allocation2 + $0x38] sm:$0xff]
    %v116 = vld [vmem:[#allocation2 + $0x40] sm:$0xff]
    %v117 = vld [vmem:[#allocation2 + $0x48] sm:$0xff]
    %v118 = vld [vmem:[#allocation2 + $0x50] sm:$0xff]
    %v119 = vld [vmem:[#allocation2 + $0x58] sm:$0xff]
    %v120 = vld [vmem:[#allocation2 + $0x60] sm:$0x11]
    %v121 = vld [vmem:[#allocation2 + $0x68] sm:$0x11]
    %v122 = vld [vmem:[%s3] sm:$0xf]
    %v124 = vlaneseq
    %v125 = vshrl.u32 %v124, 7
    %v126 = vsub.s32 0, %v125
    %v127 = vrot.slane %v122, %v126
    %v128 = vlaneseq
    %v129 = vshrl.u32 %v128, 7
    %v130 = vsub.s32 1, %v129
    %v131 = vrot.slane %v122, %v130
    %v132 = vlaneseq
    %v133 = vshrl.u32 %v132, 7
    %v134 = vsub.s32 2, %v133
    %v135 = vrot.slane %v122, %v134
    %v136 = vlaneseq
    %v137 = vshrl.u32 %v136, 7
    %v138 = vsub.s32 3, %v137
    %v139 = vrot.slane %v122, %v138
    %v158 = vunpack.c.l.b16 %v108
    %v159 = vunpack.c.h.b16 %v108
    %v160 = vunpack.c.l.b16 %v109
    %v161 = vunpack.c.h.b16 %v109
    %v162 = vunpack.c.l.b16 %v110
    %v163 = vunpack.c.h.b16 %v110
    %v164 = vunpack.c.l.b16 %v111
    %v165 = vunpack.c.h.b16 %v111
    %v166 = vunpack.c.l.b16 %v112
    %v167 = vunpack.c.h.b16 %v112
    %v168 = vunpack.c.l.b16 %v113
    %v169 = vunpack.c.h.b16 %v113
    %v170 = vunpack.c.l.b16 %v114
    %v171 = vunpack.c.h.b16 %v114
    %v172 = vunpack.c.l.b16 %v115
    %v173 = vunpack.c.h.b16 %v115
    %v174 = vunpack.c.l.b16 %v116
    %v175 = vunpack.c.h.b16 %v116
    %v176 = vunpack.c.l.b16 %v117
    %v177 = vunpack.c.h.b16 %v117
    %v178 = vunpack.c.l.b16 %v118
    %v179 = vunpack.c.h.b16 %v118
    %v180 = vunpack.c.l.b16 %v119
    %v181 = vunpack.c.h.b16 %v119
    %v182 = vunpack.c.l.b16 %v120
    %v183 = vunpack.c.h.b16 %v120
    %v184 = vunpack.c.l.b16 %v121
    %v185 = vunpack.c.h.b16 %v121
    %v186 = vpack.c.b16 %v162, %v158
    %v187 = vpack.c.b16 %v163, %v159
    %v188 = vpack.c.b16 %v164, %v160
    %v189 = vpack.c.b16 %v165, %v161
    %v190 = vpack.c.b16 %v170, %v166
    %v191 = vpack.c.b16 %v171, %v167
    %v192 = vpack.c.b16 %v172, %v168
    %v193 = vpack.c.b16 %v173, %v169
    %v194 = vpack.c.b16 %v178, %v174
    %v195 = vpack.c.b16 %v179, %v175
    %v196 = vpack.c.b16 %v180, %v176
    %v197 = vpack.c.b16 %v181, %v177
    %v198 = vpack.c.b16 %v182, %v182
    %v199 = vpack.c.b16 %v183, %v183
    %v200 = vpack.c.b16 %v184, %v184
    %v201 = vpack.c.b16 %v185, %v185
    %vm214 = vcmask 408576
    %v216 = vsel %vm214, %v107, 0
    %vm218 = vcmask 1040384
    %v220 = vsel %vm218, %v198, 0
    %v223 = vsel %vm218, %v199, 0
    %v226 = vsel %vm218, %v200, 0
    %v229 = vsel %vm218, %v201, 0
    %231 = vmatprep.subr.bf16.mxu0 0
    %232 = vmatpush1.bf16.msra.mxu0 0
    %233 = vmatprep.subr.bf16.mxu0 0
    %234 = vmatpush1.bf16.msra.mxu0 0
    %235 = vmatprep.subr.bf16.mxu0 0
    %236 = vmatpush1.bf16.msra.mxu0 0
    %237 = vmatprep.subr.bf16.mxu0 0
    %238 = vmatpush1.bf16.msra.mxu0 0
    %239 = vmatprep.subr.bf16.mxu0 %v223
    %240 = vmatpush1.bf16.msra.mxu0 %v220
    %241 = vmatprep.subr.bf16.mxu0 %v195
    %242 = vmatpush1.bf16.msra.mxu0 %v194
    %243 = vmatprep.subr.bf16.mxu0 %v191
    %244 = vmatpush1.bf16.msra.mxu0 %v190
    %245 = vmatprep.subr.bf16.mxu0 %v187
    %246 = vmatpush1.bf16.msra.mxu0 %v186
    %247 = vmatprep.subr.bf16.mxu0 0
    %248 = vmatpush2.bf16.msra.mxu0 0
    %249 = vmatprep.subr.bf16.mxu0 0
    %250 = vmatpush2.bf16.msra.mxu0 0
    %251 = vmatprep.subr.bf16.mxu0 0
    %252 = vmatpush2.bf16.msra.mxu0 0
    %253 = vmatprep.subr.bf16.mxu0 0
    %254 = vmatpush2.bf16.msra.mxu0 0
    %255 = vmatprep.subr.bf16.mxu0 0
    %256 = vmatpush2.bf16.msra.mxu0 0
    %257 = vmatprep.subr.bf16.mxu0 0
    %258 = vmatpush2.bf16.msra.mxu0 0
    %259 = vmatprep.subr.bf16.mxu0 0
    %260 = vmatpush2.bf16.msra.mxu0 0
    %261 = vmatprep.subr.bf16.mxu0 0
    %262 = vmatpush2.bf16.msra.mxu0 0
    %263 = vmatprep.mubr.bf16.mxu0 0
    %264 = vmatmul.mubr.bf16.gmra.mxu0 %v216
    %v265 = vpop.f32.mrf.mxu0
    %v266 = vadd.f32 %v127, %v265
    %v267 = vpop.f32.mrf.mxu0
    %v268 = vadd.f32 %v131, %v267
    %v269 = vpop.f32.mrf.mxu0
    %v270 = vadd.f32 %v127, %v269
    %v271 = vpop.f32.mrf.mxu0
    %v272 = vadd.f32 %v131, %v271
    %273 = vdwg.mxu0
    %274 = vmatprep.subr.bf16.mxu0 0
    %275 = vmatpush1.bf16.msra.mxu0 0
    %276 = vmatprep.subr.bf16.mxu0 0
    %277 = vmatpush1.bf16.msra.mxu0 0
    %278 = vmatprep.subr.bf16.mxu0 0
    %279 = vmatpush1.bf16.msra.mxu0 0
    %280 = vmatprep.subr.bf16.mxu0 0
    %281 = vmatpush1.bf16.msra.mxu0 0
    %282 = vmatprep.subr.bf16.mxu0 %v229
    %283 = vmatpush1.bf16.msra.mxu0 %v226
    %284 = vmatprep.subr.bf16.mxu0 %v197
    %285 = vmatpush1.bf16.msra.mxu0 %v196
    %286 = vmatprep.subr.bf16.mxu0 %v193
    %287 = vmatpush1.bf16.msra.mxu0 %v192
    %288 = vmatprep.subr.bf16.mxu0 %v189
    %289 = vmatpush1.bf16.msra.mxu0 %v188
    %290 = vmatprep.subr.bf16.mxu0 0
    %291 = vmatpush2.bf16.msra.mxu0 0
    %292 = vmatprep.subr.bf16.mxu0 0
    %293 = vmatpush2.bf16.msra.mxu0 0
    %294 = vmatprep.subr.bf16.mxu0 0
    %295 = vmatpush2.bf16.msra.mxu0 0
    %296 = vmatprep.subr.bf16.mxu0 0
    %297 = vmatpush2.bf16.msra.mxu0 0
    %298 = vmatprep.subr.bf16.mxu0 0
    %299 = vmatpush2.bf16.msra.mxu0 0
    %300 = vmatprep.subr.bf16.mxu0 0
    %301 = vmatpush2.bf16.msra.mxu0 0
    %302 = vmatprep.subr.bf16.mxu0 0
    %303 = vmatpush2.bf16.msra.mxu0 0
    %304 = vmatprep.subr.bf16.mxu0 0
    %305 = vmatpush2.bf16.msra.mxu0 0
    %306 = vmatprep.mubr.bf16.mxu0 0
    %307 = vmatmul.mubr.bf16.gmra.mxu0 %v216
    %v308 = vpop.f32.mrf.mxu0
    %v309 = vadd.f32 %v135, %v308
    %v310 = vpop.f32.mrf.mxu0
    %v311 = vadd.f32 %v139, %v310
    %v312 = vpop.f32.mrf.mxu0
    %v313 = vadd.f32 %v135, %v312
    %v314 = vpop.f32.mrf.mxu0
    %v315 = vadd.f32 %v139, %v314
    %316 = vdwg.mxu0
    %v317 = vld [vmem:[#allocation5] sm:$0xff]
    %v318 = vld [vmem:[#allocation5 + $0x8] sm:$0xff]
    %v319 = vld [vmem:[#allocation5 + $0x10] sm:$0xff]
    %v320 = vld [vmem:[#allocation5 + $0x18] sm:$0xff]
    %v321 = vld [vmem:[#allocation5 + $0x20] sm:$0xff]
    %v322 = vld [vmem:[#allocation5 + $0x28] sm:$0xff]
    %v323 = vld [vmem:[#allocation5 + $0x30] sm:$0xff]
    %v324 = vld [vmem:[#allocation5 + $0x38] sm:$0xff]
    %v325 = vld [vmem:[#allocation5 + $0x40] sm:$0xff]
    %v326 = vld [vmem:[#allocation5 + $0x48] sm:$0xff]
    %v327 = vld [vmem:[#allocation5 + $0x50] sm:$0xff]
    %v328 = vld [vmem:[#allocation5 + $0x58] sm:$0xff]
    %v329 = vld [vmem:[#allocation5 + $0x60] sm:$0xff]
    %v330 = vld [vmem:[#allocation5 + $0x68] sm:$0xff]
    %v331 = vld [vmem:[#allocation5 + $0x70] sm:$0xff]
    %v332 = vld [vmem:[#allocation5 + $0x78] sm:$0xff]
    %v333 = vld [vmem:[#allocation5 + $0x80] sm:$0xff]
    %v334 = vld [vmem:[#allocation5 + $0x88] sm:$0xff]
    %v335 = vld [vmem:[#allocation5 + $0x90] sm:$0xff]
    %v336 = vld [vmem:[#allocation5 + $0x98] sm:$0xff]
    %v337 = vld [vmem:[#allocation5 + $0xa0] sm:$0xff]
    %v338 = vld [vmem:[#allocation5 + $0xa8] sm:$0xff]
    %v339 = vld [vmem:[#allocation5 + $0xb0] sm:$0xff]
    %v340 = vld [vmem:[#allocation5 + $0xb8] sm:$0xff]
    %v341 = vld [vmem:[#allocation5 + $0xc0] sm:$0xff]
    %v342 = vld [vmem:[#allocation5 + $0xc8] sm:$0xff]
    %v343 = vld [vmem:[#allocation5 + $0xd0] sm:$0xff]
    %v344 = vld [vmem:[#allocation5 + $0xd8] sm:$0xff]
    %v345 = vld [vmem:[#allocation5 + $0xe0] sm:$0xff]
    %v346 = vld [vmem:[#allocation5 + $0xe8] sm:$0xff]
    %v347 = vld [vmem:[#allocation5 + $0xf0] sm:$0xff]
    %v348 = vld [vmem:[#allocation5 + $0xf8] sm:$0xff]
    %v349 = vld [vmem:[#allocation8] sm:$0xff]
    %v350 = vld [vmem:[#allocation8 + $0x8] sm:$0xff]
    %v351 = vld [vmem:[#allocation8 + $0x10] sm:$0xff]
    %v352 = vld [vmem:[#allocation8 + $0x18] sm:$0xff]
    %v353 = vld [vmem:[#allocation8 + $0x20] sm:$0xff]
    %v354 = vld [vmem:[#allocation8 + $0x28] sm:$0xff]
    %v355 = vld [vmem:[#allocation8 + $0x30] sm:$0xff]
    %v356 = vld [vmem:[#allocation8 + $0x38] sm:$0xff]
    %v357 = vld [vmem:[#allocation8 + $0x40] sm:$0xff]
    %v358 = vld [vmem:[#allocation8 + $0x48] sm:$0xff]
    %v359 = vld [vmem:[#allocation8 + $0x50] sm:$0xff]
    %v360 = vld [vmem:[#allocation8 + $0x58] sm:$0xff]
    %v361 = vld [vmem:[#allocation8 + $0x60] sm:$0xff]
    %v362 = vld [vmem:[#allocation8 + $0x68] sm:$0xff]
    %v363 = vld [vmem:[#allocation8 + $0x70] sm:$0xff]
    %v364 = vld [vmem:[#allocation8 + $0x78] sm:$0xff]
    %v365 = vld [vmem:[#allocation8 + $0x80] sm:$0xff]
    %v366 = vld [vmem:[#allocation8 + $0x88] sm:$0xff]
    %v367 = vld [vmem:[#allocation8 + $0x90] sm:$0xff]
    %v368 = vld [vmem:[#allocation8 + $0x98] sm:$0xff]
    %v369 = vld [vmem:[#allocation8 + $0xa0] sm:$0xff]
    %v370 = vld [vmem:[#allocation8 + $0xa8] sm:$0xff]
    %v371 = vld [vmem:[#allocation8 + $0xb0] sm:$0xff]
    %v372 = vld [vmem:[#allocation8 + $0xb8] sm:$0xff]
    %v373 = vld [vmem:[#allocation8 + $0xc0] sm:$0xff]
    %v374 = vld [vmem:[#allocation8 + $0xc8] sm:$0xff]
    %v375 = vld [vmem:[#allocation8 + $0xd0] sm:$0xff]
    %v376 = vld [vmem:[#allocation8 + $0xd8] sm:$0xff]
    %v377 = vld [vmem:[#allocation8 + $0xe0] sm:$0xff]
    %v378 = vld [vmem:[#allocation8 + $0xe8] sm:$0xff]
    %v379 = vld [vmem:[#allocation8 + $0xf0] sm:$0xff]
    %v380 = vld [vmem:[#allocation8 + $0xf8] sm:$0xff]
    %v381 = vld [vmem:[#allocation7] sm:$0xff]
    %v382 = vld [vmem:[#allocation7 + $0x8] sm:$0xff]
    %v383 = vld [vmem:[#allocation7 + $0x10] sm:$0xff]
    %v384 = vld [vmem:[#allocation7 + $0x18] sm:$0xff]
    %v385 = vld [vmem:[#allocation7 + $0x20] sm:$0xff]
    %v386 = vld [vmem:[#allocation7 + $0x28] sm:$0xff]
    %v387 = vld [vmem:[#allocation7 + $0x30] sm:$0xff]
    %v388 = vld [vmem:[#allocation7 + $0x38] sm:$0xff]
    %v389 = vld [vmem:[#allocation7 + $0x40] sm:$0xff]
    %v390 = vld [vmem:[#allocation7 + $0x48] sm:$0xff]
    %v391 = vld [vmem:[#allocation7 + $0x50] sm:$0xff]
    %v392 = vld [vmem:[#allocation7 + $0x58] sm:$0xff]
    %v393 = vld [vmem:[#allocation7 + $0x60] sm:$0xff]
    %v394 = vld [vmem:[#allocation7 + $0x68] sm:$0xff]
    %v395 = vld [vmem:[#allocation7 + $0x70] sm:$0xff]
    %v396 = vld [vmem:[#allocation7 + $0x78] sm:$0xff]
    %v397 = vld [vmem:[#allocation7 + $0x80] sm:$0xff]
    %v398 = vld [vmem:[#allocation7 + $0x88] sm:$0xff]
    %v399 = vld [vmem:[#allocation7 + $0x90] sm:$0xff]
    %v400 = vld [vmem:[#allocation7 + $0x98] sm:$0xff]
    %v401 = vld [vmem:[#allocation7 + $0xa0] sm:$0xff]
    %v402 = vld [vmem:[#allocation7 + $0xa8] sm:$0xff]
    %v403 = vld [vmem:[#allocation7 + $0xb0] sm:$0xff]
    %v404 = vld [vmem:[#allocation7 + $0xb8] sm:$0xff]
    %v405 = vld [vmem:[#allocation7 + $0xc0] sm:$0xff]
    %v406 = vld [vmem:[#allocation7 + $0xc8] sm:$0xff]
    %v407 = vld [vmem:[#allocation7 + $0xd0] sm:$0xff]
    %v408 = vld [vmem:[#allocation7 + $0xd8] sm:$0xff]
    %v409 = vld [vmem:[#allocation7 + $0xe0] sm:$0xff]
    %v410 = vld [vmem:[#allocation7 + $0xe8] sm:$0xff]
    %v411 = vld [vmem:[#allocation7 + $0xf0] sm:$0xff]
    %v412 = vld [vmem:[#allocation7 + $0xf8] sm:$0xff]
    %v413 = vld [vmem:[%s6] sm:$0xf]
    %v446 = vunpack.c.l.b16 %v317
    %v447 = vunpack.c.h.b16 %v317
    %v448 = vunpack.c.l.b16 %v318
    %v449 = vunpack.c.h.b16 %v318
    %v450 = vunpack.c.l.b16 %v319
    %v451 = vunpack.c.h.b16 %v319
    %v452 = vunpack.c.l.b16 %v320
    %v453 = vunpack.c.h.b16 %v320
    %v454 = vunpack.c.l.b16 %v321
    %v455 = vunpack.c.h.b16 %v321
    %v456 = vunpack.c.l.b16 %v322
    %v457 = vunpack.c.h.b16 %v322
    %v458 = vunpack.c.l.b16 %v323
    %v459 = vunpack.c.h.b16 %v323
    %v460 = vunpack.c.l.b16 %v324
    %v461 = vunpack.c.h.b16 %v324
    %v462 = vunpack.c.l.b16 %v325
    %v463 = vunpack.c.h.b16 %v325
    %v464 = vunpack.c.l.b16 %v326
    %v465 = vunpack.c.h.b16 %v326
    %v466 = vunpack.c.l.b16 %v327
    %v467 = vunpack.c.h.b16 %v327
    %v468 = vunpack.c.l.b16 %v328
    %v469 = vunpack.c.h.b16 %v328
    %v470 = vunpack.c.l.b16 %v329
    %v471 = vunpack.c.h.b16 %v329
    %v472 = vunpack.c.l.b16 %v330
    %v473 = vunpack.c.h.b16 %v330
    %v474 = vunpack.c.l.b16 %v331
    %v475 = vunpack.c.h.b16 %v331
    %v476 = vunpack.c.l.b16 %v332
    %v477 = vunpack.c.h.b16 %v332
    %v478 = vunpack.c.l.b16 %v333
    %v479 = vunpack.c.h.b16 %v333
    %v480 = vunpack.c.l.b16 %v334
    %v481 = vunpack.c.h.b16 %v334
    %v482 = vunpack.c.l.b16 %v335
    %v483 = vunpack.c.h.b16 %v335
    %v484 = vunpack.c.l.b16 %v336
    %v485 = vunpack.c.h.b16 %v336
    %v486 = vunpack.c.l.b16 %v337
    %v487 = vunpack.c.h.b16 %v337
    %v488 = vunpack.c.l.b16 %v338
    %v489 = vunpack.c.h.b16 %v338
    %v490 = vunpack.c.l.b16 %v339
    %v491 = vunpack.c.h.b16 %v339
    %v492 = vunpack.c.l.b16 %v340
    %v493 = vunpack.c.h.b16 %v340
    %v494 = vunpack.c.l.b16 %v341
    %v495 = vunpack.c.h.b16 %v341
    %v496 = vunpack.c.l.b16 %v342
    %v497 = vunpack.c.h.b16 %v342
    %v498 = vunpack.c.l.b16 %v343
    %v499 = vunpack.c.h.b16 %v343
    %v500 = vunpack.c.l.b16 %v344
    %v501 = vunpack.c.h.b16 %v344
    %v502 = vunpack.c.l.b16 %v345
    %v503 = vunpack.c.h.b16 %v345
    %v504 = vunpack.c.l.b16 %v346
    %v505 = vunpack.c.h.b16 %v346
    %v506 = vunpack.c.l.b16 %v347
    %v507 = vunpack.c.h.b16 %v347
    %v508 = vunpack.c.l.b16 %v348
    %v509 = vunpack.c.h.b16 %v348
    %v510 = vpack.c.b16 %v450, %v446
    %v511 = vpack.c.b16 %v451, %v447
    %v512 = vpack.c.b16 %v452, %v448
    %v513 = vpack.c.b16 %v453, %v449
    %v514 = vpack.c.b16 %v458, %v454
    %v515 = vpack.c.b16 %v459, %v455
    %v516 = vpack.c.b16 %v460, %v456
    %v517 = vpack.c.b16 %v461, %v457
    %v518 = vpack.c.b16 %v466, %v462
    %v519 = vpack.c.b16 %v467, %v463
    %v520 = vpack.c.b16 %v468, %v464
    %v521 = vpack.c.b16 %v469, %v465
    %v522 = vpack.c.b16 %v474, %v470
    %v523 = vpack.c.b16 %v475, %v471
    %v524 = vpack.c.b16 %v476, %v472
    %v525 = vpack.c.b16 %v477, %v473
    %v526 = vpack.c.b16 %v482, %v478
    %v527 = vpack.c.b16 %v483, %v479
    %v528 = vpack.c.b16 %v484, %v480
    %v529 = vpack.c.b16 %v485, %v481
    %v530 = vpack.c.b16 %v490, %v486
    %v531 = vpack.c.b16 %v491, %v487
    %v532 = vpack.c.b16 %v492, %v488
    %v533 = vpack.c.b16 %v493, %v489
    %v534 = vpack.c.b16 %v498, %v494
    %v535 = vpack.c.b16 %v499, %v495
    %v536 = vpack.c.b16 %v500, %v496
    %v537 = vpack.c.b16 %v501, %v497
    %v538 = vpack.c.b16 %v506, %v502
    %v539 = vpack.c.b16 %v507, %v503
    %v540 = vpack.c.b16 %v508, %v504
    %v541 = vpack.c.b16 %v509, %v505
    %574 = vmatprep.subr.bf16.mxu0 %v539
    %575 = vmatpush1.bf16.msra.mxu0 %v538
    %576 = vmatprep.subr.bf16.mxu0 %v535
    %577 = vmatpush1.bf16.msra.mxu0 %v534
    %578 = vmatprep.subr.bf16.mxu0 %v531
    %579 = vmatpush1.bf16.msra.mxu0 %v530
    %580 = vmatprep.subr.bf16.mxu0 %v527
    %581 = vmatpush1.bf16.msra.mxu0 %v526
    %582 = vmatprep.subr.bf16.mxu0 %v523
    %583 = vmatpush1.bf16.msra.mxu0 %v522
    %584 = vmatprep.subr.bf16.mxu0 %v519
    %585 = vmatpush1.bf16.msra.mxu0 %v518
    %586 = vmatprep.subr.bf16.mxu0 %v515
    %587 = vmatpush1.bf16.msra.mxu0 %v514
    %588 = vmatprep.subr.bf16.mxu0 %v511
    %589 = vmatpush1.bf16.msra.mxu0 %v510
    %590 = vmatprep.subr.bf16.mxu0 0
    %591 = vmatpush2.bf16.msra.mxu0 0
    %592 = vmatprep.subr.bf16.mxu0 0
    %593 = vmatpush2.bf16.msra.mxu0 0
    %594 = vmatprep.subr.bf16.mxu0 0
    %595 = vmatpush2.bf16.msra.mxu0 0
    %596 = vmatprep.subr.bf16.mxu0 0
    %597 = vmatpush2.bf16.msra.mxu0 0
    %598 = vmatprep.subr.bf16.mxu0 0
    %599 = vmatpush2.bf16.msra.mxu0 0
    %600 = vmatprep.subr.bf16.mxu0 0
    %601 = vmatpush2.bf16.msra.mxu0 0
    %602 = vmatprep.subr.bf16.mxu0 0
    %603 = vmatpush2.bf16.msra.mxu0 0
    %604 = vmatprep.subr.bf16.mxu0 0
    %605 = vmatpush2.bf16.msra.mxu0 0
    %606 = vmatprep.mubr.bf16.mxu0 0
    %607 = vmatmul.mubr.bf16.gmra.mxu0 0
    %v608 = vpop.f32.mrf.mxu0
    %v609 = vadd.f32 0.0, %v608
    %v610 = vpop.f32.mrf.mxu0
    %v611 = vadd.f32 0.0, %v610
    %v612 = vpop.f32.mrf.mxu0
    %v613 = vpop.f32.mrf.mxu0
    %614 = vdwg.mxu0
    %615 = vmatprep.subr.bf16.mxu0 %v541
    %616 = vmatpush1.bf16.msra.mxu0 %v540
    %617 = vmatprep.subr.bf16.mxu0 %v537
    %618 = vmatpush1.bf16.msra.mxu0 %v536
    %619 = vmatprep.subr.bf16.mxu0 %v533
    %620 = vmatpush1.bf16.msra.mxu0 %v532
    %621 = vmatprep.subr.bf16.mxu0 %v529
    %622 = vmatpush1.bf16.msra.mxu0 %v528
    %623 = vmatprep.subr.bf16.mxu0 %v525
    %624 = vmatpush1.bf16.msra.mxu0 %v524
    %625 = vmatprep.subr.bf16.mxu0 %v521
    %626 = vmatpush1.bf16.msra.mxu0 %v520
    %627 = vmatprep.subr.bf16.mxu0 %v517
    %628 = vmatpush1.bf16.msra.mxu0 %v516
    %629 = vmatprep.subr.bf16.mxu0 %v513
    %630 = vmatpush1.bf16.msra.mxu0 %v512
    %631 = vmatprep.subr.bf16.mxu0 0
    %632 = vmatpush2.bf16.msra.mxu0 0
    %633 = vmatprep.subr.bf16.mxu0 0
    %634 = vmatpush2.bf16.msra.mxu0 0
    %635 = vmatprep.subr.bf16.mxu0 0
    %636 = vmatpush2.bf16.msra.mxu0 0
    %637 = vmatprep.subr.bf16.mxu0 0
    %638 = vmatpush2.bf16.msra.mxu0 0
    %639 = vmatprep.subr.bf16.mxu0 0
    %640 = vmatpush2.bf16.msra.mxu0 0
    %641 = vmatprep.subr.bf16.mxu0 0
    %642 = vmatpush2.bf16.msra.mxu0 0
    %643 = vmatprep.subr.bf16.mxu0 0
    %644 = vmatpush2.bf16.msra.mxu0 0
    %645 = vmatprep.subr.bf16.mxu0 0
    %646 = vmatpush2.bf16.msra.mxu0 0
    %647 = vmatprep.mubr.bf16.mxu0 0
    %648 = vmatmul.mubr.bf16.gmra.mxu0 0
    %v649 = vpop.f32.mrf.mxu0
    %v650 = vadd.f32 0.0, %v649
    %v651 = vpop.f32.mrf.mxu0
    %v652 = vadd.f32 0.0, %v651
    %v653 = vpop.f32.mrf.mxu0
    %v654 = vpop.f32.mrf.mxu0
    %655 = vdwg.mxu0
    %v656 = vadd.f32 %v266, %v609
    %v657 = vadd.f32 %v268, %v611
    %v658 = vadd.f32 %v309, %v650
    %v659 = vadd.f32 %v311, %v652
    %v660 = vmul.f32 %v656, 0.5
    %v661 = vtanh.pop %v660
    %v662 = vmul.f32 %v661, 0.5
    %v663 = vadd.f32 %v662, 0.5
    %v664 = vmul.f32 %v657, 0.5
    %v665 = vtanh.pop %v664
    %v666 = vmul.f32 %v665, 0.5
    %v667 = vadd.f32 %v666, 0.5
    %v668 = vtanh.pop %v658
    %v669 = vmul.f32 %v659, 0.5
    %v670 = vtanh.pop %v669
    %v671 = vmul.f32 %v670, 0.5
    %v672 = vadd.f32 %v671, 0.5
    %v673 = vmul.f32 %v667, 0.0
    %v674 = vmul.f32 %v663, %v668
    %v675 = vadd.f32 %v673, %v674
    %v676 = vtanh.pop %v675
    %v677 = vmul.f32 %v672, %v676
    %v678 = vpack.c.bf16 %v677, %v677
    %v680 = vlaneseq
    %v681 = vshrl.u32 %v680, 7
    %v682 = vsub.s32 0, %v681
    %v683 = vrot.slane %v413, %v682
    %v684 = vlaneseq
    %v685 = vshrl.u32 %v684, 7
    %v686 = vsub.s32 1, %v685
    %v687 = vrot.slane %v413, %v686
    %v688 = vlaneseq
    %v689 = vshrl.u32 %v688, 7
    %v690 = vsub.s32 2, %v689
    %v691 = vrot.slane %v413, %v690
    %v692 = vlaneseq
    %v693 = vshrl.u32 %v692, 7
    %v694 = vsub.s32 3, %v693
    %v695 = vrot.slane %v413, %v694
    %v732 = vunpack.c.l.b16 %v381
    %v733 = vunpack.c.h.b16 %v381
    %v734 = vunpack.c.l.b16 %v382
    %v735 = vunpack.c.h.b16 %v382
    %v736 = vunpack.c.l.b16 %v383
    %v737 = vunpack.c.h.b16 %v383
    %v738 = vunpack.c.l.b16 %v384
    %v739 = vunpack.c.h.b16 %v384
    %v740 = vunpack.c.l.b16 %v385
    %v741 = vunpack.c.h.b16 %v385
    %v742 = vunpack.c.l.b16 %v386
    %v743 = vunpack.c.h.b16 %v386
    %v744 = vunpack.c.l.b16 %v387
    %v745 = vunpack.c.h.b16 %v387
    %v746 = vunpack.c.l.b16 %v388
    %v747 = vunpack.c.h.b16 %v388
    %v748 = vunpack.c.l.b16 %v389
    %v749 = vunpack.c.h.b16 %v389
    %v750 = vunpack.c.l.b16 %v390
    %v751 = vunpack.c.h.b16 %v390
    %v752 = vunpack.c.l.b16 %v391
    %v753 = vunpack.c.h.b16 %v391
    %v754 = vunpack.c.l.b16 %v392
    %v755 = vunpack.c.h.b16 %v392
    %v756 = vunpack.c.l.b16 %v393
    %v757 = vunpack.c.h.b16 %v393
    %v758 = vunpack.c.l.b16 %v394
    %v759 = vunpack.c.h.b16 %v394
    %v760 = vunpack.c.l.b16 %v395
    %v761 = vunpack.c.h.b16 %v395
    %v762 = vunpack.c.l.b16 %v396
    %v763 = vunpack.c.h.b16 %v396
    %v764 = vunpack.c.l.b16 %v397
    %v765 = vunpack.c.h.b16 %v397
    %v766 = vunpack.c.l.b16 %v398
    %v767 = vunpack.c.h.b16 %v398
    %v768 = vunpack.c.l.b16 %v399
    %v769 = vunpack.c.h.b16 %v399
    %v770 = vunpack.c.l.b16 %v400
    %v771 = vunpack.c.h.b16 %v400
    %v772 = vunpack.c.l.b16 %v401
    %v773 = vunpack.c.h.b16 %v401
    %v774 = vunpack.c.l.b16 %v402
    %v775 = vunpack.c.h.b16 %v402
    %v776 = vunpack.c.l.b16 %v403
    %v777 = vunpack.c.h.b16 %v403
    %v778 = vunpack.c.l.b16 %v404
    %v779 = vunpack.c.h.b16 %v404
    %v780 = vunpack.c.l.b16 %v405
    %v781 = vunpack.c.h.b16 %v405
    %v782 = vunpack.c.l.b16 %v406
    %v783 = vunpack.c.h.b16 %v406
    %v784 = vunpack.c.l.b16 %v407
    %v785 = vunpack.c.h.b16 %v407
    %v786 = vunpack.c.l.b16 %v408
    %v787 = vunpack.c.h.b16 %v408
    %v788 = vunpack.c.l.b16 %v409
    %v789 = vunpack.c.h.b16 %v409
    %v790 = vunpack.c.l.b16 %v410
    %v791 = vunpack.c.h.b16 %v410
    %v792 = vunpack.c.l.b16 %v411
    %v793 = vunpack.c.h.b16 %v411
    %v794 = vunpack.c.l.b16 %v412
    %v795 = vunpack.c.h.b16 %v412
    %v796 = vpack.c.b16 %v736, %v732
    %v797 = vpack.c.b16 %v737, %v733
    %v798 = vpack.c.b16 %v738, %v734
    %v799 = vpack.c.b16 %v739, %v735
    %v800 = vpack.c.b16 %v744, %v740
    %v801 = vpack.c.b16 %v745, %v741
    %v802 = vpack.c.b16 %v746, %v742
    %v803 = vpack.c.b16 %v747, %v743
    %v804 = vpack.c.b16 %v752, %v748
    %v805 = vpack.c.b16 %v753, %v749
    %v806 = vpack.c.b16 %v754, %v750
    %v807 = vpack.c.b16 %v755, %v751
    %v808 = vpack.c.b16 %v760, %v756
    %v809 = vpack.c.b16 %v761, %v757
    %v810 = vpack.c.b16 %v762, %v758
    %v811 = vpack.c.b16 %v763, %v759
    %v812 = vpack.c.b16 %v768, %v764
    %v813 = vpack.c.b16 %v769, %v765
    %v814 = vpack.c.b16 %v770, %v766
    %v815 = vpack.c.b16 %v771, %v767
    %v816 = vpack.c.b16 %v776, %v772
    %v817 = vpack.c.b16 %v777, %v773
    %v818 = vpack.c.b16 %v778, %v774
    %v819 = vpack.c.b16 %v779, %v775
    %v820 = vpack.c.b16 %v784, %v780
    %v821 = vpack.c.b16 %v785, %v781
    %v822 = vpack.c.b16 %v786, %v782
    %v823 = vpack.c.b16 %v787, %v783
    %v824 = vpack.c.b16 %v792, %v788
    %v825 = vpack.c.b16 %v793, %v789
    %v826 = vpack.c.b16 %v794, %v790
    %v827 = vpack.c.b16 %v795, %v791
    %860 = vmatprep.subr.bf16.mxu0 %v825
    %861 = vmatpush1.bf16.msra.mxu0 %v824
    %862 = vmatprep.subr.bf16.mxu0 %v821
    %863 = vmatpush1.bf16.msra.mxu0 %v820
    %864 = vmatprep.subr.bf16.mxu0 %v817
    %865 = vmatpush1.bf16.msra.mxu0 %v816
    %866 = vmatprep.subr.bf16.mxu0 %v813
    %867 = vmatpush1.bf16.msra.mxu0 %v812
    %868 = vmatprep.subr.bf16.mxu0 %v809
    %869 = vmatpush1.bf16.msra.mxu0 %v808
    %870 = vmatprep.subr.bf16.mxu0 %v805
    %871 = vmatpush1.bf16.msra.mxu0 %v804
    %872 = vmatprep.subr.bf16.mxu0 %v801
    %873 = vmatpush1.bf16.msra.mxu0 %v800
    %874 = vmatprep.subr.bf16.mxu0 %v797
    %875 = vmatpush1.bf16.msra.mxu0 %v796
    %876 = vmatprep.subr.bf16.mxu0 0
    %877 = vmatpush2.bf16.msra.mxu0 0
    %878 = vmatprep.subr.bf16.mxu0 0
    %879 = vmatpush2.bf16.msra.mxu0 0
    %880 = vmatprep.subr.bf16.mxu0 0
    %881 = vmatpush2.bf16.msra.mxu0 0
    %882 = vmatprep.subr.bf16.mxu0 0
    %883 = vmatpush2.bf16.msra.mxu0 0
    %884 = vmatprep.subr.bf16.mxu0 0
    %885 = vmatpush2.bf16.msra.mxu0 0
    %886 = vmatprep.subr.bf16.mxu0 0
    %887 = vmatpush2.bf16.msra.mxu0 0
    %888 = vmatprep.subr.bf16.mxu0 0
    %889 = vmatpush2.bf16.msra.mxu0 0
    %890 = vmatprep.subr.bf16.mxu0 0
    %891 = vmatpush2.bf16.msra.mxu0 0
    %892 = vmatprep.mubr.bf16.mxu0 0
    %893 = vmatmul.mubr.bf16.gmra.mxu0 %v678
    %v894 = vpop.f32.mrf.mxu0
    %v895 = vadd.f32 %v683, %v894
    %v896 = vpop.f32.mrf.mxu0
    %v897 = vadd.f32 %v687, %v896
    %v898 = vpop.f32.mrf.mxu0
    %v899 = vpop.f32.mrf.mxu0
    %900 = vdwg.mxu0
    %901 = vmatprep.subr.bf16.mxu0 %v827
    %902 = vmatpush1.bf16.msra.mxu0 %v826
    %903 = vmatprep.subr.bf16.mxu0 %v823
    %904 = vmatpush1.bf16.msra.mxu0 %v822
    %905 = vmatprep.subr.bf16.mxu0 %v819
    %906 = vmatpush1.bf16.msra.mxu0 %v818
    %907 = vmatprep.subr.bf16.mxu0 %v815
    %908 = vmatpush1.bf16.msra.mxu0 %v814
    %909 = vmatprep.subr.bf16.mxu0 %v811
    %910 = vmatpush1.bf16.msra.mxu0 %v810
    %911 = vmatprep.subr.bf16.mxu0 %v807
    %912 = vmatpush1.bf16.msra.mxu0 %v806
    %913 = vmatprep.subr.bf16.mxu0 %v803
    %914 = vmatpush1.bf16.msra.mxu0 %v802
    %915 = vmatprep.subr.bf16.mxu0 %v799
    %916 = vmatpush1.bf16.msra.mxu0 %v798
    %917 = vmatprep.subr.bf16.mxu0 0
    %918 = vmatpush2.bf16.msra.mxu0 0
    %919 = vmatprep.subr.bf16.mxu0 0
    %920 = vmatpush2.bf16.msra.mxu0 0
    %921 = vmatprep.subr.bf16.mxu0 0
    %922 = vmatpush2.bf16.msra.mxu0 0
    %923 = vmatprep.subr.bf16.mxu0 0
    %924 = vmatpush2.bf16.msra.mxu0 0
    %925 = vmatprep.subr.bf16.mxu0 0
    %926 = vmatpush2.bf16.msra.mxu0 0
    %927 = vmatprep.subr.bf16.mxu0 0
    %928 = vmatpush2.bf16.msra.mxu0 0
    %929 = vmatprep.subr.bf16.mxu0 0
    %930 = vmatpush2.bf16.msra.mxu0 0
    %931 = vmatprep.subr.bf16.mxu0 0
    %932 = vmatpush2.bf16.msra.mxu0 0
    %933 = vmatprep.mubr.bf16.mxu0 0
    %934 = vmatmul.mubr.bf16.gmra.mxu0 %v678
    %v935 = vpop.f32.mrf.mxu0
    %v936 = vadd.f32 %v691, %v935
    %v937 = vpop.f32.mrf.mxu0
    %v938 = vadd.f32 %v695, %v937
    %v939 = vpop.f32.mrf.mxu0
    %v940 = vpop.f32.mrf.mxu0
    %941 = vdwg.mxu0
    %v974 = vunpack.c.l.b16 %v349
    %v975 = vunpack.c.h.b16 %v349
    %v976 = vunpack.c.l.b16 %v350
    %v977 = vunpack.c.h.b16 %v350
    %v978 = vunpack.c.l.b16 %v351
    %v979 = vunpack.c.h.b16 %v351
    %v980 = vunpack.c.l.b16 %v352
    %v981 = vunpack.c.h.b16 %v352
    %v982 = vunpack.c.l.b16 %v353
    %v983 = vunpack.c.h.b16 %v353
    %v984 = vunpack.c.l.b16 %v354
    %v985 = vunpack.c.h.b16 %v354
    %v986 = vunpack.c.l.b16 %v355
    %v987 = vunpack.c.h.b16 %v355
    %v988 = vunpack.c.l.b16 %v356
    %v989 = vunpack.c.h.b16 %v356
    %v990 = vunpack.c.l.b16 %v357
    %v991 = vunpack.c.h.b16 %v357
    %v992 = vunpack.c.l.b16 %v358
    %v993 = vunpack.c.h.b16 %v358
    %v994 = vunpack.c.l.b16 %v359
    %v995 = vunpack.c.h.b16 %v359
    %v996 = vunpack.c.l.b16 %v360
    %v997 = vunpack.c.h.b16 %v360
    %v998 = vunpack.c.l.b16 %v361
    %v999 = vunpack.c.h.b16 %v361
    %v1000 = vunpack.c.l.b16 %v362
    %v1001 = vunpack.c.h.b16 %v362
    %v1002 = vunpack.c.l.b16 %v363
    %v1003 = vunpack.c.h.b16 %v363
    %v1004 = vunpack.c.l.b16 %v364
    %v1005 = vunpack.c.h.b16 %v364
    %v1006 = vunpack.c.l.b16 %v365
    %v1007 = vunpack.c.h.b16 %v365
    %v1008 = vunpack.c.l.b16 %v366
    %v1009 = vunpack.c.h.b16 %v366
    %v1010 = vunpack.c.l.b16 %v367
    %v1011 = vunpack.c.h.b16 %v367
    %v1012 = vunpack.c.l.b16 %v368
    %v1013 = vunpack.c.h.b16 %v368
    %v1014 = vunpack.c.l.b16 %v369
    %v1015 = vunpack.c.h.b16 %v369
    %v1016 = vunpack.c.l.b16 %v370
    %v1017 = vunpack.c.h.b16 %v370
    %v1018 = vunpack.c.l.b16 %v371
    %v1019 = vunpack.c.h.b16 %v371
    %v1020 = vunpack.c.l.b16 %v372
    %v1021 = vunpack.c.h.b16 %v372
    %v1022 = vunpack.c.l.b16 %v373
    %v1023 = vunpack.c.h.b16 %v373
    %v1024 = vunpack.c.l.b16 %v374
    %v1025 = vunpack.c.h.b16 %v374
    %v1026 = vunpack.c.l.b16 %v375
    %v1027 = vunpack.c.h.b16 %v375
    %v1028 = vunpack.c.l.b16 %v376
    %v1029 = vunpack.c.h.b16 %v376
    %v1030 = vunpack.c.l.b16 %v377
    %v1031 = vunpack.c.h.b16 %v377
    %v1032 = vunpack.c.l.b16 %v378
    %v1033 = vunpack.c.h.b16 %v378
    %v1034 = vunpack.c.l.b16 %v379
    %v1035 = vunpack.c.h.b16 %v379
    %v1036 = vunpack.c.l.b16 %v380
    %v1037 = vunpack.c.h.b16 %v380
    %v1038 = vpack.c.b16 %v978, %v974
    %v1039 = vpack.c.b16 %v979, %v975
    %v1040 = vpack.c.b16 %v980, %v976
    %v1041 = vpack.c.b16 %v981, %v977
    %v1042 = vpack.c.b16 %v986, %v982
    %v1043 = vpack.c.b16 %v987, %v983
    %v1044 = vpack.c.b16 %v988, %v984
    %v1045 = vpack.c.b16 %v989, %v985
    %v1046 = vpack.c.b16 %v994, %v990
    %v1047 = vpack.c.b16 %v995, %v991
    %v1048 = vpack.c.b16 %v996, %v992
    %v1049 = vpack.c.b16 %v997, %v993
    %v1050 = vpack.c.b16 %v1002, %v998
    %v1051 = vpack.c.b16 %v1003, %v999
    %v1052 = vpack.c.b16 %v1004, %v1000
    %v1053 = vpack.c.b16 %v1005, %v1001
    %v1054 = vpack.c.b16 %v1010, %v1006
    %v1055 = vpack.c.b16 %v1011, %v1007
    %v1056 = vpack.c.b16 %v1012, %v1008
    %v1057 = vpack.c.b16 %v1013, %v1009
    %v1058 = vpack.c.b16 %v1018, %v1014
    %v1059 = vpack.c.b16 %v1019, %v1015
    %v1060 = vpack.c.b16 %v1020, %v1016
    %v1061 = vpack.c.b16 %v1021, %v1017
    %v1062 = vpack.c.b16 %v1026, %v1022
    %v1063 = vpack.c.b16 %v1027, %v1023
    %v1064 = vpack.c.b16 %v1028, %v1024
    %v1065 = vpack.c.b16 %v1029, %v1025
    %v1066 = vpack.c.b16 %v1034, %v1030
    %v1067 = vpack.c.b16 %v1035, %v1031
    %v1068 = vpack.c.b16 %v1036, %v1032
    %v1069 = vpack.c.b16 %v1037, %v1033
    %1102 = vmatprep.subr.bf16.mxu0 %v1067
    %1103 = vmatpush1.bf16.msra.mxu0 %v1066
    %1104 = vmatprep.subr.bf16.mxu0 %v1063
    %1105 = vmatpush1.bf16.msra.mxu0 %v1062
    %1106 = vmatprep.subr.bf16.mxu0 %v1059
    %1107 = vmatpush1.bf16.msra.mxu0 %v1058
    %1108 = vmatprep.subr.bf16.mxu0 %v1055
    %1109 = vmatpush1.bf16.msra.mxu0 %v1054
    %1110 = vmatprep.subr.bf16.mxu0 %v1051
    %1111 = vmatpush1.bf16.msra.mxu0 %v1050
    %1112 = vmatprep.subr.bf16.mxu0 %v1047
    %1113 = vmatpush1.bf16.msra.mxu0 %v1046
    %1114 = vmatprep.subr.bf16.mxu0 %v1043
    %1115 = vmatpush1.bf16.msra.mxu0 %v1042
    %1116 = vmatprep.subr.bf16.mxu0 %v1039
    %1117 = vmatpush1.bf16.msra.mxu0 %v1038
    %1118 = vmatprep.subr.bf16.mxu0 0
    %1119 = vmatpush2.bf16.msra.mxu0 0
    %1120 = vmatprep.subr.bf16.mxu0 0
    %1121 = vmatpush2.bf16.msra.mxu0 0
    %1122 = vmatprep.subr.bf16.mxu0 0
    %1123 = vmatpush2.bf16.msra.mxu0 0
    %1124 = vmatprep.subr.bf16.mxu0 0
    %1125 = vmatpush2.bf16.msra.mxu0 0
    %1126 = vmatprep.subr.bf16.mxu0 0
    %1127 = vmatpush2.bf16.msra.mxu0 0
    %1128 = vmatprep.subr.bf16.mxu0 0
    %1129 = vmatpush2.bf16.msra.mxu0 0
    %1130 = vmatprep.subr.bf16.mxu0 0
    %1131 = vmatpush2.bf16.msra.mxu0 0
    %1132 = vmatprep.subr.bf16.mxu0 0
    %1133 = vmatpush2.bf16.msra.mxu0 0
    %1134 = vmatprep.mubr.bf16.mxu0 0
    %1135 = vmatmul.mubr.bf16.gmra.mxu0 0
    %v1136 = vpop.f32.mrf.mxu0
    %v1137 = vadd.f32 0.0, %v1136
    %v1138 = vpop.f32.mrf.mxu0
    %v1139 = vadd.f32 0.0, %v1138
    %v1140 = vpop.f32.mrf.mxu0
    %v1141 = vpop.f32.mrf.mxu0
    %1142 = vdwg.mxu0
    %1143 = vmatprep.subr.bf16.mxu0 %v1069
    %1144 = vmatpush1.bf16.msra.mxu0 %v1068
    %1145 = vmatprep.subr.bf16.mxu0 %v1065
    %1146 = vmatpush1.bf16.msra.mxu0 %v1064
    %1147 = vmatprep.subr.bf16.mxu0 %v1061
    %1148 = vmatpush1.bf16.msra.mxu0 %v1060
    %1149 = vmatprep.subr.bf16.mxu0 %v1057
    %1150 = vmatpush1.bf16.msra.mxu0 %v1056
    %1151 = vmatprep.subr.bf16.mxu0 %v1053
    %1152 = vmatpush1.bf16.msra.mxu0 %v1052
    %1153 = vmatprep.subr.bf16.mxu0 %v1049
    %1154 = vmatpush1.bf16.msra.mxu0 %v1048
    %1155 = vmatprep.subr.bf16.mxu0 %v1045
    %1156 = vmatpush1.bf16.msra.mxu0 %v1044
    %1157 = vmatprep.subr.bf16.mxu0 %v1041
    %1158 = vmatpush1.bf16.msra.mxu0 %v1040
    %1159 = vmatprep.subr.bf16.mxu0 0
    %1160 = vmatpush2.bf16.msra.mxu0 0
    %1161 = vmatprep.subr.bf16.mxu0 0
    %1162 = vmatpush2.bf16.msra.mxu0 0
    %1163 = vmatprep.subr.bf16.mxu0 0
    %1164 = vmatpush2.bf16.msra.mxu0 0
    %1165 = vmatprep.subr.bf16.mxu0 0
    %1166 = vmatpush2.bf16.msra.mxu0 0
    %1167 = vmatprep.subr.bf16.mxu0 0
    %1168 = vmatpush2.bf16.msra.mxu0 0
    %1169 = vmatprep.subr.bf16.mxu0 0
    %1170 = vmatpush2.bf16.msra.mxu0 0
    %1171 = vmatprep.subr.bf16.mxu0 0
    %1172 = vmatpush2.bf16.msra.mxu0 0
    %1173 = vmatprep.subr.bf16.mxu0 0
    %1174 = vmatpush2.bf16.msra.mxu0 0
    %1175 = vmatprep.mubr.bf16.mxu0 0
    %1176 = vmatmul.mubr.bf16.gmra.mxu0 0
    %v1177 = vpop.f32.mrf.mxu0
    %v1178 = vadd.f32 0.0, %v1177
    %v1179 = vpop.f32.mrf.mxu0
    %v1180 = vadd.f32 0.0, %v1179
    %v1181 = vpop.f32.mrf.mxu0
    %v1182 = vpop.f32.mrf.mxu0
    %1183 = vdwg.mxu0
    %v1184 = vadd.f32 %v895, %v1137
    %v1185 = vadd.f32 %v897, %v1139
    %v1186 = vadd.f32 %v936, %v1178
    %v1187 = vadd.f32 %v938, %v1180
    %v1188 = vmul.f32 %v1184, 0.5
    %v1189 = vtanh.pop %v1188
    %v1190 = vmul.f32 %v1189, 0.5
    %v1191 = vadd.f32 %v1190, 0.5
    %v1192 = vmul.f32 %v1185, 0.5
    %v1193 = vtanh.pop %v1192
    %v1194 = vmul.f32 %v1193, 0.5
    %v1195 = vadd.f32 %v1194, 0.5
    %v1196 = vtanh.pop %v1186
    %v1197 = vmul.f32 %v1187, 0.5
    %v1198 = vtanh.pop %v1197
    %v1199 = vmul.f32 %v1198, 0.5
    %v1200 = vadd.f32 %v1199, 0.5
    %v1201 = vmul.f32 %v1195, 0.0
    %v1202 = vmul.f32 %v1191, %v1196
    %v1203 = vadd.f32 %v1201, %v1202
    %v1204 = vtanh.pop %v1203
    %v1205 = vmul.f32 %v1200, %v1204
    %v1206 = vadd.f32 %v1205, 0.0
    %1207 = vmatprep.subr.bf16.mxu0 %v539
    %1208 = vmatpush1.bf16.msra.mxu0 %v538
    %1209 = vmatprep.subr.bf16.mxu0 %v535
    %1210 = vmatpush1.bf16.msra.mxu0 %v534
    %1211 = vmatprep.subr.bf16.mxu0 %v531
    %1212 = vmatpush1.bf16.msra.mxu0 %v530
    %1213 = vmatprep.subr.bf16.mxu0 %v527
    %1214 = vmatpush1.bf16.msra.mxu0 %v526
    %1215 = vmatprep.subr.bf16.mxu0 %v523
    %1216 = vmatpush1.bf16.msra.mxu0 %v522
    %1217 = vmatprep.subr.bf16.mxu0 %v519
    %1218 = vmatpush1.bf16.msra.mxu0 %v518
    %1219 = vmatprep.subr.bf16.mxu0 %v515
    %1220 = vmatpush1.bf16.msra.mxu0 %v514
    %1221 = vmatprep.subr.bf16.mxu0 %v511
    %1222 = vmatpush1.bf16.msra.mxu0 %v510
    %1223 = vmatprep.subr.bf16.mxu0 0
    %1224 = vmatpush2.bf16.msra.mxu0 0
    %1225 = vmatprep.subr.bf16.mxu0 0
    %1226 = vmatpush2.bf16.msra.mxu0 0
    %1227 = vmatprep.subr.bf16.mxu0 0
    %1228 = vmatpush2.bf16.msra.mxu0 0
    %1229 = vmatprep.subr.bf16.mxu0 0
    %1230 = vmatpush2.bf16.msra.mxu0 0
    %1231 = vmatprep.subr.bf16.mxu0 0
    %1232 = vmatpush2.bf16.msra.mxu0 0
    %1233 = vmatprep.subr.bf16.mxu0 0
    %1234 = vmatpush2.bf16.msra.mxu0 0
    %1235 = vmatprep.subr.bf16.mxu0 0
    %1236 = vmatpush2.bf16.msra.mxu0 0
    %1237 = vmatprep.subr.bf16.mxu0 0
    %1238 = vmatpush2.bf16.msra.mxu0 0
    %1239 = vmatprep.mubr.bf16.mxu0 0
    %1240 = vmatmul.mubr.bf16.gmra.mxu0 %v678
    %v1241 = vpop.f32.mrf.mxu0
    %v1242 = vadd.f32 0.0, %v1241
    %v1243 = vpop.f32.mrf.mxu0
    %v1244 = vadd.f32 0.0, %v1243
    %v1245 = vpop.f32.mrf.mxu0
    %v1246 = vpop.f32.mrf.mxu0
    %1247 = vdwg.mxu0
    %1248 = vmatprep.subr.bf16.mxu0 %v541
    %1249 = vmatpush1.bf16.msra.mxu0 %v540
    %1250 = vmatprep.subr.bf16.mxu0 %v537
    %1251 = vmatpush1.bf16.msra.mxu0 %v536
    %1252 = vmatprep.subr.bf16.mxu0 %v533
    %1253 = vmatpush1.bf16.msra.mxu0 %v532
    %1254 = vmatprep.subr.bf16.mxu0 %v529
    %1255 = vmatpush1.bf16.msra.mxu0 %v528
    %1256 = vmatprep.subr.bf16.mxu0 %v525
    %1257 = vmatpush1.bf16.msra.mxu0 %v524
    %1258 = vmatprep.subr.bf16.mxu0 %v521
    %1259 = vmatpush1.bf16.msra.mxu0 %v520
    %1260 = vmatprep.subr.bf16.mxu0 %v517
    %1261 = vmatpush1.bf16.msra.mxu0 %v516
    %1262 = vmatprep.subr.bf16.mxu0 %v513
    %1263 = vmatpush1.bf16.msra.mxu0 %v512
    %1264 = vmatprep.subr.bf16.mxu0 0
    %1265 = vmatpush2.bf16.msra.mxu0 0
    %1266 = vmatprep.subr.bf16.mxu0 0
    %1267 = vmatpush2.bf16.msra.mxu0 0
    %1268 = vmatprep.subr.bf16.mxu0 0
    %1269 = vmatpush2.bf16.msra.mxu0 0
    %1270 = vmatprep.subr.bf16.mxu0 0
    %1271 = vmatpush2.bf16.msra.mxu0 0
    %1272 = vmatprep.subr.bf16.mxu0 0
    %1273 = vmatpush2.bf16.msra.mxu0 0
    %1274 = vmatprep.subr.bf16.mxu0 0
    %1275 = vmatpush2.bf16.msra.mxu0 0
    %1276 = vmatprep.subr.bf16.mxu0 0
    %1277 = vmatpush2.bf16.msra.mxu0 0
    %1278 = vmatprep.subr.bf16.mxu0 0
    %1279 = vmatpush2.bf16.msra.mxu0 0
    %1280 = vmatprep.mubr.bf16.mxu0 0
    %1281 = vmatmul.mubr.bf16.gmra.mxu0 %v678
    %v1282 = vpop.f32.mrf.mxu0
    %v1283 = vadd.f32 0.0, %v1282
    %v1284 = vpop.f32.mrf.mxu0
    %v1285 = vadd.f32 0.0, %v1284
    %v1286 = vpop.f32.mrf.mxu0
    %v1287 = vpop.f32.mrf.mxu0
    %1288 = vdwg.mxu0
    %v1293 = vrot.slane %v1242, 6
    %v1294 = vrot.slane %v1244, 6
    %v1295 = vrot.slane %v1283, 6
    %v1296 = vrot.slane %v1285, 6
    %v1301 = vadd.f32 %v266, %v1293
    %v1302 = vadd.f32 %v268, %v1294
    %v1303 = vadd.f32 %v309, %v1295
    %v1304 = vadd.f32 %v311, %v1296
    %v1305 = vmul.f32 %v1301, 0.5
    %v1306 = vtanh.pop %v1305
    %v1307 = vmul.f32 %v1306, 0.5
    %v1308 = vadd.f32 %v1307, 0.5
    %v1309 = vmul.f32 %v1302, 0.5
    %v1310 = vtanh.pop %v1309
    %v1311 = vmul.f32 %v1310, 0.5
    %v1312 = vadd.f32 %v1311, 0.5
    %v1313 = vtanh.pop %v1303
    %v1314 = vmul.f32 %v1304, 0.5
    %v1315 = vtanh.pop %v1314
    %v1316 = vmul.f32 %v1315, 0.5
    %v1317 = vadd.f32 %v1316, 0.5
    %v1319 = vrot.slane %v675, 6
    %v1321 = vmul.f32 %v1312, %v1319
    %v1322 = vmul.f32 %v1308, %v1313
    %v1323 = vadd.f32 %v1321, %v1322
    %v1324 = vtanh.pop %v1323
    %v1325 = vmul.f32 %v1317, %v1324
    %v1326 = vpack.c.bf16 %v1325, %v1325
    %v1328 = vrot.slane %v1326, 1
    %1330 = vmatprep.subr.bf16.mxu0 %v825
    %1331 = vmatpush1.bf16.msra.mxu0 %v824
    %1332 = vmatprep.subr.bf16.mxu0 %v821
    %1333 = vmatpush1.bf16.msra.mxu0 %v820
    %1334 = vmatprep.subr.bf16.mxu0 %v817
    %1335 = vmatpush1.bf16.msra.mxu0 %v816
    %1336 = vmatprep.subr.bf16.mxu0 %v813
    %1337 = vmatpush1.bf16.msra.mxu0 %v812
    %1338 = vmatprep.subr.bf16.mxu0 %v809
    %1339 = vmatpush1.bf16.msra.mxu0 %v808
    %1340 = vmatprep.subr.bf16.mxu0 %v805
    %1341 = vmatpush1.bf16.msra.mxu0 %v804
    %1342 = vmatprep.subr.bf16.mxu0 %v801
    %1343 = vmatpush1.bf16.msra.mxu0 %v800
    %1344 = vmatprep.subr.bf16.mxu0 %v797
    %1345 = vmatpush1.bf16.msra.mxu0 %v796
    %1346 = vmatprep.subr.bf16.mxu0 0
    %1347 = vmatpush2.bf16.msra.mxu0 0
    %1348 = vmatprep.subr.bf16.mxu0 0
    %1349 = vmatpush2.bf16.msra.mxu0 0
    %1350 = vmatprep.subr.bf16.mxu0 0
    %1351 = vmatpush2.bf16.msra.mxu0 0
    %1352 = vmatprep.subr.bf16.mxu0 0
    %1353 = vmatpush2.bf16.msra.mxu0 0
    %1354 = vmatprep.subr.bf16.mxu0 0
    %1355 = vmatpush2.bf16.msra.mxu0 0
    %1356 = vmatprep.subr.bf16.mxu0 0
    %1357 = vmatpush2.bf16.msra.mxu0 0
    %1358 = vmatprep.subr.bf16.mxu0 0
    %1359 = vmatpush2.bf16.msra.mxu0 0
    %1360 = vmatprep.subr.bf16.mxu0 0
    %1361 = vmatpush2.bf16.msra.mxu0 0
    %1362 = vmatprep.mubr.bf16.mxu0 0
    %1363 = vmatmul.mubr.bf16.gmra.mxu0 %v1328
    %v1364 = vpop.f32.mrf.mxu0
    %v1365 = vadd.f32 %v683, %v1364
    %v1366 = vpop.f32.mrf.mxu0
    %v1367 = vadd.f32 %v687, %v1366
    %v1368 = vpop.f32.mrf.mxu0
    %v1369 = vpop.f32.mrf.mxu0
    %1370 = vdwg.mxu0
    %1371 = vmatprep.subr.bf16.mxu0 %v827
    %1372 = vmatpush1.bf16.msra.mxu0 %v826
    %1373 = vmatprep.subr.bf16.mxu0 %v823
    %1374 = vmatpush1.bf16.msra.mxu0 %v822
    %1375 = vmatprep.subr.bf16.mxu0 %v819
    %1376 = vmatpush1.bf16.msra.mxu0 %v818
    %1377 = vmatprep.subr.bf16.mxu0 %v815
    %1378 = vmatpush1.bf16.msra.mxu0 %v814
    %1379 = vmatprep.subr.bf16.mxu0 %v811
    %1380 = vmatpush1.bf16.msra.mxu0 %v810
    %1381 = vmatprep.subr.bf16.mxu0 %v807
    %1382 = vmatpush1.bf16.msra.mxu0 %v806
    %1383 = vmatprep.subr.bf16.mxu0 %v803
    %1384 = vmatpush1.bf16.msra.mxu0 %v802
    %1385 = vmatprep.subr.bf16.mxu0 %v799
    %1386 = vmatpush1.bf16.msra.mxu0 %v798
    %1387 = vmatprep.subr.bf16.mxu0 0
    %1388 = vmatpush2.bf16.msra.mxu0 0
    %1389 = vmatprep.subr.bf16.mxu0 0
    %1390 = vmatpush2.bf16.msra.mxu0 0
    %1391 = vmatprep.subr.bf16.mxu0 0
    %1392 = vmatpush2.bf16.msra.mxu0 0
    %1393 = vmatprep.subr.bf16.mxu0 0
    %1394 = vmatpush2.bf16.msra.mxu0 0
    %1395 = vmatprep.subr.bf16.mxu0 0
    %1396 = vmatpush2.bf16.msra.mxu0 0
    %1397 = vmatprep.subr.bf16.mxu0 0
    %1398 = vmatpush2.bf16.msra.mxu0 0
    %1399 = vmatprep.subr.bf16.mxu0 0
    %1400 = vmatpush2.bf16.msra.mxu0 0
    %1401 = vmatprep.subr.bf16.mxu0 0
    %1402 = vmatpush2.bf16.msra.mxu0 0
    %1403 = vmatprep.mubr.bf16.mxu0 0
    %1404 = vmatmul.mubr.bf16.gmra.mxu0 %v1328
    %v1405 = vpop.f32.mrf.mxu0
    %v1406 = vadd.f32 %v691, %v1405
    %v1407 = vpop.f32.mrf.mxu0
    %v1408 = vadd.f32 %v695, %v1407
    %v1409 = vpop.f32.mrf.mxu0
    %v1410 = vpop.f32.mrf.mxu0
    %1411 = vdwg.mxu0
    %v1412 = vpack.c.bf16 %v1205, %v1205
    %1413 = vmatprep.subr.bf16.mxu0 %v1067
    %1414 = vmatpush1.bf16.msra.mxu0 %v1066
    %1415 = vmatprep.subr.bf16.mxu0 %v1063
    %1416 = vmatpush1.bf16.msra.mxu0 %v1062
    %1417 = vmatprep.subr.bf16.mxu0 %v1059
    %1418 = vmatpush1.bf16.msra.mxu0 %v1058
    %1419 = vmatprep.subr.bf16.mxu0 %v1055
    %1420 = vmatpush1.bf16.msra.mxu0 %v1054
    %1421 = vmatprep.subr.bf16.mxu0 %v1051
    %1422 = vmatpush1.bf16.msra.mxu0 %v1050
    %1423 = vmatprep.subr.bf16.mxu0 %v1047
    %1424 = vmatpush1.bf16.msra.mxu0 %v1046
    %1425 = vmatprep.subr.bf16.mxu0 %v1043
    %1426 = vmatpush1.bf16.msra.mxu0 %v1042
    %1427 = vmatprep.subr.bf16.mxu0 %v1039
    %1428 = vmatpush1.bf16.msra.mxu0 %v1038
    %1429 = vmatprep.subr.bf16.mxu0 0
    %1430 = vmatpush2.bf16.msra.mxu0 0
    %1431 = vmatprep.subr.bf16.mxu0 0
    %1432 = vmatpush2.bf16.msra.mxu0 0
    %1433 = vmatprep.subr.bf16.mxu0 0
    %1434 = vmatpush2.bf16.msra.mxu0 0
    %1435 = vmatprep.subr.bf16.mxu0 0
    %1436 = vmatpush2.bf16.msra.mxu0 0
    %1437 = vmatprep.subr.bf16.mxu0 0
    %1438 = vmatpush2.bf16.msra.mxu0 0
    %1439 = vmatprep.subr.bf16.mxu0 0
    %1440 = vmatpush2.bf16.msra.mxu0 0
    %1441 = vmatprep.subr.bf16.mxu0 0
    %1442 = vmatpush2.bf16.msra.mxu0 0
    %1443 = vmatprep.subr.bf16.mxu0 0
    %1444 = vmatpush2.bf16.msra.mxu0 0
    %1445 = vmatprep.mubr.bf16.mxu0 0
    %1446 = vmatmul.mubr.bf16.gmra.mxu0 %v1412
    %v1447 = vpop.f32.mrf.mxu0
    %v1448 = vadd.f32 0.0, %v1447
    %v1449 = vpop.f32.mrf.mxu0
    %v1450 = vadd.f32 0.0, %v1449
    %v1451 = vpop.f32.mrf.mxu0
    %v1452 = vpop.f32.mrf.mxu0
    %1453 = vdwg.mxu0
    %1454 = vmatprep.subr.bf16.mxu0 %v1069
    %1455 = vmatpush1.bf16.msra.mxu0 %v1068
    %1456 = vmatprep.subr.bf16.mxu0 %v1065
    %1457 = vmatpush1.bf16.msra.mxu0 %v1064
    %1458 = vmatprep.subr.bf16.mxu0 %v1061
    %1459 = vmatpush1.bf16.msra.mxu0 %v1060
    %1460 = vmatprep.subr.bf16.mxu0 %v1057
    %1461 = vmatpush1.bf16.msra.mxu0 %v1056
    %1462 = vmatprep.subr.bf16.mxu0 %v1053
    %1463 = vmatpush1.bf16.msra.mxu0 %v1052
    %1464 = vmatprep.subr.bf16.mxu0 %v1049
    %1465 = vmatpush1.bf16.msra.mxu0 %v1048
    %1466 = vmatprep.subr.bf16.mxu0 %v1045
    %1467 = vmatpush1.bf16.msra.mxu0 %v1044
    %1468 = vmatprep.subr.bf16.mxu0 %v1041
    %1469 = vmatpush1.bf16.msra.mxu0 %v1040
    %1470 = vmatprep.subr.bf16.mxu0 0
    %1471 = vmatpush2.bf16.msra.mxu0 0
    %1472 = vmatprep.subr.bf16.mxu0 0
    %1473 = vmatpush2.bf16.msra.mxu0 0
    %1474 = vmatprep.subr.bf16.mxu0 0
    %1475 = vmatpush2.bf16.msra.mxu0 0
    %1476 = vmatprep.subr.bf16.mxu0 0
    %1477 = vmatpush2.bf16.msra.mxu0 0
    %1478 = vmatprep.subr.bf16.mxu0 0
    %1479 = vmatpush2.bf16.msra.mxu0 0
    %1480 = vmatprep.subr.bf16.mxu0 0
    %1481 = vmatpush2.bf16.msra.mxu0 0
    %1482 = vmatprep.subr.bf16.mxu0 0
    %1483 = vmatpush2.bf16.msra.mxu0 0
    %1484 = vmatprep.subr.bf16.mxu0 0
    %1485 = vmatpush2.bf16.msra.mxu0 0
    %1486 = vmatprep.mubr.bf16.mxu0 0
    %1487 = vmatmul.mubr.bf16.gmra.mxu0 %v1412
    %v1488 = vpop.f32.mrf.mxu0
    %v1489 = vadd.f32 0.0, %v1488
    %v1490 = vpop.f32.mrf.mxu0
    %v1491 = vadd.f32 0.0, %v1490
    %v1492 = vpop.f32.mrf.mxu0
    %v1493 = vpop.f32.mrf.mxu0
    %1494 = vdwg.mxu0
    %v1495 = vadd.f32 %v1365, %v1448
    %v1496 = vadd.f32 %v1367, %v1450
    %v1497 = vadd.f32 %v1406, %v1489
    %v1498 = vadd.f32 %v1408, %v1491
    %v1499 = vmul.f32 %v1495, 0.5
    %v1500 = vtanh.pop %v1499
    %v1501 = vmul.f32 %v1500, 0.5
    %v1502 = vadd.f32 %v1501, 0.5
    %v1503 = vmul.f32 %v1496, 0.5
    %v1504 = vtanh.pop %v1503
    %v1505 = vmul.f32 %v1504, 0.5
    %v1506 = vadd.f32 %v1505, 0.5
    %v1507 = vtanh.pop %v1497
    %v1508 = vmul.f32 %v1498, 0.5
    %v1509 = vtanh.pop %v1508
    %v1510 = vmul.f32 %v1509, 0.5
    %v1511 = vadd.f32 %v1510, 0.5
    %v1512 = vmul.f32 %v1506, %v1203
    %v1513 = vmul.f32 %v1502, %v1507
    %v1514 = vadd.f32 %v1512, %v1513
    %v1515 = vtanh.pop %v1514
    %v1516 = vmul.f32 %v1511, %v1515
    %v1517 = vadd.f32 %v1206, %v1516
    %1518 = vmatprep.subr.bf16.mxu0 %v539
    %1519 = vmatpush1.bf16.msra.mxu0 %v538
    %1520 = vmatprep.subr.bf16.mxu0 %v535
    %1521 = vmatpush1.bf16.msra.mxu0 %v534
    %1522 = vmatprep.subr.bf16.mxu0 %v531
    %1523 = vmatpush1.bf16.msra.mxu0 %v530
    %1524 = vmatprep.subr.bf16.mxu0 %v527
    %1525 = vmatpush1.bf16.msra.mxu0 %v526
    %1526 = vmatprep.subr.bf16.mxu0 %v523
    %1527 = vmatpush1.bf16.msra.mxu0 %v522
    %1528 = vmatprep.subr.bf16.mxu0 %v519
    %1529 = vmatpush1.bf16.msra.mxu0 %v518
    %1530 = vmatprep.subr.bf16.mxu0 %v515
    %1531 = vmatpush1.bf16.msra.mxu0 %v514
    %1532 = vmatprep.subr.bf16.mxu0 %v511
    %1533 = vmatpush1.bf16.msra.mxu0 %v510
    %1534 = vmatprep.subr.bf16.mxu0 0
    %1535 = vmatpush2.bf16.msra.mxu0 0
    %1536 = vmatprep.subr.bf16.mxu0 0
    %1537 = vmatpush2.bf16.msra.mxu0 0
    %1538 = vmatprep.subr.bf16.mxu0 0
    %1539 = vmatpush2.bf16.msra.mxu0 0
    %1540 = vmatprep.subr.bf16.mxu0 0
    %1541 = vmatpush2.bf16.msra.mxu0 0
    %1542 = vmatprep.subr.bf16.mxu0 0
    %1543 = vmatpush2.bf16.msra.mxu0 0
    %1544 = vmatprep.subr.bf16.mxu0 0
    %1545 = vmatpush2.bf16.msra.mxu0 0
    %1546 = vmatprep.subr.bf16.mxu0 0
    %1547 = vmatpush2.bf16.msra.mxu0 0
    %1548 = vmatprep.subr.bf16.mxu0 0
    %1549 = vmatpush2.bf16.msra.mxu0 0
    %1550 = vmatprep.mubr.bf16.mxu0 0
    %1551 = vmatmul.mubr.bf16.gmra.mxu0 %v1328
    %v1552 = vpop.f32.mrf.mxu0
    %v1553 = vadd.f32 0.0, %v1552
    %v1554 = vpop.f32.mrf.mxu0
    %v1555 = vadd.f32 0.0, %v1554
    %v1556 = vpop.f32.mrf.mxu0
    %v1557 = vpop.f32.mrf.mxu0
    %1558 = vdwg.mxu0
    %1559 = vmatprep.subr.bf16.mxu0 %v541
    %1560 = vmatpush1.bf16.msra.mxu0 %v540
    %1561 = vmatprep.subr.bf16.mxu0 %v537
    %1562 = vmatpush1.bf16.msra.mxu0 %v536
    %1563 = vmatprep.subr.bf16.mxu0 %v533
    %1564 = vmatpush1.bf16.msra.mxu0 %v532
    %1565 = vmatprep.subr.bf16.mxu0 %v529
    %1566 = vmatpush1.bf16.msra.mxu0 %v528
    %1567 = vmatprep.subr.bf16.mxu0 %v525
    %1568 = vmatpush1.bf16.msra.mxu0 %v524
    %1569 = vmatprep.subr.bf16.mxu0 %v521
    %1570 = vmatpush1.bf16.msra.mxu0 %v520
    %1571 = vmatprep.subr.bf16.mxu0 %v517
    %1572 = vmatpush1.bf16.msra.mxu0 %v516
    %1573 = vmatprep.subr.bf16.mxu0 %v513
    %1574 = vmatpush1.bf16.msra.mxu0 %v512
    %1575 = vmatprep.subr.bf16.mxu0 0
    %1576 = vmatpush2.bf16.msra.mxu0 0
    %1577 = vmatprep.subr.bf16.mxu0 0
    %1578 = vmatpush2.bf16.msra.mxu0 0
    %1579 = vmatprep.subr.bf16.mxu0 0
    %1580 = vmatpush2.bf16.msra.mxu0 0
    %1581 = vmatprep.subr.bf16.mxu0 0
    %1582 = vmatpush2.bf16.msra.mxu0 0
    %1583 = vmatprep.subr.bf16.mxu0 0
    %1584 = vmatpush2.bf16.msra.mxu0 0
    %1585 = vmatprep.subr.bf16.mxu0 0
    %1586 = vmatpush2.bf16.msra.mxu0 0
    %1587 = vmatprep.subr.bf16.mxu0 0
    %1588 = vmatpush2.bf16.msra.mxu0 0
    %1589 = vmatprep.subr.bf16.mxu0 0
    %1590 = vmatpush2.bf16.msra.mxu0 0
    %1591 = vmatprep.mubr.bf16.mxu0 0
    %1592 = vmatmul.mubr.bf16.gmra.mxu0 %v1328
    %v1593 = vpop.f32.mrf.mxu0
    %v1594 = vadd.f32 0.0, %v1593
    %v1595 = vpop.f32.mrf.mxu0
    %v1596 = vadd.f32 0.0, %v1595
    %v1597 = vpop.f32.mrf.mxu0
    %v1598 = vpop.f32.mrf.mxu0
    %1599 = vdwg.mxu0
    %v1604 = vrot.slane %v1553, 4
    %v1605 = vrot.slane %v1555, 4
    %v1606 = vrot.slane %v1594, 4
    %v1607 = vrot.slane %v1596, 4
    %v1612 = vadd.f32 %v266, %v1604
    %v1613 = vadd.f32 %v268, %v1605
    %v1614 = vadd.f32 %v309, %v1606
    %v1615 = vadd.f32 %v311, %v1607
    %v1616 = vmul.f32 %v1612, 0.5
    %v1617 = vtanh.pop %v1616
    %v1618 = vmul.f32 %v1617, 0.5
    %v1619 = vadd.f32 %v1618, 0.5
    %v1620 = vmul.f32 %v1613, 0.5
    %v1621 = vtanh.pop %v1620
    %v1622 = vmul.f32 %v1621, 0.5
    %v1623 = vadd.f32 %v1622, 0.5
    %v1624 = vtanh.pop %v1614
    %v1625 = vmul.f32 %v1615, 0.5
    %v1626 = vtanh.pop %v1625
    %v1627 = vmul.f32 %v1626, 0.5
    %v1628 = vadd.f32 %v1627, 0.5
    %v1630 = vrot.slane %v1323, 6
    %v1632 = vmul.f32 %v1623, %v1630
    %v1633 = vmul.f32 %v1619, %v1624
    %v1634 = vadd.f32 %v1632, %v1633
    %v1635 = vtanh.pop %v1634
    %v1636 = vmul.f32 %v1628, %v1635
    %v1637 = vpack.c.bf16 %v1636, %v1636
    %v1639 = vrot.slane %v1637, 2
    %1641 = vmatprep.subr.bf16.mxu0 %v825
    %1642 = vmatpush1.bf16.msra.mxu0 %v824
    %1643 = vmatprep.subr.bf16.mxu0 %v821
    %1644 = vmatpush1.bf16.msra.mxu0 %v820
    %1645 = vmatprep.subr.bf16.mxu0 %v817
    %1646 = vmatpush1.bf16.msra.mxu0 %v816
    %1647 = vmatprep.subr.bf16.mxu0 %v813
    %1648 = vmatpush1.bf16.msra.mxu0 %v812
    %1649 = vmatprep.subr.bf16.mxu0 %v809
    %1650 = vmatpush1.bf16.msra.mxu0 %v808
    %1651 = vmatprep.subr.bf16.mxu0 %v805
    %1652 = vmatpush1.bf16.msra.mxu0 %v804
    %1653 = vmatprep.subr.bf16.mxu0 %v801
    %1654 = vmatpush1.bf16.msra.mxu0 %v800
    %1655 = vmatprep.subr.bf16.mxu0 %v797
    %1656 = vmatpush1.bf16.msra.mxu0 %v796
    %1657 = vmatprep.subr.bf16.mxu0 0
    %1658 = vmatpush2.bf16.msra.mxu0 0
    %1659 = vmatprep.subr.bf16.mxu0 0
    %1660 = vmatpush2.bf16.msra.mxu0 0
    %1661 = vmatprep.subr.bf16.mxu0 0
    %1662 = vmatpush2.bf16.msra.mxu0 0
    %1663 = vmatprep.subr.bf16.mxu0 0
    %1664 = vmatpush2.bf16.msra.mxu0 0
    %1665 = vmatprep.subr.bf16.mxu0 0
    %1666 = vmatpush2.bf16.msra.mxu0 0
    %1667 = vmatprep.subr.bf16.mxu0 0
    %1668 = vmatpush2.bf16.msra.mxu0 0
    %1669 = vmatprep.subr.bf16.mxu0 0
    %1670 = vmatpush2.bf16.msra.mxu0 0
    %1671 = vmatprep.subr.bf16.mxu0 0
    %1672 = vmatpush2.bf16.msra.mxu0 0
    %1673 = vmatprep.mubr.bf16.mxu0 0
    %1674 = vmatmul.mubr.bf16.gmra.mxu0 %v1639
    %v1675 = vpop.f32.mrf.mxu0
    %v1676 = vadd.f32 %v683, %v1675
    %v1677 = vpop.f32.mrf.mxu0
    %v1678 = vadd.f32 %v687, %v1677
    %v1679 = vpop.f32.mrf.mxu0
    %v1680 = vpop.f32.mrf.mxu0
    %1681 = vdwg.mxu0
    %1682 = vmatprep.subr.bf16.mxu0 %v827
    %1683 = vmatpush1.bf16.msra.mxu0 %v826
    %1684 = vmatprep.subr.bf16.mxu0 %v823
    %1685 = vmatpush1.bf16.msra.mxu0 %v822
    %1686 = vmatprep.subr.bf16.mxu0 %v819
    %1687 = vmatpush1.bf16.msra.mxu0 %v818
    %1688 = vmatprep.subr.bf16.mxu0 %v815
    %1689 = vmatpush1.bf16.msra.mxu0 %v814
    %1690 = vmatprep.subr.bf16.mxu0 %v811
    %1691 = vmatpush1.bf16.msra.mxu0 %v810
    %1692 = vmatprep.subr.bf16.mxu0 %v807
    %1693 = vmatpush1.bf16.msra.mxu0 %v806
    %1694 = vmatprep.subr.bf16.mxu0 %v803
    %1695 = vmatpush1.bf16.msra.mxu0 %v802
    %1696 = vmatprep.subr.bf16.mxu0 %v799
    %1697 = vmatpush1.bf16.msra.mxu0 %v798
    %1698 = vmatprep.subr.bf16.mxu0 0
    %1699 = vmatpush2.bf16.msra.mxu0 0
    %1700 = vmatprep.subr.bf16.mxu0 0
    %1701 = vmatpush2.bf16.msra.mxu0 0
    %1702 = vmatprep.subr.bf16.mxu0 0
    %1703 = vmatpush2.bf16.msra.mxu0 0
    %1704 = vmatprep.subr.bf16.mxu0 0
    %1705 = vmatpush2.bf16.msra.mxu0 0
    %1706 = vmatprep.subr.bf16.mxu0 0
    %1707 = vmatpush2.bf16.msra.mxu0 0
    %1708 = vmatprep.subr.bf16.mxu0 0
    %1709 = vmatpush2.bf16.msra.mxu0 0
    %1710 = vmatprep.subr.bf16.mxu0 0
    %1711 = vmatpush2.bf16.msra.mxu0 0
    %1712 = vmatprep.subr.bf16.mxu0 0
    %1713 = vmatpush2.bf16.msra.mxu0 0
    %1714 = vmatprep.mubr.bf16.mxu0 0
    %1715 = vmatmul.mubr.bf16.gmra.mxu0 %v1639
    %v1716 = vpop.f32.mrf.mxu0
    %v1717 = vadd.f32 %v691, %v1716
    %v1718 = vpop.f32.mrf.mxu0
    %v1719 = vadd.f32 %v695, %v1718
    %v1720 = vpop.f32.mrf.mxu0
    %v1721 = vpop.f32.mrf.mxu0
    %1722 = vdwg.mxu0
    %v1723 = vpack.c.bf16 %v1516, %v1516
    %1724 = vmatprep.subr.bf16.mxu0 %v1067
    %1725 = vmatpush1.bf16.msra.mxu0 %v1066
    %1726 = vmatprep.subr.bf16.mxu0 %v1063
    %1727 = vmatpush1.bf16.msra.mxu0 %v1062
    %1728 = vmatprep.subr.bf16.mxu0 %v1059
    %1729 = vmatpush1.bf16.msra.mxu0 %v1058
    %1730 = vmatprep.subr.bf16.mxu0 %v1055
    %1731 = vmatpush1.bf16.msra.mxu0 %v1054
    %1732 = vmatprep.subr.bf16.mxu0 %v1051
    %1733 = vmatpush1.bf16.msra.mxu0 %v1050
    %1734 = vmatprep.subr.bf16.mxu0 %v1047
    %1735 = vmatpush1.bf16.msra.mxu0 %v1046
    %1736 = vmatprep.subr.bf16.mxu0 %v1043
    %1737 = vmatpush1.bf16.msra.mxu0 %v1042
    %1738 = vmatprep.subr.bf16.mxu0 %v1039
    %1739 = vmatpush1.bf16.msra.mxu0 %v1038
    %1740 = vmatprep.subr.bf16.mxu0 0
    %1741 = vmatpush2.bf16.msra.mxu0 0
    %1742 = vmatprep.subr.bf16.mxu0 0
    %1743 = vmatpush2.bf16.msra.mxu0 0
    %1744 = vmatprep.subr.bf16.mxu0 0
    %1745 = vmatpush2.bf16.msra.mxu0 0
    %1746 = vmatprep.subr.bf16.mxu0 0
    %1747 = vmatpush2.bf16.msra.mxu0 0
    %1748 = vmatprep.subr.bf16.mxu0 0
    %1749 = vmatpush2.bf16.msra.mxu0 0
    %1750 = vmatprep.subr.bf16.mxu0 0
    %1751 = vmatpush2.bf16.msra.mxu0 0
    %1752 = vmatprep.subr.bf16.mxu0 0
    %1753 = vmatpush2.bf16.msra.mxu0 0
    %1754 = vmatprep.subr.bf16.mxu0 0
    %1755 = vmatpush2.bf16.msra.mxu0 0
    %1756 = vmatprep.mubr.bf16.mxu0 0
    %1757 = vmatmul.mubr.bf16.gmra.mxu0 %v1723
    %v1758 = vpop.f32.mrf.mxu0
    %v1759 = vadd.f32 0.0, %v1758
    %v1760 = vpop.f32.mrf.mxu0
    %v1761 = vadd.f32 0.0, %v1760
    %v1762 = vpop.f32.mrf.mxu0
    %v1763 = vpop.f32.mrf.mxu0
    %1764 = vdwg.mxu0
    %1765 = vmatprep.subr.bf16.mxu0 %v1069
    %1766 = vmatpush1.bf16.msra.mxu0 %v1068
    %1767 = vmatprep.subr.bf16.mxu0 %v1065
    %1768 = vmatpush1.bf16.msra.mxu0 %v1064
    %1769 = vmatprep.subr.bf16.mxu0 %v1061
    %1770 = vmatpush1.bf16.msra.mxu0 %v1060
    %1771 = vmatprep.subr.bf16.mxu0 %v1057
    %1772 = vmatpush1.bf16.msra.mxu0 %v1056
    %1773 = vmatprep.subr.bf16.mxu0 %v1053
    %1774 = vmatpush1.bf16.msra.mxu0 %v1052
    %1775 = vmatprep.subr.bf16.mxu0 %v1049
    %1776 = vmatpush1.bf16.msra.mxu0 %v1048
    %1777 = vmatprep.subr.bf16.mxu0 %v1045
    %1778 = vmatpush1.bf16.msra.mxu0 %v1044
    %1779 = vmatprep.subr.bf16.mxu0 %v1041
    %1780 = vmatpush1.bf16.msra.mxu0 %v1040
    %1781 = vmatprep.subr.bf16.mxu0 0
    %1782 = vmatpush2.bf16.msra.mxu0 0
    %1783 = vmatprep.subr.bf16.mxu0 0
    %1784 = vmatpush2.bf16.msra.mxu0 0
    %1785 = vmatprep.subr.bf16.mxu0 0
    %1786 = vmatpush2.bf16.msra.mxu0 0
    %1787 = vmatprep.subr.bf16.mxu0 0
    %1788 = vmatpush2.bf16.msra.mxu0 0
    %1789 = vmatprep.subr.bf16.mxu0 0
    %1790 = vmatpush2.bf16.msra.mxu0 0
    %1791 = vmatprep.subr.bf16.mxu0 0
    %1792 = vmatpush2.bf16.msra.mxu0 0
    %1793 = vmatprep.subr.bf16.mxu0 0
    %1794 = vmatpush2.bf16.msra.mxu0 0
    %1795 = vmatprep.subr.bf16.mxu0 0
    %1796 = vmatpush2.bf16.msra.mxu0 0
    %1797 = vmatprep.mubr.bf16.mxu0 0
    %1798 = vmatmul.mubr.bf16.gmra.mxu0 %v1723
    %v1799 = vpop.f32.mrf.mxu0
    %v1800 = vadd.f32 0.0, %v1799
    %v1801 = vpop.f32.mrf.mxu0
    %v1802 = vadd.f32 0.0, %v1801
    %v1803 = vpop.f32.mrf.mxu0
    %v1804 = vpop.f32.mrf.mxu0
    %1805 = vdwg.mxu0
    %v1806 = vadd.f32 %v1676, %v1759
    %v1807 = vadd.f32 %v1678, %v1761
    %v1808 = vadd.f32 %v1717, %v1800
    %v1809 = vadd.f32 %v1719, %v1802
    %v1810 = vmul.f32 %v1806, 0.5
    %v1811 = vtanh.pop %v1810
    %v1812 = vmul.f32 %v1811, 0.5
    %v1813 = vadd.f32 %v1812, 0.5
    %v1814 = vmul.f32 %v1807, 0.5
    %v1815 = vtanh.pop %v1814
    %v1816 = vmul.f32 %v1815, 0.5
    %v1817 = vadd.f32 %v1816, 0.5
    %v1818 = vtanh.pop %v1808
    %v1819 = vmul.f32 %v1809, 0.5
    %v1820 = vtanh.pop %v1819
    %v1821 = vmul.f32 %v1820, 0.5
    %v1822 = vadd.f32 %v1821, 0.5
    %v1823 = vmul.f32 %v1817, %v1514
    %v1824 = vmul.f32 %v1813, %v1818
    %v1825 = vadd.f32 %v1823, %v1824
    %v1826 = vtanh.pop %v1825
    %v1827 = vmul.f32 %v1822, %v1826
    %v1828 = vadd.f32 %v1517, %v1827
    %1829 = vmatprep.subr.bf16.mxu0 %v539
    %1830 = vmatpush1.bf16.msra.mxu0 %v538
    %1831 = vmatprep.subr.bf16.mxu0 %v535
    %1832 = vmatpush1.bf16.msra.mxu0 %v534
    %1833 = vmatprep.subr.bf16.mxu0 %v531
    %1834 = vmatpush1.bf16.msra.mxu0 %v530
    %1835 = vmatprep.subr.bf16.mxu0 %v527
    %1836 = vmatpush1.bf16.msra.mxu0 %v526
    %1837 = vmatprep.subr.bf16.mxu0 %v523
    %1838 = vmatpush1.bf16.msra.mxu0 %v522
    %1839 = vmatprep.subr.bf16.mxu0 %v519
    %1840 = vmatpush1.bf16.msra.mxu0 %v518
    %1841 = vmatprep.subr.bf16.mxu0 %v515
    %1842 = vmatpush1.bf16.msra.mxu0 %v514
    %1843 = vmatprep.subr.bf16.mxu0 %v511
    %1844 = vmatpush1.bf16.msra.mxu0 %v510
    %1845 = vmatprep.subr.bf16.mxu0 0
    %1846 = vmatpush2.bf16.msra.mxu0 0
    %1847 = vmatprep.subr.bf16.mxu0 0
    %1848 = vmatpush2.bf16.msra.mxu0 0
    %1849 = vmatprep.subr.bf16.mxu0 0
    %1850 = vmatpush2.bf16.msra.mxu0 0
    %1851 = vmatprep.subr.bf16.mxu0 0
    %1852 = vmatpush2.bf16.msra.mxu0 0
    %1853 = vmatprep.subr.bf16.mxu0 0
    %1854 = vmatpush2.bf16.msra.mxu0 0
    %1855 = vmatprep.subr.bf16.mxu0 0
    %1856 = vmatpush2.bf16.msra.mxu0 0
    %1857 = vmatprep.subr.bf16.mxu0 0
    %1858 = vmatpush2.bf16.msra.mxu0 0
    %1859 = vmatprep.subr.bf16.mxu0 0
    %1860 = vmatpush2.bf16.msra.mxu0 0
    %1861 = vmatprep.mubr.bf16.mxu0 0
    %1862 = vmatmul.mubr.bf16.gmra.mxu0 %v1639
    %v1863 = vpop.f32.mrf.mxu0
    %v1864 = vadd.f32 0.0, %v1863
    %v1865 = vpop.f32.mrf.mxu0
    %v1866 = vadd.f32 0.0, %v1865
    %v1867 = vpop.f32.mrf.mxu0
    %v1868 = vpop.f32.mrf.mxu0
    %1869 = vdwg.mxu0
    %1870 = vmatprep.subr.bf16.mxu0 %v541
    %1871 = vmatpush1.bf16.msra.mxu0 %v540
    %1872 = vmatprep.subr.bf16.mxu0 %v537
    %1873 = vmatpush1.bf16.msra.mxu0 %v536
    %1874 = vmatprep.subr.bf16.mxu0 %v533
    %1875 = vmatpush1.bf16.msra.mxu0 %v532
    %1876 = vmatprep.subr.bf16.mxu0 %v529
    %1877 = vmatpush1.bf16.msra.mxu0 %v528
    %1878 = vmatprep.subr.bf16.mxu0 %v525
    %1879 = vmatpush1.bf16.msra.mxu0 %v524
    %1880 = vmatprep.subr.bf16.mxu0 %v521
    %1881 = vmatpush1.bf16.msra.mxu0 %v520
    %1882 = vmatprep.subr.bf16.mxu0 %v517
    %1883 = vmatpush1.bf16.msra.mxu0 %v516
    %1884 = vmatprep.subr.bf16.mxu0 %v513
    %1885 = vmatpush1.bf16.msra.mxu0 %v512
    %1886 = vmatprep.subr.bf16.mxu0 0
    %1887 = vmatpush2.bf16.msra.mxu0 0
    %1888 = vmatprep.subr.bf16.mxu0 0
    %1889 = vmatpush2.bf16.msra.mxu0 0
    %1890 = vmatprep.subr.bf16.mxu0 0
    %1891 = vmatpush2.bf16.msra.mxu0 0
    %1892 = vmatprep.subr.bf16.mxu0 0
    %1893 = vmatpush2.bf16.msra.mxu0 0
    %1894 = vmatprep.subr.bf16.mxu0 0
    %1895 = vmatpush2.bf16.msra.mxu0 0
    %1896 = vmatprep.subr.bf16.mxu0 0
    %1897 = vmatpush2.bf16.msra.mxu0 0
    %1898 = vmatprep.subr.bf16.mxu0 0
    %1899 = vmatpush2.bf16.msra.mxu0 0
    %1900 = vmatprep.subr.bf16.mxu0 0
    %1901 = vmatpush2.bf16.msra.mxu0 0
    %1902 = vmatprep.mubr.bf16.mxu0 0
    %1903 = vmatmul.mubr.bf16.gmra.mxu0 %v1639
    %v1904 = vpop.f32.mrf.mxu0
    %v1905 = vadd.f32 0.0, %v1904
    %v1906 = vpop.f32.mrf.mxu0
    %v1907 = vadd.f32 0.0, %v1906
    %v1908 = vpop.f32.mrf.mxu0
    %v1909 = vpop.f32.mrf.mxu0
    %1910 = vdwg.mxu0
    %v1915 = vrot.slane %v1864, 2
    %v1916 = vrot.slane %v1866, 2
    %v1917 = vrot.slane %v1905, 2
    %v1918 = vrot.slane %v1907, 2
    %v1923 = vadd.f32 %v266, %v1915
    %v1924 = vadd.f32 %v268, %v1916
    %v1925 = vadd.f32 %v309, %v1917
    %v1926 = vadd.f32 %v311, %v1918
    %v1927 = vmul.f32 %v1923, 0.5
    %v1928 = vtanh.pop %v1927
    %v1929 = vmul.f32 %v1928, 0.5
    %v1930 = vadd.f32 %v1929, 0.5
    %v1931 = vmul.f32 %v1924, 0.5
    %v1932 = vtanh.pop %v1931
    %v1933 = vmul.f32 %v1932, 0.5
    %v1934 = vadd.f32 %v1933, 0.5
    %v1935 = vtanh.pop %v1925
    %v1936 = vmul.f32 %v1926, 0.5
    %v1937 = vtanh.pop %v1936
    %v1938 = vmul.f32 %v1937, 0.5
    %v1939 = vadd.f32 %v1938, 0.5
    %v1941 = vrot.slane %v1634, 6
    %v1943 = vmul.f32 %v1934, %v1941
    %v1944 = vmul.f32 %v1930, %v1935
    %v1945 = vadd.f32 %v1943, %v1944
    %v1946 = vtanh.pop %v1945
    %v1947 = vmul.f32 %v1939, %v1946
    %v1948 = vpack.c.bf16 %v1947, %v1947
    %v1950 = vrot.slane %v1948, 3
    %1952 = vmatprep.subr.bf16.mxu0 %v825
    %1953 = vmatpush1.bf16.msra.mxu0 %v824
    %1954 = vmatprep.subr.bf16.mxu0 %v821
    %1955 = vmatpush1.bf16.msra.mxu0 %v820
    %1956 = vmatprep.subr.bf16.mxu0 %v817
    %1957 = vmatpush1.bf16.msra.mxu0 %v816
    %1958 = vmatprep.subr.bf16.mxu0 %v813
    %1959 = vmatpush1.bf16.msra.mxu0 %v812
    %1960 = vmatprep.subr.bf16.mxu0 %v809
    %1961 = vmatpush1.bf16.msra.mxu0 %v808
    %1962 = vmatprep.subr.bf16.mxu0 %v805
    %1963 = vmatpush1.bf16.msra.mxu0 %v804
    %1964 = vmatprep.subr.bf16.mxu0 %v801
    %1965 = vmatpush1.bf16.msra.mxu0 %v800
    %1966 = vmatprep.subr.bf16.mxu0 %v797
    %1967 = vmatpush1.bf16.msra.mxu0 %v796
    %1968 = vmatprep.subr.bf16.mxu0 0
    %1969 = vmatpush2.bf16.msra.mxu0 0
    %1970 = vmatprep.subr.bf16.mxu0 0
    %1971 = vmatpush2.bf16.msra.mxu0 0
    %1972 = vmatprep.subr.bf16.mxu0 0
    %1973 = vmatpush2.bf16.msra.mxu0 0
    %1974 = vmatprep.subr.bf16.mxu0 0
    %1975 = vmatpush2.bf16.msra.mxu0 0
    %1976 = vmatprep.subr.bf16.mxu0 0
    %1977 = vmatpush2.bf16.msra.mxu0 0
    %1978 = vmatprep.subr.bf16.mxu0 0
    %1979 = vmatpush2.bf16.msra.mxu0 0
    %1980 = vmatprep.subr.bf16.mxu0 0
    %1981 = vmatpush2.bf16.msra.mxu0 0
    %1982 = vmatprep.subr.bf16.mxu0 0
    %1983 = vmatpush2.bf16.msra.mxu0 0
    %1984 = vmatprep.mubr.bf16.mxu0 0
    %1985 = vmatmul.mubr.bf16.gmra.mxu0 %v1950
    %v1986 = vpop.f32.mrf.mxu0
    %v1987 = vadd.f32 %v683, %v1986
    %v1988 = vpop.f32.mrf.mxu0
    %v1989 = vadd.f32 %v687, %v1988
    %v1990 = vpop.f32.mrf.mxu0
    %v1991 = vpop.f32.mrf.mxu0
    %1992 = vdwg.mxu0
    %1993 = vmatprep.subr.bf16.mxu0 %v827
    %1994 = vmatpush1.bf16.msra.mxu0 %v826
    %1995 = vmatprep.subr.bf16.mxu0 %v823
    %1996 = vmatpush1.bf16.msra.mxu0 %v822
    %1997 = vmatprep.subr.bf16.mxu0 %v819
    %1998 = vmatpush1.bf16.msra.mxu0 %v818
    %1999 = vmatprep.subr.bf16.mxu0 %v815
    %2000 = vmatpush1.bf16.msra.mxu0 %v814
    %2001 = vmatprep.subr.bf16.mxu0 %v811
    %2002 = vmatpush1.bf16.msra.mxu0 %v810
    %2003 = vmatprep.subr.bf16.mxu0 %v807
    %2004 = vmatpush1.bf16.msra.mxu0 %v806
    %2005 = vmatprep.subr.bf16.mxu0 %v803
    %2006 = vmatpush1.bf16.msra.mxu0 %v802
    %2007 = vmatprep.subr.bf16.mxu0 %v799
    %2008 = vmatpush1.bf16.msra.mxu0 %v798
    %2009 = vmatprep.subr.bf16.mxu0 0
    %2010 = vmatpush2.bf16.msra.mxu0 0
    %2011 = vmatprep.subr.bf16.mxu0 0
    %2012 = vmatpush2.bf16.msra.mxu0 0
    %2013 = vmatprep.subr.bf16.mxu0 0
    %2014 = vmatpush2.bf16.msra.mxu0 0
    %2015 = vmatprep.subr.bf16.mxu0 0
    %2016 = vmatpush2.bf16.msra.mxu0 0
    %2017 = vmatprep.subr.bf16.mxu0 0
    %2018 = vmatpush2.bf16.msra.mxu0 0
    %2019 = vmatprep.subr.bf16.mxu0 0
    %2020 = vmatpush2.bf16.msra.mxu0 0
    %2021 = vmatprep.subr.bf16.mxu0 0
    %2022 = vmatpush2.bf16.msra.mxu0 0
    %2023 = vmatprep.subr.bf16.mxu0 0
    %2024 = vmatpush2.bf16.msra.mxu0 0
    %2025 = vmatprep.mubr.bf16.mxu0 0
    %2026 = vmatmul.mubr.bf16.gmra.mxu0 %v1950
    %v2027 = vpop.f32.mrf.mxu0
    %v2028 = vadd.f32 %v691, %v2027
    %v2029 = vpop.f32.mrf.mxu0
    %v2030 = vadd.f32 %v695, %v2029
    %v2031 = vpop.f32.mrf.mxu0
    %v2032 = vpop.f32.mrf.mxu0
    %2033 = vdwg.mxu0
    %v2034 = vpack.c.bf16 %v1827, %v1827
    %2035 = vmatprep.subr.bf16.mxu0 %v1067
    %2036 = vmatpush1.bf16.msra.mxu0 %v1066
    %2037 = vmatprep.subr.bf16.mxu0 %v1063
    %2038 = vmatpush1.bf16.msra.mxu0 %v1062
    %2039 = vmatprep.subr.bf16.mxu0 %v1059
    %2040 = vmatpush1.bf16.msra.mxu0 %v1058
    %2041 = vmatprep.subr.bf16.mxu0 %v1055
    %2042 = vmatpush1.bf16.msra.mxu0 %v1054
    %2043 = vmatprep.subr.bf16.mxu0 %v1051
    %2044 = vmatpush1.bf16.msra.mxu0 %v1050
    %2045 = vmatprep.subr.bf16.mxu0 %v1047
    %2046 = vmatpush1.bf16.msra.mxu0 %v1046
    %2047 = vmatprep.subr.bf16.mxu0 %v1043
    %2048 = vmatpush1.bf16.msra.mxu0 %v1042
    %2049 = vmatprep.subr.bf16.mxu0 %v1039
    %2050 = vmatpush1.bf16.msra.mxu0 %v1038
    %2051 = vmatprep.subr.bf16.mxu0 0
    %2052 = vmatpush2.bf16.msra.mxu0 0
    %2053 = vmatprep.subr.bf16.mxu0 0
    %2054 = vmatpush2.bf16.msra.mxu0 0
    %2055 = vmatprep.subr.bf16.mxu0 0
    %2056 = vmatpush2.bf16.msra.mxu0 0
    %2057 = vmatprep.subr.bf16.mxu0 0
    %2058 = vmatpush2.bf16.msra.mxu0 0
    %2059 = vmatprep.subr.bf16.mxu0 0
    %2060 = vmatpush2.bf16.msra.mxu0 0
    %2061 = vmatprep.subr.bf16.mxu0 0
    %2062 = vmatpush2.bf16.msra.mxu0 0
    %2063 = vmatprep.subr.bf16.mxu0 0
    %2064 = vmatpush2.bf16.msra.mxu0 0
    %2065 = vmatprep.subr.bf16.mxu0 0
    %2066 = vmatpush2.bf16.msra.mxu0 0
    %2067 = vmatprep.mubr.bf16.mxu0 0
    %2068 = vmatmul.mubr.bf16.gmra.mxu0 %v2034
    %v2069 = vpop.f32.mrf.mxu0
    %v2070 = vadd.f32 0.0, %v2069
    %v2071 = vpop.f32.mrf.mxu0
    %v2072 = vadd.f32 0.0, %v2071
    %v2073 = vpop.f32.mrf.mxu0
    %v2074 = vpop.f32.mrf.mxu0
    %2075 = vdwg.mxu0
    %2076 = vmatprep.subr.bf16.mxu0 %v1069
    %2077 = vmatpush1.bf16.msra.mxu0 %v1068
    %2078 = vmatprep.subr.bf16.mxu0 %v1065
    %2079 = vmatpush1.bf16.msra.mxu0 %v1064
    %2080 = vmatprep.subr.bf16.mxu0 %v1061
    %2081 = vmatpush1.bf16.msra.mxu0 %v1060
    %2082 = vmatprep.subr.bf16.mxu0 %v1057
    %2083 = vmatpush1.bf16.msra.mxu0 %v1056
    %2084 = vmatprep.subr.bf16.mxu0 %v1053
    %2085 = vmatpush1.bf16.msra.mxu0 %v1052
    %2086 = vmatprep.subr.bf16.mxu0 %v1049
    %2087 = vmatpush1.bf16.msra.mxu0 %v1048
    %2088 = vmatprep.subr.bf16.mxu0 %v1045
    %2089 = vmatpush1.bf16.msra.mxu0 %v1044
    %2090 = vmatprep.subr.bf16.mxu0 %v1041
    %2091 = vmatpush1.bf16.msra.mxu0 %v1040
    %2092 = vmatprep.subr.bf16.mxu0 0
    %2093 = vmatpush2.bf16.msra.mxu0 0
    %2094 = vmatprep.subr.bf16.mxu0 0
    %2095 = vmatpush2.bf16.msra.mxu0 0
    %2096 = vmatprep.subr.bf16.mxu0 0
    %2097 = vmatpush2.bf16.msra.mxu0 0
    %2098 = vmatprep.subr.bf16.mxu0 0
    %2099 = vmatpush2.bf16.msra.mxu0 0
    %2100 = vmatprep.subr.bf16.mxu0 0
    %2101 = vmatpush2.bf16.msra.mxu0 0
    %2102 = vmatprep.subr.bf16.mxu0 0
    %2103 = vmatpush2.bf16.msra.mxu0 0
    %2104 = vmatprep.subr.bf16.mxu0 0
    %2105 = vmatpush2.bf16.msra.mxu0 0
    %2106 = vmatprep.subr.bf16.mxu0 0
    %2107 = vmatpush2.bf16.msra.mxu0 0
    %2108 = vmatprep.mubr.bf16.mxu0 0
    %2109 = vmatmul.mubr.bf16.gmra.mxu0 %v2034
    %v2110 = vpop.f32.mrf.mxu0
    %v2111 = vadd.f32 0.0, %v2110
    %v2112 = vpop.f32.mrf.mxu0
    %v2113 = vadd.f32 0.0, %v2112
    %v2114 = vpop.f32.mrf.mxu0
    %v2115 = vpop.f32.mrf.mxu0
    %2116 = vdwg.mxu0
    %v2117 = vadd.f32 %v1987, %v2070
    %v2118 = vadd.f32 %v1989, %v2072
    %v2119 = vadd.f32 %v2028, %v2111
    %v2120 = vadd.f32 %v2030, %v2113
    %v2121 = vmul.f32 %v2117, 0.5
    %v2122 = vtanh.pop %v2121
    %v2123 = vmul.f32 %v2122, 0.5
    %v2124 = vadd.f32 %v2123, 0.5
    %v2125 = vmul.f32 %v2118, 0.5
    %v2126 = vtanh.pop %v2125
    %v2127 = vmul.f32 %v2126, 0.5
    %v2128 = vadd.f32 %v2127, 0.5
    %v2129 = vtanh.pop %v2119
    %v2130 = vmul.f32 %v2120, 0.5
    %v2131 = vtanh.pop %v2130
    %v2132 = vmul.f32 %v2131, 0.5
    %v2133 = vadd.f32 %v2132, 0.5
    %v2134 = vmul.f32 %v2128, %v1825
    %v2135 = vmul.f32 %v2124, %v2129
    %v2136 = vadd.f32 %v2134, %v2135
    %v2137 = vtanh.pop %v2136
    %v2138 = vmul.f32 %v2133, %v2137
    %v2139 = vadd.f32 %v1828, %v2138
    %2140 = vmatprep.subr.bf16.mxu0 %v539
    %2141 = vmatpush1.bf16.msra.mxu0 %v538
    %2142 = vmatprep.subr.bf16.mxu0 %v535
    %2143 = vmatpush1.bf16.msra.mxu0 %v534
    %2144 = vmatprep.subr.bf16.mxu0 %v531
    %2145 = vmatpush1.bf16.msra.mxu0 %v530
    %2146 = vmatprep.subr.bf16.mxu0 %v527
    %2147 = vmatpush1.bf16.msra.mxu0 %v526
    %2148 = vmatprep.subr.bf16.mxu0 %v523
    %2149 = vmatpush1.bf16.msra.mxu0 %v522
    %2150 = vmatprep.subr.bf16.mxu0 %v519
    %2151 = vmatpush1.bf16.msra.mxu0 %v518
    %2152 = vmatprep.subr.bf16.mxu0 %v515
    %2153 = vmatpush1.bf16.msra.mxu0 %v514
    %2154 = vmatprep.subr.bf16.mxu0 %v511
    %2155 = vmatpush1.bf16.msra.mxu0 %v510
    %2156 = vmatprep.subr.bf16.mxu0 0
    %2157 = vmatpush2.bf16.msra.mxu0 0
    %2158 = vmatprep.subr.bf16.mxu0 0
    %2159 = vmatpush2.bf16.msra.mxu0 0
    %2160 = vmatprep.subr.bf16.mxu0 0
    %2161 = vmatpush2.bf16.msra.mxu0 0
    %2162 = vmatprep.subr.bf16.mxu0 0
    %2163 = vmatpush2.bf16.msra.mxu0 0
    %2164 = vmatprep.subr.bf16.mxu0 0
    %2165 = vmatpush2.bf16.msra.mxu0 0
    %2166 = vmatprep.subr.bf16.mxu0 0
    %2167 = vmatpush2.bf16.msra.mxu0 0
    %2168 = vmatprep.subr.bf16.mxu0 0
    %2169 = vmatpush2.bf16.msra.mxu0 0
    %2170 = vmatprep.subr.bf16.mxu0 0
    %2171 = vmatpush2.bf16.msra.mxu0 0
    %2172 = vmatprep.mubr.bf16.mxu0 0
    %2173 = vmatmul.mubr.bf16.gmra.mxu0 %v1950
    %v2174 = vpop.f32.mrf.mxu0
    %v2175 = vadd.f32 0.0, %v2174
    %v2176 = vpop.f32.mrf.mxu0
    %v2177 = vadd.f32 0.0, %v2176
    %v2178 = vpop.f32.mrf.mxu0
    %v2179 = vpop.f32.mrf.mxu0
    %2180 = vdwg.mxu0
    %2181 = vmatprep.subr.bf16.mxu0 %v541
    %2182 = vmatpush1.bf16.msra.mxu0 %v540
    %2183 = vmatprep.subr.bf16.mxu0 %v537
    %2184 = vmatpush1.bf16.msra.mxu0 %v536
    %2185 = vmatprep.subr.bf16.mxu0 %v533
    %2186 = vmatpush1.bf16.msra.mxu0 %v532
    %2187 = vmatprep.subr.bf16.mxu0 %v529
    %2188 = vmatpush1.bf16.msra.mxu0 %v528
    %2189 = vmatprep.subr.bf16.mxu0 %v525
    %2190 = vmatpush1.bf16.msra.mxu0 %v524
    %2191 = vmatprep.subr.bf16.mxu0 %v521
    %2192 = vmatpush1.bf16.msra.mxu0 %v520
    %2193 = vmatprep.subr.bf16.mxu0 %v517
    %2194 = vmatpush1.bf16.msra.mxu0 %v516
    %2195 = vmatprep.subr.bf16.mxu0 %v513
    %2196 = vmatpush1.bf16.msra.mxu0 %v512
    %2197 = vmatprep.subr.bf16.mxu0 0
    %2198 = vmatpush2.bf16.msra.mxu0 0
    %2199 = vmatprep.subr.bf16.mxu0 0
    %2200 = vmatpush2.bf16.msra.mxu0 0
    %2201 = vmatprep.subr.bf16.mxu0 0
    %2202 = vmatpush2.bf16.msra.mxu0 0
    %2203 = vmatprep.subr.bf16.mxu0 0
    %2204 = vmatpush2.bf16.msra.mxu0 0
    %2205 = vmatprep.subr.bf16.mxu0 0
    %2206 = vmatpush2.bf16.msra.mxu0 0
    %2207 = vmatprep.subr.bf16.mxu0 0
    %2208 = vmatpush2.bf16.msra.mxu0 0
    %2209 = vmatprep.subr.bf16.mxu0 0
    %2210 = vmatpush2.bf16.msra.mxu0 0
    %2211 = vmatprep.subr.bf16.mxu0 0
    %2212 = vmatpush2.bf16.msra.mxu0 0
    %2213 = vmatprep.mubr.bf16.mxu0 0
    %2214 = vmatmul.mubr.bf16.gmra.mxu0 %v1950
    %v2215 = vpop.f32.mrf.mxu0
    %v2216 = vadd.f32 0.0, %v2215
    %v2217 = vpop.f32.mrf.mxu0
    %v2218 = vadd.f32 0.0, %v2217
    %v2219 = vpop.f32.mrf.mxu0
    %v2220 = vpop.f32.mrf.mxu0
    %2221 = vdwg.mxu0
    %v2222 = vadd.f32 %v270, %v2175
    %v2223 = vadd.f32 %v272, %v2177
    %v2224 = vadd.f32 %v313, %v2216
    %v2225 = vadd.f32 %v315, %v2218
    %v2226 = vmul.f32 %v2222, 0.5
    %v2227 = vtanh.pop %v2226
    %v2228 = vmul.f32 %v2227, 0.5
    %v2229 = vadd.f32 %v2228, 0.5
    %v2230 = vmul.f32 %v2223, 0.5
    %v2231 = vtanh.pop %v2230
    %v2232 = vmul.f32 %v2231, 0.5
    %v2233 = vadd.f32 %v2232, 0.5
    %v2234 = vtanh.pop %v2224
    %v2235 = vmul.f32 %v2225, 0.5
    %v2236 = vtanh.pop %v2235
    %v2237 = vmul.f32 %v2236, 0.5
    %v2238 = vadd.f32 %v2237, 0.5
    %v2240 = vrot.slane %v1945, 6
    %v2242 = vmul.f32 %v2233, %v2240
    %v2243 = vmul.f32 %v2229, %v2234
    %v2244 = vadd.f32 %v2242, %v2243
    %v2245 = vtanh.pop %v2244
    %v2246 = vmul.f32 %v2238, %v2245
    %v2247 = vpack.c.bf16 %v2246, %v2246
    %2248 = vmatprep.subr.bf16.mxu0 %v825
    %2249 = vmatpush1.bf16.msra.mxu0 %v824
    %2250 = vmatprep.subr.bf16.mxu0 %v821
    %2251 = vmatpush1.bf16.msra.mxu0 %v820
    %2252 = vmatprep.subr.bf16.mxu0 %v817
    %2253 = vmatpush1.bf16.msra.mxu0 %v816
    %2254 = vmatprep.subr.bf16.mxu0 %v813
    %2255 = vmatpush1.bf16.msra.mxu0 %v812
    %2256 = vmatprep.subr.bf16.mxu0 %v809
    %2257 = vmatpush1.bf16.msra.mxu0 %v808
    %2258 = vmatprep.subr.bf16.mxu0 %v805
    %2259 = vmatpush1.bf16.msra.mxu0 %v804
    %2260 = vmatprep.subr.bf16.mxu0 %v801
    %2261 = vmatpush1.bf16.msra.mxu0 %v800
    %2262 = vmatprep.subr.bf16.mxu0 %v797
    %2263 = vmatpush1.bf16.msra.mxu0 %v796
    %2264 = vmatprep.subr.bf16.mxu0 0
    %2265 = vmatpush2.bf16.msra.mxu0 0
    %2266 = vmatprep.subr.bf16.mxu0 0
    %2267 = vmatpush2.bf16.msra.mxu0 0
    %2268 = vmatprep.subr.bf16.mxu0 0
    %2269 = vmatpush2.bf16.msra.mxu0 0
    %2270 = vmatprep.subr.bf16.mxu0 0
    %2271 = vmatpush2.bf16.msra.mxu0 0
    %2272 = vmatprep.subr.bf16.mxu0 0
    %2273 = vmatpush2.bf16.msra.mxu0 0
    %2274 = vmatprep.subr.bf16.mxu0 0
    %2275 = vmatpush2.bf16.msra.mxu0 0
    %2276 = vmatprep.subr.bf16.mxu0 0
    %2277 = vmatpush2.bf16.msra.mxu0 0
    %2278 = vmatprep.subr.bf16.mxu0 0
    %2279 = vmatpush2.bf16.msra.mxu0 0
    %2280 = vmatprep.mubr.bf16.mxu0 0
    %2281 = vmatmul.mubr.bf16.gmra.mxu0 %v2247
    %v2282 = vpop.f32.mrf.mxu0
    %v2283 = vadd.f32 %v683, %v2282
    %v2284 = vpop.f32.mrf.mxu0
    %v2285 = vadd.f32 %v687, %v2284
    %v2286 = vpop.f32.mrf.mxu0
    %v2287 = vpop.f32.mrf.mxu0
    %2288 = vdwg.mxu0
    %2289 = vmatprep.subr.bf16.mxu0 %v827
    %2290 = vmatpush1.bf16.msra.mxu0 %v826
    %2291 = vmatprep.subr.bf16.mxu0 %v823
    %2292 = vmatpush1.bf16.msra.mxu0 %v822
    %2293 = vmatprep.subr.bf16.mxu0 %v819
    %2294 = vmatpush1.bf16.msra.mxu0 %v818
    %2295 = vmatprep.subr.bf16.mxu0 %v815
    %2296 = vmatpush1.bf16.msra.mxu0 %v814
    %2297 = vmatprep.subr.bf16.mxu0 %v811
    %2298 = vmatpush1.bf16.msra.mxu0 %v810
    %2299 = vmatprep.subr.bf16.mxu0 %v807
    %2300 = vmatpush1.bf16.msra.mxu0 %v806
    %2301 = vmatprep.subr.bf16.mxu0 %v803
    %2302 = vmatpush1.bf16.msra.mxu0 %v802
    %2303 = vmatprep.subr.bf16.mxu0 %v799
    %2304 = vmatpush1.bf16.msra.mxu0 %v798
    %2305 = vmatprep.subr.bf16.mxu0 0
    %2306 = vmatpush2.bf16.msra.mxu0 0
    %2307 = vmatprep.subr.bf16.mxu0 0
    %2308 = vmatpush2.bf16.msra.mxu0 0
    %2309 = vmatprep.subr.bf16.mxu0 0
    %2310 = vmatpush2.bf16.msra.mxu0 0
    %2311 = vmatprep.subr.bf16.mxu0 0
    %2312 = vmatpush2.bf16.msra.mxu0 0
    %2313 = vmatprep.subr.bf16.mxu0 0
    %2314 = vmatpush2.bf16.msra.mxu0 0
    %2315 = vmatprep.subr.bf16.mxu0 0
    %2316 = vmatpush2.bf16.msra.mxu0 0
    %2317 = vmatprep.subr.bf16.mxu0 0
    %2318 = vmatpush2.bf16.msra.mxu0 0
    %2319 = vmatprep.subr.bf16.mxu0 0
    %2320 = vmatpush2.bf16.msra.mxu0 0
    %2321 = vmatprep.mubr.bf16.mxu0 0
    %2322 = vmatmul.mubr.bf16.gmra.mxu0 %v2247
    %v2323 = vpop.f32.mrf.mxu0
    %v2324 = vadd.f32 %v691, %v2323
    %v2325 = vpop.f32.mrf.mxu0
    %v2326 = vadd.f32 %v695, %v2325
    %v2327 = vpop.f32.mrf.mxu0
    %v2328 = vpop.f32.mrf.mxu0
    %2329 = vdwg.mxu0
    %v2330 = vpack.c.bf16 %v2138, %v2138
    %2331 = vmatprep.subr.bf16.mxu0 %v1067
    %2332 = vmatpush1.bf16.msra.mxu0 %v1066
    %2333 = vmatprep.subr.bf16.mxu0 %v1063
    %2334 = vmatpush1.bf16.msra.mxu0 %v1062
    %2335 = vmatprep.subr.bf16.mxu0 %v1059
    %2336 = vmatpush1.bf16.msra.mxu0 %v1058
    %2337 = vmatprep.subr.bf16.mxu0 %v1055
    %2338 = vmatpush1.bf16.msra.mxu0 %v1054
    %2339 = vmatprep.subr.bf16.mxu0 %v1051
    %2340 = vmatpush1.bf16.msra.mxu0 %v1050
    %2341 = vmatprep.subr.bf16.mxu0 %v1047
    %2342 = vmatpush1.bf16.msra.mxu0 %v1046
    %2343 = vmatprep.subr.bf16.mxu0 %v1043
    %2344 = vmatpush1.bf16.msra.mxu0 %v1042
    %2345 = vmatprep.subr.bf16.mxu0 %v1039
    %2346 = vmatpush1.bf16.msra.mxu0 %v1038
    %2347 = vmatprep.subr.bf16.mxu0 0
    %2348 = vmatpush2.bf16.msra.mxu0 0
    %2349 = vmatprep.subr.bf16.mxu0 0
    %2350 = vmatpush2.bf16.msra.mxu0 0
    %2351 = vmatprep.subr.bf16.mxu0 0
    %2352 = vmatpush2.bf16.msra.mxu0 0
    %2353 = vmatprep.subr.bf16.mxu0 0
    %2354 = vmatpush2.bf16.msra.mxu0 0
    %2355 = vmatprep.subr.bf16.mxu0 0
    %2356 = vmatpush2.bf16.msra.mxu0 0
    %2357 = vmatprep.subr.bf16.mxu0 0
    %2358 = vmatpush2.bf16.msra.mxu0 0
    %2359 = vmatprep.subr.bf16.mxu0 0
    %2360 = vmatpush2.bf16.msra.mxu0 0
    %2361 = vmatprep.subr.bf16.mxu0 0
    %2362 = vmatpush2.bf16.msra.mxu0 0
    %2363 = vmatprep.mubr.bf16.mxu0 0
    %2364 = vmatmul.mubr.bf16.gmra.mxu0 %v2330
    %v2365 = vpop.f32.mrf.mxu0
    %v2366 = vadd.f32 0.0, %v2365
    %v2367 = vpop.f32.mrf.mxu0
    %v2368 = vadd.f32 0.0, %v2367
    %v2369 = vpop.f32.mrf.mxu0
    %v2370 = vpop.f32.mrf.mxu0
    %2371 = vdwg.mxu0
    %2372 = vmatprep.subr.bf16.mxu0 %v1069
    %2373 = vmatpush1.bf16.msra.mxu0 %v1068
    %2374 = vmatprep.subr.bf16.mxu0 %v1065
    %2375 = vmatpush1.bf16.msra.mxu0 %v1064
    %2376 = vmatprep.subr.bf16.mxu0 %v1061
    %2377 = vmatpush1.bf16.msra.mxu0 %v1060
    %2378 = vmatprep.subr.bf16.mxu0 %v1057
    %2379 = vmatpush1.bf16.msra.mxu0 %v1056
    %2380 = vmatprep.subr.bf16.mxu0 %v1053
    %2381 = vmatpush1.bf16.msra.mxu0 %v1052
    %2382 = vmatprep.subr.bf16.mxu0 %v1049
    %2383 = vmatpush1.bf16.msra.mxu0 %v1048
    %2384 = vmatprep.subr.bf16.mxu0 %v1045
    %2385 = vmatpush1.bf16.msra.mxu0 %v1044
    %2386 = vmatprep.subr.bf16.mxu0 %v1041
    %2387 = vmatpush1.bf16.msra.mxu0 %v1040
    %2388 = vmatprep.subr.bf16.mxu0 0
    %2389 = vmatpush2.bf16.msra.mxu0 0
    %2390 = vmatprep.subr.bf16.mxu0 0
    %2391 = vmatpush2.bf16.msra.mxu0 0
    %2392 = vmatprep.subr.bf16.mxu0 0
    %2393 = vmatpush2.bf16.msra.mxu0 0
    %2394 = vmatprep.subr.bf16.mxu0 0
    %2395 = vmatpush2.bf16.msra.mxu0 0
    %2396 = vmatprep.subr.bf16.mxu0 0
    %2397 = vmatpush2.bf16.msra.mxu0 0
    %2398 = vmatprep.subr.bf16.mxu0 0
    %2399 = vmatpush2.bf16.msra.mxu0 0
    %2400 = vmatprep.subr.bf16.mxu0 0
    %2401 = vmatpush2.bf16.msra.mxu0 0
    %2402 = vmatprep.subr.bf16.mxu0 0
    %2403 = vmatpush2.bf16.msra.mxu0 0
    %2404 = vmatprep.mubr.bf16.mxu0 0
    %2405 = vmatmul.mubr.bf16.gmra.mxu0 %v2330
    %v2406 = vpop.f32.mrf.mxu0
    %v2407 = vadd.f32 0.0, %v2406
    %v2408 = vpop.f32.mrf.mxu0
    %v2409 = vadd.f32 0.0, %v2408
    %v2410 = vpop.f32.mrf.mxu0
    %v2411 = vpop.f32.mrf.mxu0
    %2412 = vdwg.mxu0
    %v2413 = vadd.f32 %v2283, %v2366
    %v2414 = vadd.f32 %v2285, %v2368
    %v2415 = vadd.f32 %v2324, %v2407
    %v2416 = vadd.f32 %v2326, %v2409
    %v2417 = vmul.f32 %v2413, 0.5
    %v2418 = vtanh.pop %v2417
    %v2419 = vmul.f32 %v2418, 0.5
    %v2420 = vadd.f32 %v2419, 0.5
    %v2421 = vmul.f32 %v2414, 0.5
    %v2422 = vtanh.pop %v2421
    %v2423 = vmul.f32 %v2422, 0.5
    %v2424 = vadd.f32 %v2423, 0.5
    %v2425 = vtanh.pop %v2415
    %v2426 = vmul.f32 %v2416, 0.5
    %v2427 = vtanh.pop %v2426
    %v2428 = vmul.f32 %v2427, 0.5
    %v2429 = vadd.f32 %v2428, 0.5
    %v2430 = vmul.f32 %v2424, %v2136
    %v2431 = vmul.f32 %v2420, %v2425
    %v2432 = vadd.f32 %v2430, %v2431
    %v2433 = vtanh.pop %v2432
    %v2434 = vmul.f32 %v2429, %v2433
    %v2435 = vadd.f32 %v2139, %v2434
    %2436 = vmatprep.subr.bf16.mxu0 %v539
    %2437 = vmatpush1.bf16.msra.mxu0 %v538
    %2438 = vmatprep.subr.bf16.mxu0 %v535
    %2439 = vmatpush1.bf16.msra.mxu0 %v534
    %2440 = vmatprep.subr.bf16.mxu0 %v531
    %2441 = vmatpush1.bf16.msra.mxu0 %v530
    %2442 = vmatprep.subr.bf16.mxu0 %v527
    %2443 = vmatpush1.bf16.msra.mxu0 %v526
    %2444 = vmatprep.subr.bf16.mxu0 %v523
    %2445 = vmatpush1.bf16.msra.mxu0 %v522
    %2446 = vmatprep.subr.bf16.mxu0 %v519
    %2447 = vmatpush1.bf16.msra.mxu0 %v518
    %2448 = vmatprep.subr.bf16.mxu0 %v515
    %2449 = vmatpush1.bf16.msra.mxu0 %v514
    %2450 = vmatprep.subr.bf16.mxu0 %v511
    %2451 = vmatpush1.bf16.msra.mxu0 %v510
    %2452 = vmatprep.subr.bf16.mxu0 0
    %2453 = vmatpush2.bf16.msra.mxu0 0
    %2454 = vmatprep.subr.bf16.mxu0 0
    %2455 = vmatpush2.bf16.msra.mxu0 0
    %2456 = vmatprep.subr.bf16.mxu0 0
    %2457 = vmatpush2.bf16.msra.mxu0 0
    %2458 = vmatprep.subr.bf16.mxu0 0
    %2459 = vmatpush2.bf16.msra.mxu0 0
    %2460 = vmatprep.subr.bf16.mxu0 0
    %2461 = vmatpush2.bf16.msra.mxu0 0
    %2462 = vmatprep.subr.bf16.mxu0 0
    %2463 = vmatpush2.bf16.msra.mxu0 0
    %2464 = vmatprep.subr.bf16.mxu0 0
    %2465 = vmatpush2.bf16.msra.mxu0 0
    %2466 = vmatprep.subr.bf16.mxu0 0
    %2467 = vmatpush2.bf16.msra.mxu0 0
    %2468 = vmatprep.mubr.bf16.mxu0 0
    %2469 = vmatmul.mubr.bf16.gmra.mxu0 %v2247
    %v2470 = vpop.f32.mrf.mxu0
    %v2471 = vadd.f32 0.0, %v2470
    %v2472 = vpop.f32.mrf.mxu0
    %v2473 = vadd.f32 0.0, %v2472
    %v2474 = vpop.f32.mrf.mxu0
    %v2475 = vpop.f32.mrf.mxu0
    %2476 = vdwg.mxu0
    %2477 = vmatprep.subr.bf16.mxu0 %v541
    %2478 = vmatpush1.bf16.msra.mxu0 %v540
    %2479 = vmatprep.subr.bf16.mxu0 %v537
    %2480 = vmatpush1.bf16.msra.mxu0 %v536
    %2481 = vmatprep.subr.bf16.mxu0 %v533
    %2482 = vmatpush1.bf16.msra.mxu0 %v532
    %2483 = vmatprep.subr.bf16.mxu0 %v529
    %2484 = vmatpush1.bf16.msra.mxu0 %v528
    %2485 = vmatprep.subr.bf16.mxu0 %v525
    %2486 = vmatpush1.bf16.msra.mxu0 %v524
    %2487 = vmatprep.subr.bf16.mxu0 %v521
    %2488 = vmatpush1.bf16.msra.mxu0 %v520
    %2489 = vmatprep.subr.bf16.mxu0 %v517
    %2490 = vmatpush1.bf16.msra.mxu0 %v516
    %2491 = vmatprep.subr.bf16.mxu0 %v513
    %2492 = vmatpush1.bf16.msra.mxu0 %v512
    %2493 = vmatprep.subr.bf16.mxu0 0
    %2494 = vmatpush2.bf16.msra.mxu0 0
    %2495 = vmatprep.subr.bf16.mxu0 0
    %2496 = vmatpush2.bf16.msra.mxu0 0
    %2497 = vmatprep.subr.bf16.mxu0 0
    %2498 = vmatpush2.bf16.msra.mxu0 0
    %2499 = vmatprep.subr.bf16.mxu0 0
    %2500 = vmatpush2.bf16.msra.mxu0 0
    %2501 = vmatprep.subr.bf16.mxu0 0
    %2502 = vmatpush2.bf16.msra.mxu0 0
    %2503 = vmatprep.subr.bf16.mxu0 0
    %2504 = vmatpush2.bf16.msra.mxu0 0
    %2505 = vmatprep.subr.bf16.mxu0 0
    %2506 = vmatpush2.bf16.msra.mxu0 0
    %2507 = vmatprep.subr.bf16.mxu0 0
    %2508 = vmatpush2.bf16.msra.mxu0 0
    %2509 = vmatprep.mubr.bf16.mxu0 0
    %2510 = vmatmul.mubr.bf16.gmra.mxu0 %v2247
    %v2511 = vpop.f32.mrf.mxu0
    %v2512 = vadd.f32 0.0, %v2511
    %v2513 = vpop.f32.mrf.mxu0
    %v2514 = vadd.f32 0.0, %v2513
    %v2515 = vpop.f32.mrf.mxu0
    %v2516 = vpop.f32.mrf.mxu0
    %2517 = vdwg.mxu0
    %v2522 = vrot.slane %v2471, 6
    %v2523 = vrot.slane %v2473, 6
    %v2524 = vrot.slane %v2512, 6
    %v2525 = vrot.slane %v2514, 6
    %v2530 = vadd.f32 %v270, %v2522
    %v2531 = vadd.f32 %v272, %v2523
    %v2532 = vadd.f32 %v313, %v2524
    %v2533 = vadd.f32 %v315, %v2525
    %v2534 = vmul.f32 %v2530, 0.5
    %v2535 = vtanh.pop %v2534
    %v2536 = vmul.f32 %v2535, 0.5
    %v2537 = vadd.f32 %v2536, 0.5
    %v2538 = vmul.f32 %v2531, 0.5
    %v2539 = vtanh.pop %v2538
    %v2540 = vmul.f32 %v2539, 0.5
    %v2541 = vadd.f32 %v2540, 0.5
    %v2542 = vtanh.pop %v2532
    %v2543 = vmul.f32 %v2533, 0.5
    %v2544 = vtanh.pop %v2543
    %v2545 = vmul.f32 %v2544, 0.5
    %v2546 = vadd.f32 %v2545, 0.5
    %v2548 = vrot.slane %v2244, 6
    %v2550 = vmul.f32 %v2541, %v2548
    %v2551 = vmul.f32 %v2537, %v2542
    %v2552 = vadd.f32 %v2550, %v2551
    %v2553 = vtanh.pop %v2552
    %v2554 = vmul.f32 %v2546, %v2553
    %v2555 = vpack.c.bf16 %v2554, %v2554
    %v2557 = vrot.slane %v2555, 1
    %2559 = vmatprep.subr.bf16.mxu0 %v825
    %2560 = vmatpush1.bf16.msra.mxu0 %v824
    %2561 = vmatprep.subr.bf16.mxu0 %v821
    %2562 = vmatpush1.bf16.msra.mxu0 %v820
    %2563 = vmatprep.subr.bf16.mxu0 %v817
    %2564 = vmatpush1.bf16.msra.mxu0 %v816
    %2565 = vmatprep.subr.bf16.mxu0 %v813
    %2566 = vmatpush1.bf16.msra.mxu0 %v812
    %2567 = vmatprep.subr.bf16.mxu0 %v809
    %2568 = vmatpush1.bf16.msra.mxu0 %v808
    %2569 = vmatprep.subr.bf16.mxu0 %v805
    %2570 = vmatpush1.bf16.msra.mxu0 %v804
    %2571 = vmatprep.subr.bf16.mxu0 %v801
    %2572 = vmatpush1.bf16.msra.mxu0 %v800
    %2573 = vmatprep.subr.bf16.mxu0 %v797
    %2574 = vmatpush1.bf16.msra.mxu0 %v796
    %2575 = vmatprep.subr.bf16.mxu0 0
    %2576 = vmatpush2.bf16.msra.mxu0 0
    %2577 = vmatprep.subr.bf16.mxu0 0
    %2578 = vmatpush2.bf16.msra.mxu0 0
    %2579 = vmatprep.subr.bf16.mxu0 0
    %2580 = vmatpush2.bf16.msra.mxu0 0
    %2581 = vmatprep.subr.bf16.mxu0 0
    %2582 = vmatpush2.bf16.msra.mxu0 0
    %2583 = vmatprep.subr.bf16.mxu0 0
    %2584 = vmatpush2.bf16.msra.mxu0 0
    %2585 = vmatprep.subr.bf16.mxu0 0
    %2586 = vmatpush2.bf16.msra.mxu0 0
    %2587 = vmatprep.subr.bf16.mxu0 0
    %2588 = vmatpush2.bf16.msra.mxu0 0
    %2589 = vmatprep.subr.bf16.mxu0 0
    %2590 = vmatpush2.bf16.msra.mxu0 0
    %2591 = vmatprep.mubr.bf16.mxu0 0
    %2592 = vmatmul.mubr.bf16.gmra.mxu0 %v2557
    %v2593 = vpop.f32.mrf.mxu0
    %v2594 = vadd.f32 %v683, %v2593
    %v2595 = vpop.f32.mrf.mxu0
    %v2596 = vadd.f32 %v687, %v2595
    %v2597 = vpop.f32.mrf.mxu0
    %v2598 = vpop.f32.mrf.mxu0
    %2599 = vdwg.mxu0
    %2600 = vmatprep.subr.bf16.mxu0 %v827
    %2601 = vmatpush1.bf16.msra.mxu0 %v826
    %2602 = vmatprep.subr.bf16.mxu0 %v823
    %2603 = vmatpush1.bf16.msra.mxu0 %v822
    %2604 = vmatprep.subr.bf16.mxu0 %v819
    %2605 = vmatpush1.bf16.msra.mxu0 %v818
    %2606 = vmatprep.subr.bf16.mxu0 %v815
    %2607 = vmatpush1.bf16.msra.mxu0 %v814
    %2608 = vmatprep.subr.bf16.mxu0 %v811
    %2609 = vmatpush1.bf16.msra.mxu0 %v810
    %2610 = vmatprep.subr.bf16.mxu0 %v807
    %2611 = vmatpush1.bf16.msra.mxu0 %v806
    %2612 = vmatprep.subr.bf16.mxu0 %v803
    %2613 = vmatpush1.bf16.msra.mxu0 %v802
    %2614 = vmatprep.subr.bf16.mxu0 %v799
    %2615 = vmatpush1.bf16.msra.mxu0 %v798
    %2616 = vmatprep.subr.bf16.mxu0 0
    %2617 = vmatpush2.bf16.msra.mxu0 0
    %2618 = vmatprep.subr.bf16.mxu0 0
    %2619 = vmatpush2.bf16.msra.mxu0 0
    %2620 = vmatprep.subr.bf16.mxu0 0
    %2621 = vmatpush2.bf16.msra.mxu0 0
    %2622 = vmatprep.subr.bf16.mxu0 0
    %2623 = vmatpush2.bf16.msra.mxu0 0
    %2624 = vmatprep.subr.bf16.mxu0 0
    %2625 = vmatpush2.bf16.msra.mxu0 0
    %2626 = vmatprep.subr.bf16.mxu0 0
    %2627 = vmatpush2.bf16.msra.mxu0 0
    %2628 = vmatprep.subr.bf16.mxu0 0
    %2629 = vmatpush2.bf16.msra.mxu0 0
    %2630 = vmatprep.subr.bf16.mxu0 0
    %2631 = vmatpush2.bf16.msra.mxu0 0
    %2632 = vmatprep.mubr.bf16.mxu0 0
    %2633 = vmatmul.mubr.bf16.gmra.mxu0 %v2557
    %v2634 = vpop.f32.mrf.mxu0
    %v2635 = vadd.f32 %v691, %v2634
    %v2636 = vpop.f32.mrf.mxu0
    %v2637 = vadd.f32 %v695, %v2636
    %v2638 = vpop.f32.mrf.mxu0
    %v2639 = vpop.f32.mrf.mxu0
    %2640 = vdwg.mxu0
    %v2641 = vpack.c.bf16 %v2434, %v2434
    %2642 = vmatprep.subr.bf16.mxu0 %v1067
    %2643 = vmatpush1.bf16.msra.mxu0 %v1066
    %2644 = vmatprep.subr.bf16.mxu0 %v1063
    %2645 = vmatpush1.bf16.msra.mxu0 %v1062
    %2646 = vmatprep.subr.bf16.mxu0 %v1059
    %2647 = vmatpush1.bf16.msra.mxu0 %v1058
    %2648 = vmatprep.subr.bf16.mxu0 %v1055
    %2649 = vmatpush1.bf16.msra.mxu0 %v1054
    %2650 = vmatprep.subr.bf16.mxu0 %v1051
    %2651 = vmatpush1.bf16.msra.mxu0 %v1050
    %2652 = vmatprep.subr.bf16.mxu0 %v1047
    %2653 = vmatpush1.bf16.msra.mxu0 %v1046
    %2654 = vmatprep.subr.bf16.mxu0 %v1043
    %2655 = vmatpush1.bf16.msra.mxu0 %v1042
    %2656 = vmatprep.subr.bf16.mxu0 %v1039
    %2657 = vmatpush1.bf16.msra.mxu0 %v1038
    %2658 = vmatprep.subr.bf16.mxu0 0
    %2659 = vmatpush2.bf16.msra.mxu0 0
    %2660 = vmatprep.subr.bf16.mxu0 0
    %2661 = vmatpush2.bf16.msra.mxu0 0
    %2662 = vmatprep.subr.bf16.mxu0 0
    %2663 = vmatpush2.bf16.msra.mxu0 0
    %2664 = vmatprep.subr.bf16.mxu0 0
    %2665 = vmatpush2.bf16.msra.mxu0 0
    %2666 = vmatprep.subr.bf16.mxu0 0
    %2667 = vmatpush2.bf16.msra.mxu0 0
    %2668 = vmatprep.subr.bf16.mxu0 0
    %2669 = vmatpush2.bf16.msra.mxu0 0
    %2670 = vmatprep.subr.bf16.mxu0 0
    %2671 = vmatpush2.bf16.msra.mxu0 0
    %2672 = vmatprep.subr.bf16.mxu0 0
    %2673 = vmatpush2.bf16.msra.mxu0 0
    %2674 = vmatprep.mubr.bf16.mxu0 0
    %2675 = vmatmul.mubr.bf16.gmra.mxu0 %v2641
    %v2676 = vpop.f32.mrf.mxu0
    %v2677 = vadd.f32 0.0, %v2676
    %v2678 = vpop.f32.mrf.mxu0
    %v2679 = vadd.f32 0.0, %v2678
    %v2680 = vpop.f32.mrf.mxu0
    %v2681 = vpop.f32.mrf.mxu0
    %2682 = vdwg.mxu0
    %2683 = vmatprep.subr.bf16.mxu0 %v1069
    %2684 = vmatpush1.bf16.msra.mxu0 %v1068
    %2685 = vmatprep.subr.bf16.mxu0 %v1065
    %2686 = vmatpush1.bf16.msra.mxu0 %v1064
    %2687 = vmatprep.subr.bf16.mxu0 %v1061
    %2688 = vmatpush1.bf16.msra.mxu0 %v1060
    %2689 = vmatprep.subr.bf16.mxu0 %v1057
    %2690 = vmatpush1.bf16.msra.mxu0 %v1056
    %2691 = vmatprep.subr.bf16.mxu0 %v1053
    %2692 = vmatpush1.bf16.msra.mxu0 %v1052
    %2693 = vmatprep.subr.bf16.mxu0 %v1049
    %2694 = vmatpush1.bf16.msra.mxu0 %v1048
    %2695 = vmatprep.subr.bf16.mxu0 %v1045
    %2696 = vmatpush1.bf16.msra.mxu0 %v1044
    %2697 = vmatprep.subr.bf16.mxu0 %v1041
    %2698 = vmatpush1.bf16.msra.mxu0 %v1040
    %2699 = vmatprep.subr.bf16.mxu0 0
    %2700 = vmatpush2.bf16.msra.mxu0 0
    %2701 = vmatprep.subr.bf16.mxu0 0
    %2702 = vmatpush2.bf16.msra.mxu0 0
    %2703 = vmatprep.subr.bf16.mxu0 0
    %2704 = vmatpush2.bf16.msra.mxu0 0
    %2705 = vmatprep.subr.bf16.mxu0 0
    %2706 = vmatpush2.bf16.msra.mxu0 0
    %2707 = vmatprep.subr.bf16.mxu0 0
    %2708 = vmatpush2.bf16.msra.mxu0 0
    %2709 = vmatprep.subr.bf16.mxu0 0
    %2710 = vmatpush2.bf16.msra.mxu0 0
    %2711 = vmatprep.subr.bf16.mxu0 0
    %2712 = vmatpush2.bf16.msra.mxu0 0
    %2713 = vmatprep.subr.bf16.mxu0 0
    %2714 = vmatpush2.bf16.msra.mxu0 0
    %2715 = vmatprep.mubr.bf16.mxu0 0
    %2716 = vmatmul.mubr.bf16.gmra.mxu0 %v2641
    %v2717 = vpop.f32.mrf.mxu0
    %v2718 = vadd.f32 0.0, %v2717
    %v2719 = vpop.f32.mrf.mxu0
    %v2720 = vadd.f32 0.0, %v2719
    %v2721 = vpop.f32.mrf.mxu0
    %v2722 = vpop.f32.mrf.mxu0
    %2723 = vdwg.mxu0
    %v2724 = vadd.f32 %v2594, %v2677
    %v2725 = vadd.f32 %v2596, %v2679
    %v2726 = vadd.f32 %v2635, %v2718
    %v2727 = vadd.f32 %v2637, %v2720
    %v2728 = vmul.f32 %v2724, 0.5
    %v2729 = vtanh.pop %v2728
    %v2730 = vmul.f32 %v2729, 0.5
    %v2731 = vadd.f32 %v2730, 0.5
    %v2732 = vmul.f32 %v2725, 0.5
    %v2733 = vtanh.pop %v2732
    %v2734 = vmul.f32 %v2733, 0.5
    %v2735 = vadd.f32 %v2734, 0.5
    %v2736 = vtanh.pop %v2726
    %v2737 = vmul.f32 %v2727, 0.5
    %v2738 = vtanh.pop %v2737
    %v2739 = vmul.f32 %v2738, 0.5
    %v2740 = vadd.f32 %v2739, 0.5
    %v2741 = vmul.f32 %v2735, %v2432
    %v2742 = vmul.f32 %v2731, %v2736
    %v2743 = vadd.f32 %v2741, %v2742
    %v2744 = vtanh.pop %v2743
    %v2745 = vmul.f32 %v2740, %v2744
    %v2746 = vadd.f32 %v2435, %v2745
    %2747 = vmatprep.subr.bf16.mxu0 %v539
    %2748 = vmatpush1.bf16.msra.mxu0 %v538
    %2749 = vmatprep.subr.bf16.mxu0 %v535
    %2750 = vmatpush1.bf16.msra.mxu0 %v534
    %2751 = vmatprep.subr.bf16.mxu0 %v531
    %2752 = vmatpush1.bf16.msra.mxu0 %v530
    %2753 = vmatprep.subr.bf16.mxu0 %v527
    %2754 = vmatpush1.bf16.msra.mxu0 %v526
    %2755 = vmatprep.subr.bf16.mxu0 %v523
    %2756 = vmatpush1.bf16.msra.mxu0 %v522
    %2757 = vmatprep.subr.bf16.mxu0 %v519
    %2758 = vmatpush1.bf16.msra.mxu0 %v518
    %2759 = vmatprep.subr.bf16.mxu0 %v515
    %2760 = vmatpush1.bf16.msra.mxu0 %v514
    %2761 = vmatprep.subr.bf16.mxu0 %v511
    %2762 = vmatpush1.bf16.msra.mxu0 %v510
    %2763 = vmatprep.subr.bf16.mxu0 0
    %2764 = vmatpush2.bf16.msra.mxu0 0
    %2765 = vmatprep.subr.bf16.mxu0 0
    %2766 = vmatpush2.bf16.msra.mxu0 0
    %2767 = vmatprep.subr.bf16.mxu0 0
    %2768 = vmatpush2.bf16.msra.mxu0 0
    %2769 = vmatprep.subr.bf16.mxu0 0
    %2770 = vmatpush2.bf16.msra.mxu0 0
    %2771 = vmatprep.subr.bf16.mxu0 0
    %2772 = vmatpush2.bf16.msra.mxu0 0
    %2773 = vmatprep.subr.bf16.mxu0 0
    %2774 = vmatpush2.bf16.msra.mxu0 0
    %2775 = vmatprep.subr.bf16.mxu0 0
    %2776 = vmatpush2.bf16.msra.mxu0 0
    %2777 = vmatprep.subr.bf16.mxu0 0
    %2778 = vmatpush2.bf16.msra.mxu0 0
    %2779 = vmatprep.mubr.bf16.mxu0 0
    %2780 = vmatmul.mubr.bf16.gmra.mxu0 %v2557
    %v2781 = vpop.f32.mrf.mxu0
    %v2782 = vadd.f32 0.0, %v2781
    %v2783 = vpop.f32.mrf.mxu0
    %v2784 = vadd.f32 0.0, %v2783
    %v2785 = vpop.f32.mrf.mxu0
    %v2786 = vpop.f32.mrf.mxu0
    %2787 = vdwg.mxu0
    %2788 = vmatprep.subr.bf16.mxu0 %v541
    %2789 = vmatpush1.bf16.msra.mxu0 %v540
    %2790 = vmatprep.subr.bf16.mxu0 %v537
    %2791 = vmatpush1.bf16.msra.mxu0 %v536
    %2792 = vmatprep.subr.bf16.mxu0 %v533
    %2793 = vmatpush1.bf16.msra.mxu0 %v532
    %2794 = vmatprep.subr.bf16.mxu0 %v529
    %2795 = vmatpush1.bf16.msra.mxu0 %v528
    %2796 = vmatprep.subr.bf16.mxu0 %v525
    %2797 = vmatpush1.bf16.msra.mxu0 %v524
    %2798 = vmatprep.subr.bf16.mxu0 %v521
    %2799 = vmatpush1.bf16.msra.mxu0 %v520
    %2800 = vmatprep.subr.bf16.mxu0 %v517
    %2801 = vmatpush1.bf16.msra.mxu0 %v516
    %2802 = vmatprep.subr.bf16.mxu0 %v513
    %2803 = vmatpush1.bf16.msra.mxu0 %v512
    %2804 = vmatprep.subr.bf16.mxu0 0
    %2805 = vmatpush2.bf16.msra.mxu0 0
    %2806 = vmatprep.subr.bf16.mxu0 0
    %2807 = vmatpush2.bf16.msra.mxu0 0
    %2808 = vmatprep.subr.bf16.mxu0 0
    %2809 = vmatpush2.bf16.msra.mxu0 0
    %2810 = vmatprep.subr.bf16.mxu0 0
    %2811 = vmatpush2.bf16.msra.mxu0 0
    %2812 = vmatprep.subr.bf16.mxu0 0
    %2813 = vmatpush2.bf16.msra.mxu0 0
    %2814 = vmatprep.subr.bf16.mxu0 0
    %2815 = vmatpush2.bf16.msra.mxu0 0
    %2816 = vmatprep.subr.bf16.mxu0 0
    %2817 = vmatpush2.bf16.msra.mxu0 0
    %2818 = vmatprep.subr.bf16.mxu0 0
    %2819 = vmatpush2.bf16.msra.mxu0 0
    %2820 = vmatprep.mubr.bf16.mxu0 0
    %2821 = vmatmul.mubr.bf16.gmra.mxu0 %v2557
    %v2822 = vpop.f32.mrf.mxu0
    %v2823 = vadd.f32 0.0, %v2822
    %v2824 = vpop.f32.mrf.mxu0
    %v2825 = vadd.f32 0.0, %v2824
    %v2826 = vpop.f32.mrf.mxu0
    %v2827 = vpop.f32.mrf.mxu0
    %2828 = vdwg.mxu0
    %v2833 = vrot.slane %v2782, 4
    %v2834 = vrot.slane %v2784, 4
    %v2835 = vrot.slane %v2823, 4
    %v2836 = vrot.slane %v2825, 4
    %v2841 = vadd.f32 %v270, %v2833
    %v2842 = vadd.f32 %v272, %v2834
    %v2843 = vadd.f32 %v313, %v2835
    %v2844 = vadd.f32 %v315, %v2836
    %v2845 = vmul.f32 %v2841, 0.5
    %v2846 = vtanh.pop %v2845
    %v2847 = vmul.f32 %v2846, 0.5
    %v2848 = vadd.f32 %v2847, 0.5
    %v2849 = vmul.f32 %v2842, 0.5
    %v2850 = vtanh.pop %v2849
    %v2851 = vmul.f32 %v2850, 0.5
    %v2852 = vadd.f32 %v2851, 0.5
    %v2853 = vtanh.pop %v2843
    %v2854 = vmul.f32 %v2844, 0.5
    %v2855 = vtanh.pop %v2854
    %v2856 = vmul.f32 %v2855, 0.5
    %v2857 = vadd.f32 %v2856, 0.5
    %v2859 = vrot.slane %v2552, 6
    %v2861 = vmul.f32 %v2852, %v2859
    %v2862 = vmul.f32 %v2848, %v2853
    %v2863 = vadd.f32 %v2861, %v2862
    %v2864 = vtanh.pop %v2863
    %v2865 = vmul.f32 %v2857, %v2864
    %v2866 = vpack.c.bf16 %v2865, %v2865
    %v2868 = vrot.slane %v2866, 2
    %2870 = vmatprep.subr.bf16.mxu0 %v825
    %2871 = vmatpush1.bf16.msra.mxu0 %v824
    %2872 = vmatprep.subr.bf16.mxu0 %v821
    %2873 = vmatpush1.bf16.msra.mxu0 %v820
    %2874 = vmatprep.subr.bf16.mxu0 %v817
    %2875 = vmatpush1.bf16.msra.mxu0 %v816
    %2876 = vmatprep.subr.bf16.mxu0 %v813
    %2877 = vmatpush1.bf16.msra.mxu0 %v812
    %2878 = vmatprep.subr.bf16.mxu0 %v809
    %2879 = vmatpush1.bf16.msra.mxu0 %v808
    %2880 = vmatprep.subr.bf16.mxu0 %v805
    %2881 = vmatpush1.bf16.msra.mxu0 %v804
    %2882 = vmatprep.subr.bf16.mxu0 %v801
    %2883 = vmatpush1.bf16.msra.mxu0 %v800
    %2884 = vmatprep.subr.bf16.mxu0 %v797
    %2885 = vmatpush1.bf16.msra.mxu0 %v796
    %2886 = vmatprep.subr.bf16.mxu0 0
    %2887 = vmatpush2.bf16.msra.mxu0 0
    %2888 = vmatprep.subr.bf16.mxu0 0
    %2889 = vmatpush2.bf16.msra.mxu0 0
    %2890 = vmatprep.subr.bf16.mxu0 0
    %2891 = vmatpush2.bf16.msra.mxu0 0
    %2892 = vmatprep.subr.bf16.mxu0 0
    %2893 = vmatpush2.bf16.msra.mxu0 0
    %2894 = vmatprep.subr.bf16.mxu0 0
    %2895 = vmatpush2.bf16.msra.mxu0 0
    %2896 = vmatprep.subr.bf16.mxu0 0
    %2897 = vmatpush2.bf16.msra.mxu0 0
    %2898 = vmatprep.subr.bf16.mxu0 0
    %2899 = vmatpush2.bf16.msra.mxu0 0
    %2900 = vmatprep.subr.bf16.mxu0 0
    %2901 = vmatpush2.bf16.msra.mxu0 0
    %2902 = vmatprep.mubr.bf16.mxu0 0
    %2903 = vmatmul.mubr.bf16.gmra.mxu0 %v2868
    %v2904 = vpop.f32.mrf.mxu0
    %v2905 = vadd.f32 %v683, %v2904
    %v2906 = vpop.f32.mrf.mxu0
    %v2907 = vadd.f32 %v687, %v2906
    %v2908 = vpop.f32.mrf.mxu0
    %v2909 = vpop.f32.mrf.mxu0
    %2910 = vdwg.mxu0
    %2911 = vmatprep.subr.bf16.mxu0 %v827
    %2912 = vmatpush1.bf16.msra.mxu0 %v826
    %2913 = vmatprep.subr.bf16.mxu0 %v823
    %2914 = vmatpush1.bf16.msra.mxu0 %v822
    %2915 = vmatprep.subr.bf16.mxu0 %v819
    %2916 = vmatpush1.bf16.msra.mxu0 %v818
    %2917 = vmatprep.subr.bf16.mxu0 %v815
    %2918 = vmatpush1.bf16.msra.mxu0 %v814
    %2919 = vmatprep.subr.bf16.mxu0 %v811
    %2920 = vmatpush1.bf16.msra.mxu0 %v810
    %2921 = vmatprep.subr.bf16.mxu0 %v807
    %2922 = vmatpush1.bf16.msra.mxu0 %v806
    %2923 = vmatprep.subr.bf16.mxu0 %v803
    %2924 = vmatpush1.bf16.msra.mxu0 %v802
    %2925 = vmatprep.subr.bf16.mxu0 %v799
    %2926 = vmatpush1.bf16.msra.mxu0 %v798
    %2927 = vmatprep.subr.bf16.mxu0 0
    %2928 = vmatpush2.bf16.msra.mxu0 0
    %2929 = vmatprep.subr.bf16.mxu0 0
    %2930 = vmatpush2.bf16.msra.mxu0 0
    %2931 = vmatprep.subr.bf16.mxu0 0
    %2932 = vmatpush2.bf16.msra.mxu0 0
    %2933 = vmatprep.subr.bf16.mxu0 0
    %2934 = vmatpush2.bf16.msra.mxu0 0
    %2935 = vmatprep.subr.bf16.mxu0 0
    %2936 = vmatpush2.bf16.msra.mxu0 0
    %2937 = vmatprep.subr.bf16.mxu0 0
    %2938 = vmatpush2.bf16.msra.mxu0 0
    %2939 = vmatprep.subr.bf16.mxu0 0
    %2940 = vmatpush2.bf16.msra.mxu0 0
    %2941 = vmatprep.subr.bf16.mxu0 0
    %2942 = vmatpush2.bf16.msra.mxu0 0
    %2943 = vmatprep.mubr.bf16.mxu0 0
    %2944 = vmatmul.mubr.bf16.gmra.mxu0 %v2868
    %v2945 = vpop.f32.mrf.mxu0
    %v2946 = vadd.f32 %v691, %v2945
    %v2947 = vpop.f32.mrf.mxu0
    %v2948 = vadd.f32 %v695, %v2947
    %v2949 = vpop.f32.mrf.mxu0
    %v2950 = vpop.f32.mrf.mxu0
    %2951 = vdwg.mxu0
    %v2952 = vpack.c.bf16 %v2745, %v2745
    %2953 = vmatprep.subr.bf16.mxu0 %v1067
    %2954 = vmatpush1.bf16.msra.mxu0 %v1066
    %2955 = vmatprep.subr.bf16.mxu0 %v1063
    %2956 = vmatpush1.bf16.msra.mxu0 %v1062
    %2957 = vmatprep.subr.bf16.mxu0 %v1059
    %2958 = vmatpush1.bf16.msra.mxu0 %v1058
    %2959 = vmatprep.subr.bf16.mxu0 %v1055
    %2960 = vmatpush1.bf16.msra.mxu0 %v1054
    %2961 = vmatprep.subr.bf16.mxu0 %v1051
    %2962 = vmatpush1.bf16.msra.mxu0 %v1050
    %2963 = vmatprep.subr.bf16.mxu0 %v1047
    %2964 = vmatpush1.bf16.msra.mxu0 %v1046
    %2965 = vmatprep.subr.bf16.mxu0 %v1043
    %2966 = vmatpush1.bf16.msra.mxu0 %v1042
    %2967 = vmatprep.subr.bf16.mxu0 %v1039
    %2968 = vmatpush1.bf16.msra.mxu0 %v1038
    %2969 = vmatprep.subr.bf16.mxu0 0
    %2970 = vmatpush2.bf16.msra.mxu0 0
    %2971 = vmatprep.subr.bf16.mxu0 0
    %2972 = vmatpush2.bf16.msra.mxu0 0
    %2973 = vmatprep.subr.bf16.mxu0 0
    %2974 = vmatpush2.bf16.msra.mxu0 0
    %2975 = vmatprep.subr.bf16.mxu0 0
    %2976 = vmatpush2.bf16.msra.mxu0 0
    %2977 = vmatprep.subr.bf16.mxu0 0
    %2978 = vmatpush2.bf16.msra.mxu0 0
    %2979 = vmatprep.subr.bf16.mxu0 0
    %2980 = vmatpush2.bf16.msra.mxu0 0
    %2981 = vmatprep.subr.bf16.mxu0 0
    %2982 = vmatpush2.bf16.msra.mxu0 0
    %2983 = vmatprep.subr.bf16.mxu0 0
    %2984 = vmatpush2.bf16.msra.mxu0 0
    %2985 = vmatprep.mubr.bf16.mxu0 0
    %2986 = vmatmul.mubr.bf16.gmra.mxu0 %v2952
    %v2987 = vpop.f32.mrf.mxu0
    %v2988 = vadd.f32 0.0, %v2987
    %v2989 = vpop.f32.mrf.mxu0
    %v2990 = vadd.f32 0.0, %v2989
    %v2991 = vpop.f32.mrf.mxu0
    %v2992 = vpop.f32.mrf.mxu0
    %2993 = vdwg.mxu0
    %2994 = vmatprep.subr.bf16.mxu0 %v1069
    %2995 = vmatpush1.bf16.msra.mxu0 %v1068
    %2996 = vmatprep.subr.bf16.mxu0 %v1065
    %2997 = vmatpush1.bf16.msra.mxu0 %v1064
    %2998 = vmatprep.subr.bf16.mxu0 %v1061
    %2999 = vmatpush1.bf16.msra.mxu0 %v1060
    %3000 = vmatprep.subr.bf16.mxu0 %v1057
    %3001 = vmatpush1.bf16.msra.mxu0 %v1056
    %3002 = vmatprep.subr.bf16.mxu0 %v1053
    %3003 = vmatpush1.bf16.msra.mxu0 %v1052
    %3004 = vmatprep.subr.bf16.mxu0 %v1049
    %3005 = vmatpush1.bf16.msra.mxu0 %v1048
    %3006 = vmatprep.subr.bf16.mxu0 %v1045
    %3007 = vmatpush1.bf16.msra.mxu0 %v1044
    %3008 = vmatprep.subr.bf16.mxu0 %v1041
    %3009 = vmatpush1.bf16.msra.mxu0 %v1040
    %3010 = vmatprep.subr.bf16.mxu0 0
    %3011 = vmatpush2.bf16.msra.mxu0 0
    %3012 = vmatprep.subr.bf16.mxu0 0
    %3013 = vmatpush2.bf16.msra.mxu0 0
    %3014 = vmatprep.subr.bf16.mxu0 0
    %3015 = vmatpush2.bf16.msra.mxu0 0
    %3016 = vmatprep.subr.bf16.mxu0 0
    %3017 = vmatpush2.bf16.msra.mxu0 0
    %3018 = vmatprep.subr.bf16.mxu0 0
    %3019 = vmatpush2.bf16.msra.mxu0 0
    %3020 = vmatprep.subr.bf16.mxu0 0
    %3021 = vmatpush2.bf16.msra.mxu0 0
    %3022 = vmatprep.subr.bf16.mxu0 0
    %3023 = vmatpush2.bf16.msra.mxu0 0
    %3024 = vmatprep.subr.bf16.mxu0 0
    %3025 = vmatpush2.bf16.msra.mxu0 0
    %3026 = vmatprep.mubr.bf16.mxu0 0
    %3027 = vmatmul.mubr.bf16.gmra.mxu0 %v2952
    %v3028 = vpop.f32.mrf.mxu0
    %v3029 = vadd.f32 0.0, %v3028
    %v3030 = vpop.f32.mrf.mxu0
    %v3031 = vadd.f32 0.0, %v3030
    %v3032 = vpop.f32.mrf.mxu0
    %v3033 = vpop.f32.mrf.mxu0
    %3034 = vdwg.mxu0
    %v3035 = vadd.f32 %v2905, %v2988
    %v3036 = vadd.f32 %v2907, %v2990
    %v3037 = vadd.f32 %v2946, %v3029
    %v3038 = vadd.f32 %v2948, %v3031
    %v3039 = vmul.f32 %v3035, 0.5
    %v3040 = vtanh.pop %v3039
    %v3041 = vmul.f32 %v3040, 0.5
    %v3042 = vadd.f32 %v3041, 0.5
    %v3043 = vmul.f32 %v3036, 0.5
    %v3044 = vtanh.pop %v3043
    %v3045 = vmul.f32 %v3044, 0.5
    %v3046 = vadd.f32 %v3045, 0.5
    %v3047 = vtanh.pop %v3037
    %v3048 = vmul.f32 %v3038, 0.5
    %v3049 = vtanh.pop %v3048
    %v3050 = vmul.f32 %v3049, 0.5
    %v3051 = vadd.f32 %v3050, 0.5
    %v3052 = vmul.f32 %v3046, %v2743
    %v3053 = vmul.f32 %v3042, %v3047
    %v3054 = vadd.f32 %v3052, %v3053
    %v3055 = vtanh.pop %v3054
    %v3056 = vmul.f32 %v3051, %v3055
    %v3057 = vadd.f32 %v2746, %v3056
    %3058 = vmatprep.subr.bf16.mxu0 %v539
    %3059 = vmatpush1.bf16.msra.mxu0 %v538
    %3060 = vmatprep.subr.bf16.mxu0 %v535
    %3061 = vmatpush1.bf16.msra.mxu0 %v534
    %3062 = vmatprep.subr.bf16.mxu0 %v531
    %3063 = vmatpush1.bf16.msra.mxu0 %v530
    %3064 = vmatprep.subr.bf16.mxu0 %v527
    %3065 = vmatpush1.bf16.msra.mxu0 %v526
    %3066 = vmatprep.subr.bf16.mxu0 %v523
    %3067 = vmatpush1.bf16.msra.mxu0 %v522
    %3068 = vmatprep.subr.bf16.mxu0 %v519
    %3069 = vmatpush1.bf16.msra.mxu0 %v518
    %3070 = vmatprep.subr.bf16.mxu0 %v515
    %3071 = vmatpush1.bf16.msra.mxu0 %v514
    %3072 = vmatprep.subr.bf16.mxu0 %v511
    %3073 = vmatpush1.bf16.msra.mxu0 %v510
    %3074 = vmatprep.subr.bf16.mxu0 0
    %3075 = vmatpush2.bf16.msra.mxu0 0
    %3076 = vmatprep.subr.bf16.mxu0 0
    %3077 = vmatpush2.bf16.msra.mxu0 0
    %3078 = vmatprep.subr.bf16.mxu0 0
    %3079 = vmatpush2.bf16.msra.mxu0 0
    %3080 = vmatprep.subr.bf16.mxu0 0
    %3081 = vmatpush2.bf16.msra.mxu0 0
    %3082 = vmatprep.subr.bf16.mxu0 0
    %3083 = vmatpush2.bf16.msra.mxu0 0
    %3084 = vmatprep.subr.bf16.mxu0 0
    %3085 = vmatpush2.bf16.msra.mxu0 0
    %3086 = vmatprep.subr.bf16.mxu0 0
    %3087 = vmatpush2.bf16.msra.mxu0 0
    %3088 = vmatprep.subr.bf16.mxu0 0
    %3089 = vmatpush2.bf16.msra.mxu0 0
    %3090 = vmatprep.mubr.bf16.mxu0 0
    %3091 = vmatmul.mubr.bf16.gmra.mxu0 %v2868
    %v3092 = vpop.f32.mrf.mxu0
    %v3093 = vadd.f32 0.0, %v3092
    %v3094 = vpop.f32.mrf.mxu0
    %v3095 = vadd.f32 0.0, %v3094
    %v3096 = vpop.f32.mrf.mxu0
    %v3097 = vpop.f32.mrf.mxu0
    %3098 = vdwg.mxu0
    %3099 = vmatprep.subr.bf16.mxu0 %v541
    %3100 = vmatpush1.bf16.msra.mxu0 %v540
    %3101 = vmatprep.subr.bf16.mxu0 %v537
    %3102 = vmatpush1.bf16.msra.mxu0 %v536
    %3103 = vmatprep.subr.bf16.mxu0 %v533
    %3104 = vmatpush1.bf16.msra.mxu0 %v532
    %3105 = vmatprep.subr.bf16.mxu0 %v529
    %3106 = vmatpush1.bf16.msra.mxu0 %v528
    %3107 = vmatprep.subr.bf16.mxu0 %v525
    %3108 = vmatpush1.bf16.msra.mxu0 %v524
    %3109 = vmatprep.subr.bf16.mxu0 %v521
    %3110 = vmatpush1.bf16.msra.mxu0 %v520
    %3111 = vmatprep.subr.bf16.mxu0 %v517
    %3112 = vmatpush1.bf16.msra.mxu0 %v516
    %3113 = vmatprep.subr.bf16.mxu0 %v513
    %3114 = vmatpush1.bf16.msra.mxu0 %v512
    %3115 = vmatprep.subr.bf16.mxu0 0
    %3116 = vmatpush2.bf16.msra.mxu0 0
    %3117 = vmatprep.subr.bf16.mxu0 0
    %3118 = vmatpush2.bf16.msra.mxu0 0
    %3119 = vmatprep.subr.bf16.mxu0 0
    %3120 = vmatpush2.bf16.msra.mxu0 0
    %3121 = vmatprep.subr.bf16.mxu0 0
    %3122 = vmatpush2.bf16.msra.mxu0 0
    %3123 = vmatprep.subr.bf16.mxu0 0
    %3124 = vmatpush2.bf16.msra.mxu0 0
    %3125 = vmatprep.subr.bf16.mxu0 0
    %3126 = vmatpush2.bf16.msra.mxu0 0
    %3127 = vmatprep.subr.bf16.mxu0 0
    %3128 = vmatpush2.bf16.msra.mxu0 0
    %3129 = vmatprep.subr.bf16.mxu0 0
    %3130 = vmatpush2.bf16.msra.mxu0 0
    %3131 = vmatprep.mubr.bf16.mxu0 0
    %3132 = vmatmul.mubr.bf16.gmra.mxu0 %v2868
    %v3133 = vpop.f32.mrf.mxu0
    %v3134 = vadd.f32 0.0, %v3133
    %v3135 = vpop.f32.mrf.mxu0
    %v3136 = vadd.f32 0.0, %v3135
    %v3137 = vpop.f32.mrf.mxu0
    %v3138 = vpop.f32.mrf.mxu0
    %3139 = vdwg.mxu0
    %v3144 = vrot.slane %v3093, 2
    %v3145 = vrot.slane %v3095, 2
    %v3146 = vrot.slane %v3134, 2
    %v3147 = vrot.slane %v3136, 2
    %v3152 = vadd.f32 %v270, %v3144
    %v3153 = vadd.f32 %v272, %v3145
    %v3154 = vadd.f32 %v313, %v3146
    %v3155 = vadd.f32 %v315, %v3147
    %v3156 = vmul.f32 %v3152, 0.5
    %v3157 = vtanh.pop %v3156
    %v3158 = vmul.f32 %v3157, 0.5
    %v3159 = vadd.f32 %v3158, 0.5
    %v3160 = vmul.f32 %v3153, 0.5
    %v3161 = vtanh.pop %v3160
    %v3162 = vmul.f32 %v3161, 0.5
    %v3163 = vadd.f32 %v3162, 0.5
    %v3164 = vtanh.pop %v3154
    %v3165 = vmul.f32 %v3155, 0.5
    %v3166 = vtanh.pop %v3165
    %v3167 = vmul.f32 %v3166, 0.5
    %v3168 = vadd.f32 %v3167, 0.5
    %v3170 = vrot.slane %v2863, 6
    %v3172 = vmul.f32 %v3163, %v3170
    %v3173 = vmul.f32 %v3159, %v3164
    %v3174 = vadd.f32 %v3172, %v3173
    %v3175 = vtanh.pop %v3174
    %v3176 = vmul.f32 %v3168, %v3175
    %v3177 = vpack.c.bf16 %v3176, %v3176
    %v3179 = vrot.slane %v3177, 3
    %3181 = vmatprep.subr.bf16.mxu0 %v825
    %3182 = vmatpush1.bf16.msra.mxu0 %v824
    %3183 = vmatprep.subr.bf16.mxu0 %v821
    %3184 = vmatpush1.bf16.msra.mxu0 %v820
    %3185 = vmatprep.subr.bf16.mxu0 %v817
    %3186 = vmatpush1.bf16.msra.mxu0 %v816
    %3187 = vmatprep.subr.bf16.mxu0 %v813
    %3188 = vmatpush1.bf16.msra.mxu0 %v812
    %3189 = vmatprep.subr.bf16.mxu0 %v809
    %3190 = vmatpush1.bf16.msra.mxu0 %v808
    %3191 = vmatprep.subr.bf16.mxu0 %v805
    %3192 = vmatpush1.bf16.msra.mxu0 %v804
    %3193 = vmatprep.subr.bf16.mxu0 %v801
    %3194 = vmatpush1.bf16.msra.mxu0 %v800
    %3195 = vmatprep.subr.bf16.mxu0 %v797
    %3196 = vmatpush1.bf16.msra.mxu0 %v796
    %3197 = vmatprep.subr.bf16.mxu0 0
    %3198 = vmatpush2.bf16.msra.mxu0 0
    %3199 = vmatprep.subr.bf16.mxu0 0
    %3200 = vmatpush2.bf16.msra.mxu0 0
    %3201 = vmatprep.subr.bf16.mxu0 0
    %3202 = vmatpush2.bf16.msra.mxu0 0
    %3203 = vmatprep.subr.bf16.mxu0 0
    %3204 = vmatpush2.bf16.msra.mxu0 0
    %3205 = vmatprep.subr.bf16.mxu0 0
    %3206 = vmatpush2.bf16.msra.mxu0 0
    %3207 = vmatprep.subr.bf16.mxu0 0
    %3208 = vmatpush2.bf16.msra.mxu0 0
    %3209 = vmatprep.subr.bf16.mxu0 0
    %3210 = vmatpush2.bf16.msra.mxu0 0
    %3211 = vmatprep.subr.bf16.mxu0 0
    %3212 = vmatpush2.bf16.msra.mxu0 0
    %3213 = vmatprep.mubr.bf16.mxu0 0
    %3214 = vmatmul.mubr.bf16.gmra.mxu0 %v3179
    %v3215 = vpop.f32.mrf.mxu0
    %v3216 = vadd.f32 %v683, %v3215
    %v3217 = vpop.f32.mrf.mxu0
    %v3218 = vadd.f32 %v687, %v3217
    %v3219 = vpop.f32.mrf.mxu0
    %v3220 = vpop.f32.mrf.mxu0
    %3221 = vdwg.mxu0
    %3222 = vmatprep.subr.bf16.mxu0 %v827
    %3223 = vmatpush1.bf16.msra.mxu0 %v826
    %3224 = vmatprep.subr.bf16.mxu0 %v823
    %3225 = vmatpush1.bf16.msra.mxu0 %v822
    %3226 = vmatprep.subr.bf16.mxu0 %v819
    %3227 = vmatpush1.bf16.msra.mxu0 %v818
    %3228 = vmatprep.subr.bf16.mxu0 %v815
    %3229 = vmatpush1.bf16.msra.mxu0 %v814
    %3230 = vmatprep.subr.bf16.mxu0 %v811
    %3231 = vmatpush1.bf16.msra.mxu0 %v810
    %3232 = vmatprep.subr.bf16.mxu0 %v807
    %3233 = vmatpush1.bf16.msra.mxu0 %v806
    %3234 = vmatprep.subr.bf16.mxu0 %v803
    %3235 = vmatpush1.bf16.msra.mxu0 %v802
    %3236 = vmatprep.subr.bf16.mxu0 %v799
    %3237 = vmatpush1.bf16.msra.mxu0 %v798
    %3238 = vmatprep.subr.bf16.mxu0 0
    %3239 = vmatpush2.bf16.msra.mxu0 0
    %3240 = vmatprep.subr.bf16.mxu0 0
    %3241 = vmatpush2.bf16.msra.mxu0 0
    %3242 = vmatprep.subr.bf16.mxu0 0
    %3243 = vmatpush2.bf16.msra.mxu0 0
    %3244 = vmatprep.subr.bf16.mxu0 0
    %3245 = vmatpush2.bf16.msra.mxu0 0
    %3246 = vmatprep.subr.bf16.mxu0 0
    %3247 = vmatpush2.bf16.msra.mxu0 0
    %3248 = vmatprep.subr.bf16.mxu0 0
    %3249 = vmatpush2.bf16.msra.mxu0 0
    %3250 = vmatprep.subr.bf16.mxu0 0
    %3251 = vmatpush2.bf16.msra.mxu0 0
    %3252 = vmatprep.subr.bf16.mxu0 0
    %3253 = vmatpush2.bf16.msra.mxu0 0
    %3254 = vmatprep.mubr.bf16.mxu0 0
    %3255 = vmatmul.mubr.bf16.gmra.mxu0 %v3179
    %v3256 = vpop.f32.mrf.mxu0
    %v3257 = vadd.f32 %v691, %v3256
    %v3258 = vpop.f32.mrf.mxu0
    %v3259 = vadd.f32 %v695, %v3258
    %v3260 = vpop.f32.mrf.mxu0
    %v3261 = vpop.f32.mrf.mxu0
    %3262 = vdwg.mxu0
    %v3263 = vpack.c.bf16 %v3056, %v3056
    %3264 = vmatprep.subr.bf16.mxu0 %v1067
    %3265 = vmatpush1.bf16.msra.mxu0 %v1066
    %3266 = vmatprep.subr.bf16.mxu0 %v1063
    %3267 = vmatpush1.bf16.msra.mxu0 %v1062
    %3268 = vmatprep.subr.bf16.mxu0 %v1059
    %3269 = vmatpush1.bf16.msra.mxu0 %v1058
    %3270 = vmatprep.subr.bf16.mxu0 %v1055
    %3271 = vmatpush1.bf16.msra.mxu0 %v1054
    %3272 = vmatprep.subr.bf16.mxu0 %v1051
    %3273 = vmatpush1.bf16.msra.mxu0 %v1050
    %3274 = vmatprep.subr.bf16.mxu0 %v1047
    %3275 = vmatpush1.bf16.msra.mxu0 %v1046
    %3276 = vmatprep.subr.bf16.mxu0 %v1043
    %3277 = vmatpush1.bf16.msra.mxu0 %v1042
    %3278 = vmatprep.subr.bf16.mxu0 %v1039
    %3279 = vmatpush1.bf16.msra.mxu0 %v1038
    %3280 = vmatprep.subr.bf16.mxu0 0
    %3281 = vmatpush2.bf16.msra.mxu0 0
    %3282 = vmatprep.subr.bf16.mxu0 0
    %3283 = vmatpush2.bf16.msra.mxu0 0
    %3284 = vmatprep.subr.bf16.mxu0 0
    %3285 = vmatpush2.bf16.msra.mxu0 0
    %3286 = vmatprep.subr.bf16.mxu0 0
    %3287 = vmatpush2.bf16.msra.mxu0 0
    %3288 = vmatprep.subr.bf16.mxu0 0
    %3289 = vmatpush2.bf16.msra.mxu0 0
    %3290 = vmatprep.subr.bf16.mxu0 0
    %3291 = vmatpush2.bf16.msra.mxu0 0
    %3292 = vmatprep.subr.bf16.mxu0 0
    %3293 = vmatpush2.bf16.msra.mxu0 0
    %3294 = vmatprep.subr.bf16.mxu0 0
    %3295 = vmatpush2.bf16.msra.mxu0 0
    %3296 = vmatprep.mubr.bf16.mxu0 0
    %3297 = vmatmul.mubr.bf16.gmra.mxu0 %v3263
    %v3298 = vpop.f32.mrf.mxu0
    %v3299 = vadd.f32 0.0, %v3298
    %v3300 = vpop.f32.mrf.mxu0
    %v3301 = vadd.f32 0.0, %v3300
    %v3302 = vpop.f32.mrf.mxu0
    %v3303 = vpop.f32.mrf.mxu0
    %3304 = vdwg.mxu0
    %3305 = vmatprep.subr.bf16.mxu0 %v1069
    %3306 = vmatpush1.bf16.msra.mxu0 %v1068
    %3307 = vmatprep.subr.bf16.mxu0 %v1065
    %3308 = vmatpush1.bf16.msra.mxu0 %v1064
    %3309 = vmatprep.subr.bf16.mxu0 %v1061
    %3310 = vmatpush1.bf16.msra.mxu0 %v1060
    %3311 = vmatprep.subr.bf16.mxu0 %v1057
    %3312 = vmatpush1.bf16.msra.mxu0 %v1056
    %3313 = vmatprep.subr.bf16.mxu0 %v1053
    %3314 = vmatpush1.bf16.msra.mxu0 %v1052
    %3315 = vmatprep.subr.bf16.mxu0 %v1049
    %3316 = vmatpush1.bf16.msra.mxu0 %v1048
    %3317 = vmatprep.subr.bf16.mxu0 %v1045
    %3318 = vmatpush1.bf16.msra.mxu0 %v1044
    %3319 = vmatprep.subr.bf16.mxu0 %v1041
    %3320 = vmatpush1.bf16.msra.mxu0 %v1040
    %3321 = vmatprep.subr.bf16.mxu0 0
    %3322 = vmatpush2.bf16.msra.mxu0 0
    %3323 = vmatprep.subr.bf16.mxu0 0
    %3324 = vmatpush2.bf16.msra.mxu0 0
    %3325 = vmatprep.subr.bf16.mxu0 0
    %3326 = vmatpush2.bf16.msra.mxu0 0
    %3327 = vmatprep.subr.bf16.mxu0 0
    %3328 = vmatpush2.bf16.msra.mxu0 0
    %3329 = vmatprep.subr.bf16.mxu0 0
    %3330 = vmatpush2.bf16.msra.mxu0 0
    %3331 = vmatprep.subr.bf16.mxu0 0
    %3332 = vmatpush2.bf16.msra.mxu0 0
    %3333 = vmatprep.subr.bf16.mxu0 0
    %3334 = vmatpush2.bf16.msra.mxu0 0
    %3335 = vmatprep.subr.bf16.mxu0 0
    %3336 = vmatpush2.bf16.msra.mxu0 0
    %3337 = vmatprep.mubr.bf16.mxu0 0
    %3338 = vmatmul.mubr.bf16.gmra.mxu0 %v3263
    %v3339 = vpop.f32.mrf.mxu0
    %v3340 = vadd.f32 0.0, %v3339
    %v3341 = vpop.f32.mrf.mxu0
    %v3342 = vadd.f32 0.0, %v3341
    %v3343 = vpop.f32.mrf.mxu0
    %v3344 = vpop.f32.mrf.mxu0
    %3345 = vdwg.mxu0
    %v3346 = vadd.f32 %v3216, %v3299
    %v3347 = vadd.f32 %v3218, %v3301
    %v3348 = vadd.f32 %v3257, %v3340
    %v3349 = vadd.f32 %v3259, %v3342
    %v3350 = vmul.f32 %v3346, 0.5
    %v3351 = vtanh.pop %v3350
    %v3352 = vmul.f32 %v3351, 0.5
    %v3353 = vadd.f32 %v3352, 0.5
    %v3354 = vmul.f32 %v3347, 0.5
    %v3355 = vtanh.pop %v3354
    %v3356 = vmul.f32 %v3355, 0.5
    %v3357 = vadd.f32 %v3356, 0.5
    %v3358 = vtanh.pop %v3348
    %v3359 = vmul.f32 %v3349, 0.5
    %v3360 = vtanh.pop %v3359
    %v3361 = vmul.f32 %v3360, 0.5
    %v3362 = vadd.f32 %v3361, 0.5
    %v3363 = vmul.f32 %v3357, %v3054
    %v3364 = vmul.f32 %v3353, %v3358
    %v3365 = vadd.f32 %v3363, %v3364
    %v3366 = vtanh.pop %v3365
    %v3367 = vmul.f32 %v3362, %v3366
    %v3368 = vadd.f32 %v3057, %v3367
    %v3369 = vmul.f32 %v3368, 0.125
    %3370 = vst [vmem:[#allocation11] sm:$0x3] %v3369
    %v3371 = vld [vmem:[#allocation10] sm:$0xff]
    %v3372 = vld [vmem:[#allocation10 + $0x8] sm:$0xff]
    %v3373 = vld [vmem:[#allocation10 + $0x10] sm:$0xff]
    %v3374 = vld [vmem:[#allocation10 + $0x18] sm:$0xff]
    %v3375 = vld [vmem:[#allocation10 + $0x20] sm:$0xff]
    %v3376 = vld [vmem:[#allocation10 + $0x28] sm:$0xff]
    %v3377 = vld [vmem:[#allocation10 + $0x30] sm:$0xff]
    %v3378 = vld [vmem:[#allocation10 + $0x38] sm:$0xff]
    %v3379 = vld [vmem:[#allocation10 + $0x40] sm:$0xff]
    %v3380 = vld [vmem:[#allocation10 + $0x48] sm:$0xff]
    %v3381 = vld [vmem:[#allocation10 + $0x50] sm:$0xff]
    %v3382 = vld [vmem:[#allocation10 + $0x58] sm:$0xff]
    %v3383 = vld [vmem:[#allocation10 + $0x60] sm:$0xff]
    %v3384 = vld [vmem:[#allocation10 + $0x68] sm:$0xff]
    %v3385 = vld [vmem:[#allocation10 + $0x70] sm:$0xff]
    %v3386 = vld [vmem:[#allocation10 + $0x78] sm:$0xff]
    %v3387 = vld [vmem:[%s8] sm:$0x1]
    %v3389 = vlaneseq
    %v3390 = vshrl.u32 %v3389, 7
    %v3391 = vsub.s32 0, %v3390
    %v3392 = vrot.slane %v3387, %v3391
    %3394 = vmatprep.subr.mxu0 0.0
    %3395 = vmatpush1.msra.mxu0 %v3386
    %3396 = vmatprep.subr.mxu0 0.0
    %3397 = vmatpush1.msra.mxu0 %v3385
    %3398 = vmatprep.subr.mxu0 0.0
    %3399 = vmatpush1.msra.mxu0 %v3384
    %3400 = vmatprep.subr.mxu0 0.0
    %3401 = vmatpush1.msra.mxu0 %v3383
    %3402 = vmatprep.subr.mxu0 0.0
    %3403 = vmatpush1.msra.mxu0 %v3382
    %3404 = vmatprep.subr.mxu0 0.0
    %3405 = vmatpush1.msra.mxu0 %v3381
    %3406 = vmatprep.subr.mxu0 0.0
    %3407 = vmatpush1.msra.mxu0 %v3380
    %3408 = vmatprep.subr.mxu0 0.0
    %3409 = vmatpush1.msra.mxu0 %v3379
    %3410 = vmatprep.subr.mxu0 0.0
    %3411 = vmatpush1.msra.mxu0 %v3378
    %3412 = vmatprep.subr.mxu0 0.0
    %3413 = vmatpush1.msra.mxu0 %v3377
    %3414 = vmatprep.subr.mxu0 0.0
    %3415 = vmatpush1.msra.mxu0 %v3376
    %3416 = vmatprep.subr.mxu0 0.0
    %3417 = vmatpush1.msra.mxu0 %v3375
    %3418 = vmatprep.subr.mxu0 0.0
    %3419 = vmatpush1.msra.mxu0 %v3374
    %3420 = vmatprep.subr.mxu0 0.0
    %3421 = vmatpush1.msra.mxu0 %v3373
    %3422 = vmatprep.subr.mxu0 0.0
    %3423 = vmatpush1.msra.mxu0 %v3372
    %3424 = vmatprep.subr.mxu0 0.0
    %3425 = vmatpush1.msra.mxu0 %v3371
    %3426 = vmatprep.subr.mxu0 0.0
    %3427 = vmatpush2.msra.mxu0 0.0
    %3428 = vmatprep.subr.mxu0 0.0
    %3429 = vmatpush2.msra.mxu0 0.0
    %3430 = vmatprep.subr.mxu0 0.0
    %3431 = vmatpush2.msra.mxu0 0.0
    %3432 = vmatprep.subr.mxu0 0.0
    %3433 = vmatpush2.msra.mxu0 0.0
    %3434 = vmatprep.subr.mxu0 0.0
    %3435 = vmatpush2.msra.mxu0 0.0
    %3436 = vmatprep.subr.mxu0 0.0
    %3437 = vmatpush2.msra.mxu0 0.0
    %3438 = vmatprep.subr.mxu0 0.0
    %3439 = vmatpush2.msra.mxu0 0.0
    %3440 = vmatprep.subr.mxu0 0.0
    %3441 = vmatpush2.msra.mxu0 0.0
    %3442 = vmatprep.subr.mxu0 0.0
    %3443 = vmatpush2.msra.mxu0 0.0
    %3444 = vmatprep.subr.mxu0 0.0
    %3445 = vmatpush2.msra.mxu0 0.0
    %3446 = vmatprep.subr.mxu0 0.0
    %3447 = vmatpush2.msra.mxu0 0.0
    %3448 = vmatprep.subr.mxu0 0.0
    %3449 = vmatpush2.msra.mxu0 0.0
    %3450 = vmatprep.subr.mxu0 0.0
    %3451 = vmatpush2.msra.mxu0 0.0
    %3452 = vmatprep.subr.mxu0 0.0
    %3453 = vmatpush2.msra.mxu0 0.0
    %3454 = vmatprep.subr.mxu0 0.0
    %3455 = vmatpush2.msra.mxu0 0.0
    %3456 = vmatprep.subr.mxu0 0.0
    %3457 = vmatpush2.msra.mxu0 0.0
    %3458 = vmatprep.mubr.f32.mxu0 0.0
    %3459 = vmatmul.mubr.f32.gmra.mxu0 %v3369
    %v3460 = vpop.f32.mrf.mxu0
    %v3461 = vadd.f32 %v3392, %v3460
    %v3462 = vpop.f32.mrf.mxu0
    %3463 = vdwg.mxu0
    %3464 = vst [vmem:[#allocation12] sm:$0x3] %v3461
    // Predicated region
    $region58: #{rnn_forward.1} parent=1 // pred_check
      _
    $region59: #{rnn_forward.1} parent=1 // pred_check_branch
      %3466 = sbr.rel (0) target = $region61
    $region60: #{rnn_forward.1} parent=1 // pred_region
      %s3468 = ssub.s32 32, 32
      %3469 = vsyncadd [#allocation4], %s3468
      %s3471 = sshll.u32 [#allocation11], 4
      %s3472 = int_to_ptr.vmem [resolvable:$true] %s3471
      %3474 = dma.vmem_to_hbm [thread:$0]  %s3472, 32, %s9, [#allocation4]
    $region61: #{rnn_forward.1} parent=1 // pred_fallthru
      _
    // Predicated region
    $region62: #{rnn_forward.1} parent=1 // pred_check
      _
    $region63: #{rnn_forward.1} parent=1 // pred_check_branch
      %3476 = sbr.rel (0) target = $region65
    $region64: #{rnn_forward.1} parent=1 // pred_region
      %s3478 = ssub.s32 32, 32
      %3479 = vsyncadd [#allocation13], %s3478
      %s3481 = sshll.u32 [#allocation12], 4
      %s3482 = int_to_ptr.vmem [resolvable:$true] %s3481
      %3484 = dma.vmem_to_hbm [thread:$0]  %s3482, 32, %s10, [#allocation13]
    $region65: #{rnn_forward.1} parent=1 // pred_fallthru
      _
    // Predicated region
    $region66: #{rnn_forward.1} parent=1 // pred_check
      _
    $region67: #{rnn_forward.1} parent=1 // pred_check_branch
      %3486 = sbr.rel (0) target = $region69
    $region68: #{rnn_forward.1} parent=1 // pred_region
      %3487 = dma.done [#allocation4], 32
    $region69: #{rnn_forward.1} parent=1 // pred_fallthru
      _
    // Predicated region
    $region70: #{rnn_forward.1} parent=1 // pred_check
      _
    $region71: #{rnn_forward.1} parent=1 // pred_check_branch
      %3489 = sbr.rel (0) target = $region73
    $region72: #{rnn_forward.1} parent=1 // pred_region
      %3490 = dma.done [#allocation13], 32
    $region73: #{rnn_forward.1} parent=1 // pred_fallthru
      _
    %3491 = vsyncpa [#allocation3], 1
    %3492 = vsyncpa [#allocation6], 1
    %3493 = vsyncpa [#allocation9], 1
    %3494 = vsyncpa [#allocation4], 1
    %3495 = vsyncpa [#allocation13], 1

</llo_original>
